<compile_context>
chip_gen: v6e
topology: v6e:2x2x1
jax: 0.10.0
libtpu: 0.0.40
codegen_flags: <defaults>
</compile_context>

<pallas_src>
import functools

import jax
import jax.numpy as jnp
from jax.experimental import pallas as pl
from jax.experimental.pallas import tpu as pltpu

HIDDEN = 100                # logical hidden width (PyTorch model)
H_PAD = 128                 # lane/sublane-aligned padded hidden width used on-chip
IN_PAD = 8                  # input features padded 4 -> 8 (sublane aligned)
NUM_HIDDEN_LAYERS = 12      # number of Linear(100,100) layers in the Sequential


def _cdiv(a, b):
    return -(-a // b)


def _round_up(a, b):
    return _cdiv(a, b) * b


def _has_multiple_tensorcores():
    """v7x (2 TCs/chip) and v4 megacore benefit from splitting the parallel grid;
    v5e/v6e have a single TensorCore, where splitting only adds per-step overhead."""
    try:
        kind = jax.devices()[0].device_kind.lower()
    except Exception:
        return False
    return ("v7" in kind) or ("7x" in kind) or ("v4" in kind)


def _mlp_kernel(x_ref, w0_ref, b0_ref, wh_ref, bh_ref, wl_ref, bl_ref, o_ref):
    # Feature-major layout:
    #   x_ref: (8, tn)             rows 0..3 = (t, x, y, z), rows 4..7 = 0
    #   w0:    (128, 8)   f32      b0: (128, 1) f32
    #   wh:    (12, 128, 128)      bf16 (perf default) or f32 (exact path)
    #   bh:    (12, 128, 1) f32
    #   wl:    (128, 1)   f32      bl: (1, 1)   f32
    #   o:     (1, tn)    f32      (lane-dense output row)
    compute_dtype = wh_ref.dtype

    # Layer 0: Linear(4 -> 100), K=8 (tiny), f32.
    h = jnp.dot(w0_ref[...], x_ref[...], preferred_element_type=jnp.float32)  # (128, tn)
    h = jnp.maximum(h + b0_ref[...], 0.0)
    if compute_dtype != jnp.float32:
        h = h.astype(compute_dtype)

    # 12 hidden layers, statically unrolled: (128,128) @ (128,tn) MXU matmuls,
    # f32 accumulation.  Bias-add + ReLU in f32; only the stored activation is
    # cast to bf16 on the perf path (fused cast -> half the inter-layer VMEM traffic).
    for i in range(NUM_HIDDEN_LAYERS):
        acc = jnp.dot(wh_ref[i], h, preferred_element_type=jnp.float32)       # (128, tn) f32
        acc = jnp.maximum(acc + bh_ref[i], 0.0)
        h = acc if compute_dtype == jnp.float32 else acc.astype(compute_dtype)

    # Final Linear(100 -> 1): broadcast multiply + cross-sublane reduce.
    # Produces the lane-dense (1, tn) row directly on the (otherwise idle) VPU/XLU.
    hf = h.astype(jnp.float32)
    out = jnp.sum(hf * wl_ref[...], axis=0, keepdims=True)                     # (1, tn)
    o_ref[...] = (out + bl_ref[...]).astype(o_ref.dtype)


@functools.partial(jax.jit, static_argnames=("block_n",))
def mlp_forward_pallas(t, x, padded_params, block_n=4096):
    w0t, b0, wht, bh, wl, bl = padded_params

    xin = jnp.concatenate(
        (t.reshape(-1, 1), x.reshape(-1, 3)), axis=1
    ).astype(jnp.float32)                                   # (N, 4)
    n = xin.shape[0]

    # Row-tile (lane) size: multiple of 128, as large as block_n allows.
    block_n = max(128, _round_up(block_n, 128))
    n128 = max(128, _round_up(n, 128))
    tn = min(block_n, n128)
    grid_n = _cdiv(n128, tn)
    # Only split to >= 2 parallel steps on multi-TensorCore parts (v7x / v4).
    if _has_multiple_tensorcores() and grid_n < 2 and n128 > 128:
        tn = _round_up(_cdiv(n128, 2), 128)
        grid_n = _cdiv(n128, tn)
    n_pad = grid_n * tn

    # Feature-major, lane-dense input slab: (8, n_pad); rows 4..7 and batch padding = 0.
    xt = jnp.zeros((IN_PAD, n_pad), jnp.float32).at[:4, :n].set(xin.T)

    # Constant weights: whole arrays resident in VMEM (no per-step pipelining).
    vmem_full = pl.BlockSpec(memory_space=pltpu.MemorySpace.VMEM)

    out = pl.pallas_call(
        _mlp_kernel,
        out_shape=jax.ShapeDtypeStruct((1, n_pad), jnp.float32),
        grid_spec=pltpu.PrefetchScalarGridSpec(
            num_scalar_prefetch=0,
            grid=(grid_n,),
            in_specs=[
                pl.BlockSpec((IN_PAD, tn), lambda i: (0, i)),  # lane-dense input tile
                vmem_full,  # w0t (128, 8)
                vmem_full,  # b0  (128, 1)
                vmem_full,  # wht (12, 128, 128)
                vmem_full,  # bh  (12, 128, 1)
                vmem_full,  # wl  (128, 1)
                vmem_full,  # bl  (1, 1)
            ],
            out_specs=pl.BlockSpec((1, tn), lambda i: (0, i)),  # lane-dense output row
        ),
        compiler_params=pltpu.CompilerParams(
            dimension_semantics=("parallel",),
            vmem_limit_bytes=32 * 1024 * 1024,
        ),
    )(xt, w0t, b0, wht, bh, wl, bl)

    return out[0, :n].reshape(n, 1)


def init_params(key):
    """Deterministic init mirroring PyTorch nn.Linear default (U[-1/sqrt(fan_in), 1/sqrt(fan_in)]).
    Weights stored (in_features, out_features)."""
    keys = jax.random.split(key, 2 * (2 + NUM_HIDDEN_LAYERS))
    ki = iter(keys)

    def lin(kw, kb, fan_in, fan_out):
        bound = 1.0 / jnp.sqrt(jnp.float32(fan_in))
        w = jax.random.uniform(kw, (fan_in, fan_out), jnp.float32, -bound, bound)
        b = jax.random.uniform(kb, (fan_out,), jnp.float32, -bound, bound)
        return w, b

    w0, b0 = lin(next(ki), next(ki), 4, HIDDEN)
    whs, bhs = [], []
    for _ in range(NUM_HIDDEN_LAYERS):
        w, b = lin(next(ki), next(ki), HIDDEN, HIDDEN)
        whs.append(w)
        bhs.append(b)
    wl, bl = lin(next(ki), next(ki), HIDDEN, 1)
    return (w0, b0, jnp.stack(whs), jnp.stack(bhs), wl, bl)


def prepare_params(params, use_bf16=True):
    """Transpose to feature-major (W^T), zero-pad 100 -> 128 (and 4 -> 8 input features),
    and pre-shape biases to (128, 1).  Padding is bit-identical.  use_bf16=True (default)
    casts the 12 hidden weight matrices to bf16 (perf path); use_bf16=False keeps f32."""
    w0, b0, wh, bh, wl, bl = params
    w0t = jnp.zeros((H_PAD, IN_PAD), jnp.float32).at[:HIDDEN, :4].set(w0.T)          # (128, 8)
    b0p = jnp.zeros((H_PAD, 1), jnp.float32).at[:HIDDEN, 0].set(b0)                  # (128, 1)
    wht = jnp.zeros((NUM_HIDDEN_LAYERS, H_PAD, H_PAD), jnp.float32)
    wht = wht.at[:, :HIDDEN, :HIDDEN].set(jnp.transpose(wh, (0, 2, 1)))              # (12,128,128) = W^T
    bhp = jnp.zeros((NUM_HIDDEN_LAYERS, H_PAD, 1), jnp.float32).at[:, :HIDDEN, 0].set(bh)
    wlp = jnp.zeros((H_PAD, 1), jnp.float32).at[:HIDDEN, :].set(wl)                  # (128, 1)
    blp = bl.reshape(1, 1).astype(jnp.float32)
    if use_bf16:
        wht = wht.astype(jnp.bfloat16)
    return (w0t, b0p, wht, bhp, wlp, blp)


def mlp_forward_ref(t, x, params):
    """Pure-JAX reference (semantically identical to the PyTorch forward), f32 HIGHEST."""
    w0, b0, wh, bh, wl, bl = params
    hp = jax.lax.Precision.HIGHEST
    h = jnp.concatenate((t.reshape(-1, 1), x.reshape(-1, 3)), axis=1).astype(jnp.float32)
    h = jnp.maximum(jnp.dot(h, w0, precision=hp) + b0, 0.0)
    for i in range(NUM_HIDDEN_LAYERS):
        h = jnp.maximum(jnp.dot(h, wh[i], precision=hp) + bh[i], 0.0)
    return jnp.dot(h, wl, precision=hp) + bl


if __name__ == "__main__":
    key = jax.random.PRNGKey(0)
    k_params, k_t, k_x = jax.random.split(key, 3)

    params = init_params(k_params)

    N = 300                                              # exercises padding + tiling
    t = jax.random.uniform(k_t, (N,), jnp.float32)       # time values
    x = jax.random.normal(k_x, (N, 3), jnp.float32)      # 3-D points

    ref = mlp_forward_ref(t, x, params)

    # Exact f32 validation path (numerically matches the reference).
    out_f32 = mlp_forward_pallas(t, x, prepare_params(params, use_bf16=False))
    out_f32 = jax.block_until_ready(out_f32)
    assert out_f32.shape == (N, 1), out_f32.shape
    assert jnp.allclose(out_f32, ref, rtol=1e-4, atol=1e-4)

    # Default perf path: bf16 hidden matmuls / activations with f32 accumulation.
    out_bf16 = mlp_forward_pallas(t, x, prepare_params(params))
    out_bf16 = jax.block_until_ready(out_bf16)
    assert out_bf16.shape == (N, 1), out_bf16.shape
    assert bool(jnp.all(jnp.isfinite(out_bf16)))
    scale = float(jnp.maximum(1.0, jnp.max(jnp.abs(ref))))
    assert float(jnp.max(jnp.abs(out_bf16 - ref))) <= 1e-1 * scale

    print("KERNEL_OK")
</pallas_src>

<mosaic_0001>
module attributes {stable_mosaic.version = 11 : i64} {
  func.func @_mlp_kernel(%arg0: i32, %arg1: memref<8x384xf32, #tpu.memory_space<vmem>>, %arg2: memref<128x8xf32, #tpu.memory_space<vmem>>, %arg3: memref<128x1xf32, #tpu.memory_space<vmem>>, %arg4: memref<12x128x128xf32, #tpu.memory_space<vmem>>, %arg5: memref<12x128x1xf32, #tpu.memory_space<vmem>>, %arg6: memref<128x1xf32, #tpu.memory_space<vmem>>, %arg7: memref<1x1xf32, #tpu.memory_space<vmem>>, %arg8: memref<1x384xf32, #tpu.memory_space<vmem>>) attributes {dimension_semantics = [#tpu.dimension_semantics<parallel>], iteration_bounds = array<i64: 1>, scalar_prefetch = 0 : i64, scratch_operands = 0 : i64, tpu.core_type = #tpu.core_type<tc>, window_params = [{transform_indices = @transform_0, window_bounds = array<i64: 8, 384>}, {pipeline_mode = #tpu.pipeline_mode<synchronous>, transform_indices = @transform_1, window_bounds = array<i64: 128, 8>}, {pipeline_mode = #tpu.pipeline_mode<synchronous>, transform_indices = @transform_2, window_bounds = array<i64: 128, 1>}, {pipeline_mode = #tpu.pipeline_mode<synchronous>, transform_indices = @transform_3, window_bounds = array<i64: 12, 128, 128>}, {pipeline_mode = #tpu.pipeline_mode<synchronous>, transform_indices = @transform_4, window_bounds = array<i64: 12, 128, 1>}, {pipeline_mode = #tpu.pipeline_mode<synchronous>, transform_indices = @transform_5, window_bounds = array<i64: 128, 1>}, {pipeline_mode = #tpu.pipeline_mode<synchronous>, transform_indices = @transform_6, window_bounds = array<i64: 1, 1>}, {transform_indices = @transform_7, window_bounds = array<i64: 1, 384>}]} {
    %c0 = arith.constant 0 : index
    %c0_0 = arith.constant 0 : index
    %0 = vector.load %arg2[%c0, %c0_0] : memref<128x8xf32, #tpu.memory_space<vmem>>, vector<128x8xf32>
    %c0_1 = arith.constant 0 : index
    %c0_2 = arith.constant 0 : index
    %1 = vector.load %arg1[%c0_1, %c0_2] : memref<8x384xf32, #tpu.memory_space<vmem>>, vector<8x384xf32>
    %cst = arith.constant dense<0.000000e+00> : vector<128x384xf32>
    %2 = tpu.matmul %0, %1, %cst {dimension_numbers = #tpu.dot_dimension_numbers<[1], [0], [0], [1], [0, 0, 1, 1], [], []>} : vector<128x8xf32>, vector<8x384xf32>, vector<128x384xf32> -> vector<128x384xf32>
    %c0_3 = arith.constant 0 : index
    %c0_4 = arith.constant 0 : index
    %3 = vector.load %arg3[%c0_3, %c0_4] : memref<128x1xf32, #tpu.memory_space<vmem>>, vector<128x1xf32>
    %4 = vector.broadcast %3 : vector<128x1xf32> to vector<128x384xf32>
    %5 = arith.addf %2, %4 : vector<128x384xf32>
    %cst_5 = arith.constant 0.000000e+00 : f32
    %6 = vector.broadcast %cst_5 : f32 to vector<128x384xf32>
    %7 = arith.maximumf %5, %6 : vector<128x384xf32>
    %c0_6 = arith.constant 0 : index
    %c0_7 = arith.constant 0 : index
    %c0_8 = arith.constant 0 : index
    %8 = vector.load %arg4[%c0_6, %c0_7, %c0_8] : memref<12x128x128xf32, #tpu.memory_space<vmem>>, vector<1x128x128xf32>
    %9 = vector.shape_cast %8 : vector<1x128x128xf32> to vector<128x128xf32>
    %cst_9 = arith.constant dense<0.000000e+00> : vector<128x384xf32>
    %10 = tpu.matmul %9, %7, %cst_9 {dimension_numbers = #tpu.dot_dimension_numbers<[1], [0], [0], [1], [0, 0, 1, 1], [], []>} : vector<128x128xf32>, vector<128x384xf32>, vector<128x384xf32> -> vector<128x384xf32>
    %c0_10 = arith.constant 0 : index
    %c0_11 = arith.constant 0 : index
    %c0_12 = arith.constant 0 : index
    %11 = vector.load %arg5[%c0_10, %c0_11, %c0_12] : memref<12x128x1xf32, #tpu.memory_space<vmem>>, vector<1x128x1xf32>
    %12 = vector.shape_cast %11 : vector<1x128x1xf32> to vector<128x1xf32>
    %13 = vector.broadcast %12 : vector<128x1xf32> to vector<128x384xf32>
    %14 = arith.addf %10, %13 : vector<128x384xf32>
    %cst_13 = arith.constant 0.000000e+00 : f32
    %15 = vector.broadcast %cst_13 : f32 to vector<128x384xf32>
    %16 = arith.maximumf %14, %15 : vector<128x384xf32>
    %c1 = arith.constant 1 : index
    %c0_14 = arith.constant 0 : index
    %c0_15 = arith.constant 0 : index
    %17 = vector.load %arg4[%c1, %c0_14, %c0_15] : memref<12x128x128xf32, #tpu.memory_space<vmem>>, vector<1x128x128xf32>
    %18 = vector.shape_cast %17 : vector<1x128x128xf32> to vector<128x128xf32>
    %cst_16 = arith.constant dense<0.000000e+00> : vector<128x384xf32>
    %19 = tpu.matmul %18, %16, %cst_16 {dimension_numbers = #tpu.dot_dimension_numbers<[1], [0], [0], [1], [0, 0, 1, 1], [], []>} : vector<128x128xf32>, vector<128x384xf32>, vector<128x384xf32> -> vector<128x384xf32>
    %c1_17 = arith.constant 1 : index
    %c0_18 = arith.constant 0 : index
    %c0_19 = arith.constant 0 : index
    %20 = vector.load %arg5[%c1_17, %c0_18, %c0_19] : memref<12x128x1xf32, #tpu.memory_space<vmem>>, vector<1x128x1xf32>
    %21 = vector.shape_cast %20 : vector<1x128x1xf32> to vector<128x1xf32>
    %22 = vector.broadcast %21 : vector<128x1xf32> to vector<128x384xf32>
    %23 = arith.addf %19, %22 : vector<128x384xf32>
    %cst_20 = arith.constant 0.000000e+00 : f32
    %24 = vector.broadcast %cst_20 : f32 to vector<128x384xf32>
    %25 = arith.maximumf %23, %24 : vector<128x384xf32>
    %c2 = arith.constant 2 : index
    %c0_21 = arith.constant 0 : index
    %c0_22 = arith.constant 0 : index
    %26 = vector.load %arg4[%c2, %c0_21, %c0_22] : memref<12x128x128xf32, #tpu.memory_space<vmem>>, vector<1x128x128xf32>
    %27 = vector.shape_cast %26 : vector<1x128x128xf32> to vector<128x128xf32>
    %cst_23 = arith.constant dense<0.000000e+00> : vector<128x384xf32>
    %28 = tpu.matmul %27, %25, %cst_23 {dimension_numbers = #tpu.dot_dimension_numbers<[1], [0], [0], [1], [0, 0, 1, 1], [], []>} : vector<128x128xf32>, vector<128x384xf32>, vector<128x384xf32> -> vector<128x384xf32>
    %c2_24 = arith.constant 2 : index
    %c0_25 = arith.constant 0 : index
    %c0_26 = arith.constant 0 : index
    %29 = vector.load %arg5[%c2_24, %c0_25, %c0_26] : memref<12x128x1xf32, #tpu.memory_space<vmem>>, vector<1x128x1xf32>
    %30 = vector.shape_cast %29 : vector<1x128x1xf32> to vector<128x1xf32>
    %31 = vector.broadcast %30 : vector<128x1xf32> to vector<128x384xf32>
    %32 = arith.addf %28, %31 : vector<128x384xf32>
    %cst_27 = arith.constant 0.000000e+00 : f32
    %33 = vector.broadcast %cst_27 : f32 to vector<128x384xf32>
    %34 = arith.maximumf %32, %33 : vector<128x384xf32>
    %c3 = arith.constant 3 : index
    %c0_28 = arith.constant 0 : index
    %c0_29 = arith.constant 0 : index
    %35 = vector.load %arg4[%c3, %c0_28, %c0_29] : memref<12x128x128xf32, #tpu.memory_space<vmem>>, vector<1x128x128xf32>
    %36 = vector.shape_cast %35 : vector<1x128x128xf32> to vector<128x128xf32>
    %cst_30 = arith.constant dense<0.000000e+00> : vector<128x384xf32>
    %37 = tpu.matmul %36, %34, %cst_30 {dimension_numbers = #tpu.dot_dimension_numbers<[1], [0], [0], [1], [0, 0, 1, 1], [], []>} : vector<128x128xf32>, vector<128x384xf32>, vector<128x384xf32> -> vector<128x384xf32>
    %c3_31 = arith.constant 3 : index
    %c0_32 = arith.constant 0 : index
    %c0_33 = arith.constant 0 : index
    %38 = vector.load %arg5[%c3_31, %c0_32, %c0_33] : memref<12x128x1xf32, #tpu.memory_space<vmem>>, vector<1x128x1xf32>
    %39 = vector.shape_cast %38 : vector<1x128x1xf32> to vector<128x1xf32>
    %40 = vector.broadcast %39 : vector<128x1xf32> to vector<128x384xf32>
    %41 = arith.addf %37, %40 : vector<128x384xf32>
    %cst_34 = arith.constant 0.000000e+00 : f32
    %42 = vector.broadcast %cst_34 : f32 to vector<128x384xf32>
    %43 = arith.maximumf %41, %42 : vector<128x384xf32>
    %c4 = arith.constant 4 : index
    %c0_35 = arith.constant 0 : index
    %c0_36 = arith.constant 0 : index
    %44 = vector.load %arg4[%c4, %c0_35, %c0_36] : memref<12x128x128xf32, #tpu.memory_space<vmem>>, vector<1x128x128xf32>
    %45 = vector.shape_cast %44 : vector<1x128x128xf32> to vector<128x128xf32>
    %cst_37 = arith.constant dense<0.000000e+00> : vector<128x384xf32>
    %46 = tpu.matmul %45, %43, %cst_37 {dimension_numbers = #tpu.dot_dimension_numbers<[1], [0], [0], [1], [0, 0, 1, 1], [], []>} : vector<128x128xf32>, vector<128x384xf32>, vector<128x384xf32> -> vector<128x384xf32>
    %c4_38 = arith.constant 4 : index
    %c0_39 = arith.constant 0 : index
    %c0_40 = arith.constant 0 : index
    %47 = vector.load %arg5[%c4_38, %c0_39, %c0_40] : memref<12x128x1xf32, #tpu.memory_space<vmem>>, vector<1x128x1xf32>
    %48 = vector.shape_cast %47 : vector<1x128x1xf32> to vector<128x1xf32>
    %49 = vector.broadcast %48 : vector<128x1xf32> to vector<128x384xf32>
    %50 = arith.addf %46, %49 : vector<128x384xf32>
    %cst_41 = arith.constant 0.000000e+00 : f32
    %51 = vector.broadcast %cst_41 : f32 to vector<128x384xf32>
    %52 = arith.maximumf %50, %51 : vector<128x384xf32>
    %c5 = arith.constant 5 : index
    %c0_42 = arith.constant 0 : index
    %c0_43 = arith.constant 0 : index
    %53 = vector.load %arg4[%c5, %c0_42, %c0_43] : memref<12x128x128xf32, #tpu.memory_space<vmem>>, vector<1x128x128xf32>
    %54 = vector.shape_cast %53 : vector<1x128x128xf32> to vector<128x128xf32>
    %cst_44 = arith.constant dense<0.000000e+00> : vector<128x384xf32>
    %55 = tpu.matmul %54, %52, %cst_44 {dimension_numbers = #tpu.dot_dimension_numbers<[1], [0], [0], [1], [0, 0, 1, 1], [], []>} : vector<128x128xf32>, vector<128x384xf32>, vector<128x384xf32> -> vector<128x384xf32>
    %c5_45 = arith.constant 5 : index
    %c0_46 = arith.constant 0 : index
    %c0_47 = arith.constant 0 : index
    %56 = vector.load %arg5[%c5_45, %c0_46, %c0_47] : memref<12x128x1xf32, #tpu.memory_space<vmem>>, vector<1x128x1xf32>
    %57 = vector.shape_cast %56 : vector<1x128x1xf32> to vector<128x1xf32>
    %58 = vector.broadcast %57 : vector<128x1xf32> to vector<128x384xf32>
    %59 = arith.addf %55, %58 : vector<128x384xf32>
    %cst_48 = arith.constant 0.000000e+00 : f32
    %60 = vector.broadcast %cst_48 : f32 to vector<128x384xf32>
    %61 = arith.maximumf %59, %60 : vector<128x384xf32>
    %c6 = arith.constant 6 : index
    %c0_49 = arith.constant 0 : index
    %c0_50 = arith.constant 0 : index
    %62 = vector.load %arg4[%c6, %c0_49, %c0_50] : memref<12x128x128xf32, #tpu.memory_space<vmem>>, vector<1x128x128xf32>
    %63 = vector.shape_cast %62 : vector<1x128x128xf32> to vector<128x128xf32>
    %cst_51 = arith.constant dense<0.000000e+00> : vector<128x384xf32>
    %64 = tpu.matmul %63, %61, %cst_51 {dimension_numbers = #tpu.dot_dimension_numbers<[1], [0], [0], [1], [0, 0, 1, 1], [], []>} : vector<128x128xf32>, vector<128x384xf32>, vector<128x384xf32> -> vector<128x384xf32>
    %c6_52 = arith.constant 6 : index
    %c0_53 = arith.constant 0 : index
    %c0_54 = arith.constant 0 : index
    %65 = vector.load %arg5[%c6_52, %c0_53, %c0_54] : memref<12x128x1xf32, #tpu.memory_space<vmem>>, vector<1x128x1xf32>
    %66 = vector.shape_cast %65 : vector<1x128x1xf32> to vector<128x1xf32>
    %67 = vector.broadcast %66 : vector<128x1xf32> to vector<128x384xf32>
    %68 = arith.addf %64, %67 : vector<128x384xf32>
    %cst_55 = arith.constant 0.000000e+00 : f32
    %69 = vector.broadcast %cst_55 : f32 to vector<128x384xf32>
    %70 = arith.maximumf %68, %69 : vector<128x384xf32>
    %c7 = arith.constant 7 : index
    %c0_56 = arith.constant 0 : index
    %c0_57 = arith.constant 0 : index
    %71 = vector.load %arg4[%c7, %c0_56, %c0_57] : memref<12x128x128xf32, #tpu.memory_space<vmem>>, vector<1x128x128xf32>
    %72 = vector.shape_cast %71 : vector<1x128x128xf32> to vector<128x128xf32>
    %cst_58 = arith.constant dense<0.000000e+00> : vector<128x384xf32>
    %73 = tpu.matmul %72, %70, %cst_58 {dimension_numbers = #tpu.dot_dimension_numbers<[1], [0], [0], [1], [0, 0, 1, 1], [], []>} : vector<128x128xf32>, vector<128x384xf32>, vector<128x384xf32> -> vector<128x384xf32>
    %c7_59 = arith.constant 7 : index
    %c0_60 = arith.constant 0 : index
    %c0_61 = arith.constant 0 : index
    %74 = vector.load %arg5[%c7_59, %c0_60, %c0_61] : memref<12x128x1xf32, #tpu.memory_space<vmem>>, vector<1x128x1xf32>
    %75 = vector.shape_cast %74 : vector<1x128x1xf32> to vector<128x1xf32>
    %76 = vector.broadcast %75 : vector<128x1xf32> to vector<128x384xf32>
    %77 = arith.addf %73, %76 : vector<128x384xf32>
    %cst_62 = arith.constant 0.000000e+00 : f32
    %78 = vector.broadcast %cst_62 : f32 to vector<128x384xf32>
    %79 = arith.maximumf %77, %78 : vector<128x384xf32>
    %c8 = arith.constant 8 : index
    %c0_63 = arith.constant 0 : index
    %c0_64 = arith.constant 0 : index
    %80 = vector.load %arg4[%c8, %c0_63, %c0_64] : memref<12x128x128xf32, #tpu.memory_space<vmem>>, vector<1x128x128xf32>
    %81 = vector.shape_cast %80 : vector<1x128x128xf32> to vector<128x128xf32>
    %cst_65 = arith.constant dense<0.000000e+00> : vector<128x384xf32>
    %82 = tpu.matmul %81, %79, %cst_65 {dimension_numbers = #tpu.dot_dimension_numbers<[1], [0], [0], [1], [0, 0, 1, 1], [], []>} : vector<128x128xf32>, vector<128x384xf32>, vector<128x384xf32> -> vector<128x384xf32>
    %c8_66 = arith.constant 8 : index
    %c0_67 = arith.constant 0 : index
    %c0_68 = arith.constant 0 : index
    %83 = vector.load %arg5[%c8_66, %c0_67, %c0_68] : memref<12x128x1xf32, #tpu.memory_space<vmem>>, vector<1x128x1xf32>
    %84 = vector.shape_cast %83 : vector<1x128x1xf32> to vector<128x1xf32>
    %85 = vector.broadcast %84 : vector<128x1xf32> to vector<128x384xf32>
    %86 = arith.addf %82, %85 : vector<128x384xf32>
    %cst_69 = arith.constant 0.000000e+00 : f32
    %87 = vector.broadcast %cst_69 : f32 to vector<128x384xf32>
    %88 = arith.maximumf %86, %87 : vector<128x384xf32>
    %c9 = arith.constant 9 : index
    %c0_70 = arith.constant 0 : index
    %c0_71 = arith.constant 0 : index
    %89 = vector.load %arg4[%c9, %c0_70, %c0_71] : memref<12x128x128xf32, #tpu.memory_space<vmem>>, vector<1x128x128xf32>
    %90 = vector.shape_cast %89 : vector<1x128x128xf32> to vector<128x128xf32>
    %cst_72 = arith.constant dense<0.000000e+00> : vector<128x384xf32>
    %91 = tpu.matmul %90, %88, %cst_72 {dimension_numbers = #tpu.dot_dimension_numbers<[1], [0], [0], [1], [0, 0, 1, 1], [], []>} : vector<128x128xf32>, vector<128x384xf32>, vector<128x384xf32> -> vector<128x384xf32>
    %c9_73 = arith.constant 9 : index
    %c0_74 = arith.constant 0 : index
    %c0_75 = arith.constant 0 : index
    %92 = vector.load %arg5[%c9_73, %c0_74, %c0_75] : memref<12x128x1xf32, #tpu.memory_space<vmem>>, vector<1x128x1xf32>
    %93 = vector.shape_cast %92 : vector<1x128x1xf32> to vector<128x1xf32>
    %94 = vector.broadcast %93 : vector<128x1xf32> to vector<128x384xf32>
    %95 = arith.addf %91, %94 : vector<128x384xf32>
    %cst_76 = arith.constant 0.000000e+00 : f32
    %96 = vector.broadcast %cst_76 : f32 to vector<128x384xf32>
    %97 = arith.maximumf %95, %96 : vector<128x384xf32>
    %c10 = arith.constant 10 : index
    %c0_77 = arith.constant 0 : index
    %c0_78 = arith.constant 0 : index
    %98 = vector.load %arg4[%c10, %c0_77, %c0_78] : memref<12x128x128xf32, #tpu.memory_space<vmem>>, vector<1x128x128xf32>
    %99 = vector.shape_cast %98 : vector<1x128x128xf32> to vector<128x128xf32>
    %cst_79 = arith.constant dense<0.000000e+00> : vector<128x384xf32>
    %100 = tpu.matmul %99, %97, %cst_79 {dimension_numbers = #tpu.dot_dimension_numbers<[1], [0], [0], [1], [0, 0, 1, 1], [], []>} : vector<128x128xf32>, vector<128x384xf32>, vector<128x384xf32> -> vector<128x384xf32>
    %c10_80 = arith.constant 10 : index
    %c0_81 = arith.constant 0 : index
    %c0_82 = arith.constant 0 : index
    %101 = vector.load %arg5[%c10_80, %c0_81, %c0_82] : memref<12x128x1xf32, #tpu.memory_space<vmem>>, vector<1x128x1xf32>
    %102 = vector.shape_cast %101 : vector<1x128x1xf32> to vector<128x1xf32>
    %103 = vector.broadcast %102 : vector<128x1xf32> to vector<128x384xf32>
    %104 = arith.addf %100, %103 : vector<128x384xf32>
    %cst_83 = arith.constant 0.000000e+00 : f32
    %105 = vector.broadcast %cst_83 : f32 to vector<128x384xf32>
    %106 = arith.maximumf %104, %105 : vector<128x384xf32>
    %c11 = arith.constant 11 : index
    %c0_84 = arith.constant 0 : index
    %c0_85 = arith.constant 0 : index
    %107 = vector.load %arg4[%c11, %c0_84, %c0_85] : memref<12x128x128xf32, #tpu.memory_space<vmem>>, vector<1x128x128xf32>
    %108 = vector.shape_cast %107 : vector<1x128x128xf32> to vector<128x128xf32>
    %cst_86 = arith.constant dense<0.000000e+00> : vector<128x384xf32>
    %109 = tpu.matmul %108, %106, %cst_86 {dimension_numbers = #tpu.dot_dimension_numbers<[1], [0], [0], [1], [0, 0, 1, 1], [], []>} : vector<128x128xf32>, vector<128x384xf32>, vector<128x384xf32> -> vector<128x384xf32>
    %c11_87 = arith.constant 11 : index
    %c0_88 = arith.constant 0 : index
    %c0_89 = arith.constant 0 : index
    %110 = vector.load %arg5[%c11_87, %c0_88, %c0_89] : memref<12x128x1xf32, #tpu.memory_space<vmem>>, vector<1x128x1xf32>
    %111 = vector.shape_cast %110 : vector<1x128x1xf32> to vector<128x1xf32>
    %112 = vector.broadcast %111 : vector<128x1xf32> to vector<128x384xf32>
    %113 = arith.addf %109, %112 : vector<128x384xf32>
    %cst_90 = arith.constant 0.000000e+00 : f32
    %114 = vector.broadcast %cst_90 : f32 to vector<128x384xf32>
    %115 = arith.maximumf %113, %114 : vector<128x384xf32>
    %c0_91 = arith.constant 0 : index
    %c0_92 = arith.constant 0 : index
    %116 = vector.load %arg6[%c0_91, %c0_92] : memref<128x1xf32, #tpu.memory_space<vmem>>, vector<128x1xf32>
    %117 = vector.broadcast %116 : vector<128x1xf32> to vector<128x384xf32>
    %118 = arith.mulf %115, %117 : vector<128x384xf32>
    %cst_93 = arith.constant dense<0.000000e+00> : vector<384xf32>
    %119 = vector.multi_reduction <add>, %118, %cst_93 [0] : vector<128x384xf32> to vector<384xf32>
    %120 = vector.shape_cast %119 : vector<384xf32> to vector<1x384xf32>
    %c0_94 = arith.constant 0 : index
    %c0_95 = arith.constant 0 : index
    %121 = vector.load %arg7[%c0_94, %c0_95] : memref<1x1xf32, #tpu.memory_space<vmem>>, vector<1x1xf32>
    %122 = vector.broadcast %121 : vector<1x1xf32> to vector<1x384xf32>
    %123 = arith.addf %120, %122 : vector<1x384xf32>
    %c0_96 = arith.constant 0 : index
    %c0_97 = arith.constant 0 : index
    %124 = vector.load %arg8[%c0_96, %c0_97] : memref<1x384xf32, #tpu.memory_space<vmem>>, vector<1x384xf32>
    tpu.vector_store %arg8[%c0_96, %c0_97], %123 {strides = array<i32>} : memref<1x384xf32, #tpu.memory_space<vmem>>, vector<1x384xf32>,
    return
  }
  func.func @transform_0(%arg0: i32) -> (i32, i32) {
    %c0_i32 = arith.constant 0 : i32
    %c0_i32_0 = arith.constant 0 : i32
    return %c0_i32, %arg0 : i32, i32
  }
  func.func @transform_1(%arg0: i32) -> (i32, i32) {
    %c0_i32 = arith.constant 0 : i32
    %c0_i32_0 = arith.constant 0 : i32
    %c0_i32_1 = arith.constant 0 : i32
    return %c0_i32, %c0_i32_0 : i32, i32
  }
  func.func @transform_2(%arg0: i32) -> (i32, i32) {
    %c0_i32 = arith.constant 0 : i32
    %c0_i32_0 = arith.constant 0 : i32
    %c0_i32_1 = arith.constant 0 : i32
    return %c0_i32, %c0_i32_0 : i32, i32
  }
  func.func @transform_3(%arg0: i32) -> (i32, i32, i32) {
    %c0_i32 = arith.constant 0 : i32
    %c0_i32_0 = arith.constant 0 : i32
    %c0_i32_1 = arith.constant 0 : i32
    %c0_i32_2 = arith.constant 0 : i32
    return %c0_i32, %c0_i32_0, %c0_i32_1 : i32, i32, i32
  }
  func.func @transform_4(%arg0: i32) -> (i32, i32, i32) {
    %c0_i32 = arith.constant 0 : i32
    %c0_i32_0 = arith.constant 0 : i32
    %c0_i32_1 = arith.constant 0 : i32
    %c0_i32_2 = arith.constant 0 : i32
    return %c0_i32, %c0_i32_0, %c0_i32_1 : i32, i32, i32
  }
  func.func @transform_5(%arg0: i32) -> (i32, i32) {
    %c0_i32 = arith.constant 0 : i32
    %c0_i32_0 = arith.constant 0 : i32
    %c0_i32_1 = arith.constant 0 : i32
    return %c0_i32, %c0_i32_0 : i32, i32
  }
  func.func @transform_6(%arg0: i32) -> (i32, i32) {
    %c0_i32 = arith.constant 0 : i32
    %c0_i32_0 = arith.constant 0 : i32
    %c0_i32_1 = arith.constant 0 : i32
    return %c0_i32, %c0_i32_0 : i32, i32
  }
  func.func @transform_7(%arg0: i32) -> (i32, i32) {
    %c0_i32 = arith.constant 0 : i32
    %c0_i32_0 = arith.constant 0 : i32
    return %c0_i32, %arg0 : i32, i32
  }
}

</mosaic_0001>

<llo_original>
// kernel: mlp_forward_pallas.1
$region0: #{mlp_forward_pallas.1}
  #allocation0 [shape = 'u32[]', space=smem, size = 0x4, offset = 0x4, fixed_abs, tag = 'smem constant byte address 0x4 - core index']
  #allocation1 [shape = 'u32[144,128]{1,0:T(1,128)}', space=vmem, size = 0x12000, scoped, tag = 'internal scratch']
  #allocation2 [shape = 'f32[1,1]{1,0:T(1,128)S(1)}', space=vmem, size = 0x200, scoped, tag = 'scoped memory for mlp_forward_pallas.1']
  %s0 = inlined_call_operand.vmem [shape: f32[8,384], index: 0, kind: input, shape index: {}]
  %s1 = inlined_call_operand.vmem [shape: f32[128,8], index: 1, kind: input, shape index: {}]
  %s2 = inlined_call_operand.vmem [shape: f32[128,1], index: 2, kind: input, shape index: {}]
  %s3 = inlined_call_operand.vmem [shape: f32[12,128,128], index: 3, kind: input, shape index: {}]
  %s4 = inlined_call_operand.vmem [shape: f32[12,128,1], index: 4, kind: input, shape index: {}]
  %s5 = inlined_call_operand.vmem [shape: f32[128,1], index: 5, kind: input, shape index: {}]
  %s6 = inlined_call_operand.<no memory space> [shape: f32[1,1], index: 6, kind: input, shape index: {}]
  %s7 = inlined_call_operand.vmem [shape: f32[1,384], index: 7, kind: output, shape index: {}]
  %s8 = sld [smem:[#allocation0]]
  $region38: #{mlp_forward_pallas.1} parent=0
    _
  %s10 = ssub.s32 1, %s8
  %s11 = scalar_select 0, %s10, %s8
  %v12 = vstv %s6
  %13 = vst [vmem:[#allocation2] sm:$0x1] %v12
  // Predicated region
  $region2: #{mlp_forward_pallas.1} parent=0 // pred_check
    _
  $region3: #{mlp_forward_pallas.1} parent=0 // pred_check_branch
    %15 = sbr.rel (0) target = $region5
  $region4: #{mlp_forward_pallas.1} parent=0 // pred_region
    _
  $region5: #{mlp_forward_pallas.1} parent=0 // pred_fallthru
    _
  // Predicated region
  $region6: #{mlp_forward_pallas.1} parent=0 // pred_check
    _
  $region7: #{mlp_forward_pallas.1} parent=0 // pred_check_branch
    %17 = sbr.rel (0) target = $region9
  $region8: #{mlp_forward_pallas.1} parent=0 // pred_region
    _
  $region9: #{mlp_forward_pallas.1} parent=0 // pred_fallthru
    _
  // Predicated region
  $region10: #{mlp_forward_pallas.1} parent=0 // pred_check
    _
  $region11: #{mlp_forward_pallas.1} parent=0 // pred_check_branch
    %19 = sbr.rel (0) target = $region13
  $region12: #{mlp_forward_pallas.1} parent=0 // pred_region
    _
  $region13: #{mlp_forward_pallas.1} parent=0 // pred_fallthru
    _
  // Predicated region
  $region14: #{mlp_forward_pallas.1} parent=0 // pred_check
    _
  $region15: #{mlp_forward_pallas.1} parent=0 // pred_check_branch
    %21 = sbr.rel (0) target = $region17
  $region16: #{mlp_forward_pallas.1} parent=0 // pred_region
    _
  $region17: #{mlp_forward_pallas.1} parent=0 // pred_fallthru
    _
  // Predicated region
  $region18: #{mlp_forward_pallas.1} parent=0 // pred_check
    _
  $region19: #{mlp_forward_pallas.1} parent=0 // pred_check_branch
    %23 = sbr.rel (0) target = $region21
  $region20: #{mlp_forward_pallas.1} parent=0 // pred_region
    _
  $region21: #{mlp_forward_pallas.1} parent=0 // pred_fallthru
    _
  // Predicated region
  $region22: #{mlp_forward_pallas.1} parent=0 // pred_check
    _
  $region23: #{mlp_forward_pallas.1} parent=0 // pred_check_branch
    %25 = sbr.rel (0) target = $region25
  $region24: #{mlp_forward_pallas.1} parent=0 // pred_region
    _
  $region25: #{mlp_forward_pallas.1} parent=0 // pred_fallthru
    _
  // Predicated region
  $region26: #{mlp_forward_pallas.1} parent=0 // pred_check
    _
  $region27: #{mlp_forward_pallas.1} parent=0 // pred_check_branch
    %27 = sbr.rel (0) target = $region29
  $region28: #{mlp_forward_pallas.1} parent=0 // pred_region
    _
  $region29: #{mlp_forward_pallas.1} parent=0 // pred_fallthru
    _
  %v28 = vld [vmem:[%s1] sm:$0xff]
  %v29 = vld [vmem:[%s1 + $0x8] sm:$0xff]
  %v30 = vld [vmem:[%s1 + $0x10] sm:$0xff]
  %v31 = vld [vmem:[%s1 + $0x18] sm:$0xff]
  %v32 = vld [vmem:[%s1 + $0x20] sm:$0xff]
  %v33 = vld [vmem:[%s1 + $0x28] sm:$0xff]
  %v34 = vld [vmem:[%s1 + $0x30] sm:$0xff]
  %v35 = vld [vmem:[%s1 + $0x38] sm:$0xff]
  %v36 = vld [vmem:[%s1 + $0x40] sm:$0xff]
  %v37 = vld [vmem:[%s1 + $0x48] sm:$0xff]
  %v38 = vld [vmem:[%s1 + $0x50] sm:$0xff]
  %v39 = vld [vmem:[%s1 + $0x58] sm:$0xff]
  %v40 = vld [vmem:[%s1 + $0x60] sm:$0xff]
  %v41 = vld [vmem:[%s1 + $0x68] sm:$0xff]
  %v42 = vld [vmem:[%s1 + $0x70] sm:$0xff]
  %v43 = vld [vmem:[%s1 + $0x78] sm:$0xff]
  %v44 = vld [vmem:[%s0] sm:$0xff]
  %v45 = vld [vmem:[%s0 + $0x8] sm:$0xff]
  %v46 = vld [vmem:[%s0 + $0x10] sm:$0xff]
  %v47 = vld [vmem:[%s2] sm:$0xff]
  %v48 = vld [vmem:[%s2 + $0x8] sm:$0xff]
  %v49 = vld [vmem:[%s2 + $0x10] sm:$0xff]
  %v50 = vld [vmem:[%s2 + $0x18] sm:$0xff]
  %v51 = vld [vmem:[%s2 + $0x20] sm:$0xff]
  %v52 = vld [vmem:[%s2 + $0x28] sm:$0xff]
  %v53 = vld [vmem:[%s2 + $0x30] sm:$0xff]
  %v54 = vld [vmem:[%s2 + $0x38] sm:$0xff]
  %v55 = vld [vmem:[%s2 + $0x40] sm:$0xff]
  %v56 = vld [vmem:[%s2 + $0x48] sm:$0xff]
  %v57 = vld [vmem:[%s2 + $0x50] sm:$0xff]
  %v58 = vld [vmem:[%s2 + $0x58] sm:$0xff]
  %v59 = vld [vmem:[%s2 + $0x60] sm:$0xff]
  %v60 = vld [vmem:[%s2 + $0x68] sm:$0xff]
  %v61 = vld [vmem:[%s2 + $0x70] sm:$0xff]
  %v62 = vld [vmem:[%s2 + $0x78] sm:$0xff]
  %64 = vset.pattern.permute.xlu0 0
  %65 = vperm.xlu0 %64, %v47
  %v66 = vpop.permute.xlu0 %65
  %69 = vset.pattern.permute.xlu0 0
  %70 = vperm.xlu0 %69, %v48
  %v71 = vpop.permute.xlu0 %70
  %74 = vset.pattern.permute.xlu0 0
  %75 = vperm.xlu0 %74, %v49
  %v76 = vpop.permute.xlu0 %75
  %79 = vset.pattern.permute.xlu0 0
  %80 = vperm.xlu0 %79, %v50
  %v81 = vpop.permute.xlu0 %80
  %84 = vset.pattern.permute.xlu0 0
  %85 = vperm.xlu0 %84, %v51
  %v86 = vpop.permute.xlu0 %85
  %89 = vset.pattern.permute.xlu0 0
  %90 = vperm.xlu0 %89, %v52
  %v91 = vpop.permute.xlu0 %90
  %94 = vset.pattern.permute.xlu0 0
  %95 = vperm.xlu0 %94, %v53
  %v96 = vpop.permute.xlu0 %95
  %99 = vset.pattern.permute.xlu0 0
  %100 = vperm.xlu0 %99, %v54
  %v101 = vpop.permute.xlu0 %100
  %104 = vset.pattern.permute.xlu0 0
  %105 = vperm.xlu0 %104, %v55
  %v106 = vpop.permute.xlu0 %105
  %109 = vset.pattern.permute.xlu0 0
  %110 = vperm.xlu0 %109, %v56
  %v111 = vpop.permute.xlu0 %110
  %114 = vset.pattern.permute.xlu0 0
  %115 = vperm.xlu0 %114, %v57
  %v116 = vpop.permute.xlu0 %115
  %119 = vset.pattern.permute.xlu0 0
  %120 = vperm.xlu0 %119, %v58
  %v121 = vpop.permute.xlu0 %120
  %124 = vset.pattern.permute.xlu0 0
  %125 = vperm.xlu0 %124, %v59
  %v126 = vpop.permute.xlu0 %125
  %129 = vset.pattern.permute.xlu0 0
  %130 = vperm.xlu0 %129, %v60
  %v131 = vpop.permute.xlu0 %130
  %134 = vset.pattern.permute.xlu0 0
  %135 = vperm.xlu0 %134, %v61
  %v136 = vpop.permute.xlu0 %135
  %139 = vset.pattern.permute.xlu0 0
  %140 = vperm.xlu0 %139, %v62
  %v141 = vpop.permute.xlu0 %140
  %vm143 = vcmask 64512
  %v145 = vsel %vm143, %v28, 0
  %v148 = vsel %vm143, %v29, 0
  %v151 = vsel %vm143, %v30, 0
  %v154 = vsel %vm143, %v31, 0
  %v157 = vsel %vm143, %v32, 0
  %v160 = vsel %vm143, %v33, 0
  %v163 = vsel %vm143, %v34, 0
  %v166 = vsel %vm143, %v35, 0
  %v169 = vsel %vm143, %v36, 0
  %v172 = vsel %vm143, %v37, 0
  %v175 = vsel %vm143, %v38, 0
  %v178 = vsel %vm143, %v39, 0
  %v181 = vsel %vm143, %v40, 0
  %v184 = vsel %vm143, %v41, 0
  %v187 = vsel %vm143, %v42, 0
  %v190 = vsel %vm143, %v43, 0
  %192 = vmatprep.subr.mxu0 0.0
  %193 = vmatpush1.msra.mxu0 0.0
  %194 = vmatprep.subr.mxu0 0.0
  %195 = vmatpush1.msra.mxu0 0.0
  %196 = vmatprep.subr.mxu0 0.0
  %197 = vmatpush1.msra.mxu0 0.0
  %198 = vmatprep.subr.mxu0 0.0
  %199 = vmatpush1.msra.mxu0 0.0
  %200 = vmatprep.subr.mxu0 0.0
  %201 = vmatpush1.msra.mxu0 0.0
  %202 = vmatprep.subr.mxu0 0.0
  %203 = vmatpush1.msra.mxu0 0.0
  %204 = vmatprep.subr.mxu0 0.0
  %205 = vmatpush1.msra.mxu0 0.0
  %206 = vmatprep.subr.mxu0 0.0
  %207 = vmatpush1.msra.mxu0 0.0
  %208 = vmatprep.subr.mxu0 0.0
  %209 = vmatpush1.msra.mxu0 0.0
  %210 = vmatprep.subr.mxu0 0.0
  %211 = vmatpush1.msra.mxu0 0.0
  %212 = vmatprep.subr.mxu0 0.0
  %213 = vmatpush1.msra.mxu0 0.0
  %214 = vmatprep.subr.mxu0 0.0
  %215 = vmatpush1.msra.mxu0 0.0
  %216 = vmatprep.subr.mxu0 0.0
  %217 = vmatpush1.msra.mxu0 0.0
  %218 = vmatprep.subr.mxu0 0.0
  %219 = vmatpush1.msra.mxu0 0.0
  %220 = vmatprep.subr.mxu0 0.0
  %221 = vmatpush1.msra.mxu0 0.0
  %222 = vmatprep.subr.mxu0 %v45
  %223 = vmatpush1.msra.mxu0 %v44
  %224 = vmatprep.subr.mxu0 0.0
  %225 = vmatpush2.msra.mxu0 0.0
  %226 = vmatprep.subr.mxu0 0.0
  %227 = vmatpush2.msra.mxu0 0.0
  %228 = vmatprep.subr.mxu0 0.0
  %229 = vmatpush2.msra.mxu0 0.0
  %230 = vmatprep.subr.mxu0 0.0
  %231 = vmatpush2.msra.mxu0 0.0
  %232 = vmatprep.subr.mxu0 0.0
  %233 = vmatpush2.msra.mxu0 0.0
  %234 = vmatprep.subr.mxu0 0.0
  %235 = vmatpush2.msra.mxu0 0.0
  %236 = vmatprep.subr.mxu0 0.0
  %237 = vmatpush2.msra.mxu0 0.0
  %238 = vmatprep.subr.mxu0 0.0
  %239 = vmatpush2.msra.mxu0 0.0
  %240 = vmatprep.subr.mxu0 0.0
  %241 = vmatpush2.msra.mxu0 0.0
  %242 = vmatprep.subr.mxu0 0.0
  %243 = vmatpush2.msra.mxu0 0.0
  %244 = vmatprep.subr.mxu0 0.0
  %245 = vmatpush2.msra.mxu0 0.0
  %246 = vmatprep.subr.mxu0 0.0
  %247 = vmatpush2.msra.mxu0 0.0
  %248 = vmatprep.subr.mxu0 0.0
  %249 = vmatpush2.msra.mxu0 0.0
  %250 = vmatprep.subr.mxu0 0.0
  %251 = vmatpush2.msra.mxu0 0.0
  %252 = vmatprep.subr.mxu0 0.0
  %253 = vmatpush2.msra.mxu0 0.0
  %254 = vmatprep.subr.mxu0 0.0
  %255 = vmatpush2.msra.mxu0 0.0
  %256 = vmatprep.mubr.f32.mxu0 0.0
  %257 = vmatmul.mubr.f32.gmra.mxu0 %v145
  %v258 = vpop.f32.mrf.mxu0
  %v259 = vadd.f32 %v66, %v258
  %v260 = vpop.f32.mrf.mxu0
  %v261 = vadd.f32 %v66, %v260
  %262 = vmatprep.mubr.f32.mxu0 0.0
  %263 = vmatmul.mubr.f32.gmra.mxu0 %v148
  %v264 = vpop.f32.mrf.mxu0
  %v265 = vadd.f32 %v71, %v264
  %v266 = vpop.f32.mrf.mxu0
  %v267 = vadd.f32 %v71, %v266
  %268 = vmatprep.mubr.f32.mxu0 0.0
  %269 = vmatmul.mubr.f32.gmra.mxu0 %v151
  %v270 = vpop.f32.mrf.mxu0
  %v271 = vadd.f32 %v76, %v270
  %v272 = vpop.f32.mrf.mxu0
  %v273 = vadd.f32 %v76, %v272
  %274 = vmatprep.mubr.f32.mxu0 0.0
  %275 = vmatmul.mubr.f32.gmra.mxu0 %v154
  %v276 = vpop.f32.mrf.mxu0
  %v277 = vadd.f32 %v81, %v276
  %v278 = vpop.f32.mrf.mxu0
  %v279 = vadd.f32 %v81, %v278
  %280 = vmatprep.mubr.f32.mxu0 0.0
  %281 = vmatmul.mubr.f32.gmra.mxu0 %v157
  %v282 = vpop.f32.mrf.mxu0
  %v283 = vadd.f32 %v86, %v282
  %v284 = vpop.f32.mrf.mxu0
  %v285 = vadd.f32 %v86, %v284
  %286 = vmatprep.mubr.f32.mxu0 0.0
  %287 = vmatmul.mubr.f32.gmra.mxu0 %v160
  %v288 = vpop.f32.mrf.mxu0
  %v289 = vadd.f32 %v91, %v288
  %v290 = vpop.f32.mrf.mxu0
  %v291 = vadd.f32 %v91, %v290
  %292 = vmatprep.mubr.f32.mxu0 0.0
  %293 = vmatmul.mubr.f32.gmra.mxu0 %v163
  %v294 = vpop.f32.mrf.mxu0
  %v295 = vadd.f32 %v96, %v294
  %v296 = vpop.f32.mrf.mxu0
  %v297 = vadd.f32 %v96, %v296
  %298 = vmatprep.mubr.f32.mxu0 0.0
  %299 = vmatmul.mubr.f32.gmra.mxu0 %v166
  %v300 = vpop.f32.mrf.mxu0
  %v301 = vadd.f32 %v101, %v300
  %v302 = vpop.f32.mrf.mxu0
  %v303 = vadd.f32 %v101, %v302
  %304 = vmatprep.mubr.f32.mxu0 0.0
  %305 = vmatmul.mubr.f32.gmra.mxu0 %v169
  %v306 = vpop.f32.mrf.mxu0
  %v307 = vadd.f32 %v106, %v306
  %v308 = vpop.f32.mrf.mxu0
  %v309 = vadd.f32 %v106, %v308
  %310 = vmatprep.mubr.f32.mxu0 0.0
  %311 = vmatmul.mubr.f32.gmra.mxu0 %v172
  %v312 = vpop.f32.mrf.mxu0
  %v313 = vadd.f32 %v111, %v312
  %v314 = vpop.f32.mrf.mxu0
  %v315 = vadd.f32 %v111, %v314
  %316 = vmatprep.mubr.f32.mxu0 0.0
  %317 = vmatmul.mubr.f32.gmra.mxu0 %v175
  %v318 = vpop.f32.mrf.mxu0
  %v319 = vadd.f32 %v116, %v318
  %v320 = vpop.f32.mrf.mxu0
  %v321 = vadd.f32 %v116, %v320
  %322 = vmatprep.mubr.f32.mxu0 0.0
  %323 = vmatmul.mubr.f32.gmra.mxu0 %v178
  %v324 = vpop.f32.mrf.mxu0
  %v325 = vadd.f32 %v121, %v324
  %v326 = vpop.f32.mrf.mxu0
  %v327 = vadd.f32 %v121, %v326
  %328 = vmatprep.mubr.f32.mxu0 0.0
  %329 = vmatmul.mubr.f32.gmra.mxu0 %v181
  %v330 = vpop.f32.mrf.mxu0
  %v331 = vadd.f32 %v126, %v330
  %v332 = vpop.f32.mrf.mxu0
  %v333 = vadd.f32 %v126, %v332
  %334 = vmatprep.mubr.f32.mxu0 0.0
  %335 = vmatmul.mubr.f32.gmra.mxu0 %v184
  %v336 = vpop.f32.mrf.mxu0
  %v337 = vadd.f32 %v131, %v336
  %v338 = vpop.f32.mrf.mxu0
  %v339 = vadd.f32 %v131, %v338
  %340 = vmatprep.mubr.f32.mxu0 0.0
  %341 = vmatmul.mubr.f32.gmra.mxu0 %v187
  %v342 = vpop.f32.mrf.mxu0
  %v343 = vadd.f32 %v136, %v342
  %v344 = vpop.f32.mrf.mxu0
  %v345 = vadd.f32 %v136, %v344
  %346 = vmatprep.mubr.f32.mxu0 0.0
  %347 = vmatmul.mubr.f32.gmra.mxu0 %v190
  %v348 = vpop.f32.mrf.mxu0
  %v349 = vadd.f32 %v141, %v348
  %v350 = vpop.f32.mrf.mxu0
  %v351 = vadd.f32 %v141, %v350
  %352 = vdwg.mxu0
  %353 = vmatprep.subr.mxu0 0.0
  %354 = vmatpush1.msra.mxu0 0.0
  %355 = vmatprep.subr.mxu0 0.0
  %356 = vmatpush1.msra.mxu0 0.0
  %357 = vmatprep.subr.mxu0 0.0
  %358 = vmatpush1.msra.mxu0 0.0
  %359 = vmatprep.subr.mxu0 0.0
  %360 = vmatpush1.msra.mxu0 0.0
  %361 = vmatprep.subr.mxu0 0.0
  %362 = vmatpush1.msra.mxu0 0.0
  %363 = vmatprep.subr.mxu0 0.0
  %364 = vmatpush1.msra.mxu0 0.0
  %365 = vmatprep.subr.mxu0 0.0
  %366 = vmatpush1.msra.mxu0 0.0
  %367 = vmatprep.subr.mxu0 0.0
  %368 = vmatpush1.msra.mxu0 0.0
  %369 = vmatprep.subr.mxu0 0.0
  %370 = vmatpush1.msra.mxu0 0.0
  %371 = vmatprep.subr.mxu0 0.0
  %372 = vmatpush1.msra.mxu0 0.0
  %373 = vmatprep.subr.mxu0 0.0
  %374 = vmatpush1.msra.mxu0 0.0
  %375 = vmatprep.subr.mxu0 0.0
  %376 = vmatpush1.msra.mxu0 0.0
  %377 = vmatprep.subr.mxu0 0.0
  %378 = vmatpush1.msra.mxu0 0.0
  %379 = vmatprep.subr.mxu0 0.0
  %380 = vmatpush1.msra.mxu0 0.0
  %381 = vmatprep.subr.mxu0 0.0
  %382 = vmatpush1.msra.mxu0 0.0
  %383 = vmatprep.subr.mxu0 0.0
  %384 = vmatpush1.msra.mxu0 %v46
  %385 = vmatprep.subr.mxu0 0.0
  %386 = vmatpush2.msra.mxu0 0.0
  %387 = vmatprep.subr.mxu0 0.0
  %388 = vmatpush2.msra.mxu0 0.0
  %389 = vmatprep.subr.mxu0 0.0
  %390 = vmatpush2.msra.mxu0 0.0
  %391 = vmatprep.subr.mxu0 0.0
  %392 = vmatpush2.msra.mxu0 0.0
  %393 = vmatprep.subr.mxu0 0.0
  %394 = vmatpush2.msra.mxu0 0.0
  %395 = vmatprep.subr.mxu0 0.0
  %396 = vmatpush2.msra.mxu0 0.0
  %397 = vmatprep.subr.mxu0 0.0
  %398 = vmatpush2.msra.mxu0 0.0
  %399 = vmatprep.subr.mxu0 0.0
  %400 = vmatpush2.msra.mxu0 0.0
  %401 = vmatprep.subr.mxu0 0.0
  %402 = vmatpush2.msra.mxu0 0.0
  %403 = vmatprep.subr.mxu0 0.0
  %404 = vmatpush2.msra.mxu0 0.0
  %405 = vmatprep.subr.mxu0 0.0
  %406 = vmatpush2.msra.mxu0 0.0
  %407 = vmatprep.subr.mxu0 0.0
  %408 = vmatpush2.msra.mxu0 0.0
  %409 = vmatprep.subr.mxu0 0.0
  %410 = vmatpush2.msra.mxu0 0.0
  %411 = vmatprep.subr.mxu0 0.0
  %412 = vmatpush2.msra.mxu0 0.0
  %413 = vmatprep.subr.mxu0 0.0
  %414 = vmatpush2.msra.mxu0 0.0
  %415 = vmatprep.subr.mxu0 0.0
  %416 = vmatpush2.msra.mxu0 0.0
  %417 = vmatprep.mubr.f32.mxu0 0.0
  %418 = vmatmul.mubr.f32.gmra.mxu0 %v145
  %v419 = vpop.f32.mrf.mxu0
  %v420 = vadd.f32 %v66, %v419
  %v421 = vpop.f32.mrf.mxu0
  %422 = vmatprep.mubr.f32.mxu0 0.0
  %423 = vmatmul.mubr.f32.gmra.mxu0 %v148
  %v424 = vpop.f32.mrf.mxu0
  %v425 = vadd.f32 %v71, %v424
  %v426 = vpop.f32.mrf.mxu0
  %427 = vmatprep.mubr.f32.mxu0 0.0
  %428 = vmatmul.mubr.f32.gmra.mxu0 %v151
  %v429 = vpop.f32.mrf.mxu0
  %v430 = vadd.f32 %v76, %v429
  %v431 = vpop.f32.mrf.mxu0
  %432 = vmatprep.mubr.f32.mxu0 0.0
  %433 = vmatmul.mubr.f32.gmra.mxu0 %v154
  %v434 = vpop.f32.mrf.mxu0
  %v435 = vadd.f32 %v81, %v434
  %v436 = vpop.f32.mrf.mxu0
  %437 = vmatprep.mubr.f32.mxu0 0.0
  %438 = vmatmul.mubr.f32.gmra.mxu0 %v157
  %v439 = vpop.f32.mrf.mxu0
  %v440 = vadd.f32 %v86, %v439
  %v441 = vpop.f32.mrf.mxu0
  %442 = vmatprep.mubr.f32.mxu0 0.0
  %443 = vmatmul.mubr.f32.gmra.mxu0 %v160
  %v444 = vpop.f32.mrf.mxu0
  %v445 = vadd.f32 %v91, %v444
  %v446 = vpop.f32.mrf.mxu0
  %447 = vmatprep.mubr.f32.mxu0 0.0
  %448 = vmatmul.mubr.f32.gmra.mxu0 %v163
  %v449 = vpop.f32.mrf.mxu0
  %v450 = vadd.f32 %v96, %v449
  %v451 = vpop.f32.mrf.mxu0
  %452 = vmatprep.mubr.f32.mxu0 0.0
  %453 = vmatmul.mubr.f32.gmra.mxu0 %v166
  %v454 = vpop.f32.mrf.mxu0
  %v455 = vadd.f32 %v101, %v454
  %v456 = vpop.f32.mrf.mxu0
  %457 = vmatprep.mubr.f32.mxu0 0.0
  %458 = vmatmul.mubr.f32.gmra.mxu0 %v169
  %v459 = vpop.f32.mrf.mxu0
  %v460 = vadd.f32 %v106, %v459
  %v461 = vpop.f32.mrf.mxu0
  %462 = vmatprep.mubr.f32.mxu0 0.0
  %463 = vmatmul.mubr.f32.gmra.mxu0 %v172
  %v464 = vpop.f32.mrf.mxu0
  %v465 = vadd.f32 %v111, %v464
  %v466 = vpop.f32.mrf.mxu0
  %467 = vmatprep.mubr.f32.mxu0 0.0
  %468 = vmatmul.mubr.f32.gmra.mxu0 %v175
  %v469 = vpop.f32.mrf.mxu0
  %v470 = vadd.f32 %v116, %v469
  %v471 = vpop.f32.mrf.mxu0
  %472 = vmatprep.mubr.f32.mxu0 0.0
  %473 = vmatmul.mubr.f32.gmra.mxu0 %v178
  %v474 = vpop.f32.mrf.mxu0
  %v475 = vadd.f32 %v121, %v474
  %v476 = vpop.f32.mrf.mxu0
  %477 = vmatprep.mubr.f32.mxu0 0.0
  %478 = vmatmul.mubr.f32.gmra.mxu0 %v181
  %v479 = vpop.f32.mrf.mxu0
  %v480 = vadd.f32 %v126, %v479
  %v481 = vpop.f32.mrf.mxu0
  %482 = vmatprep.mubr.f32.mxu0 0.0
  %483 = vmatmul.mubr.f32.gmra.mxu0 %v184
  %v484 = vpop.f32.mrf.mxu0
  %v485 = vadd.f32 %v131, %v484
  %v486 = vpop.f32.mrf.mxu0
  %487 = vmatprep.mubr.f32.mxu0 0.0
  %488 = vmatmul.mubr.f32.gmra.mxu0 %v187
  %v489 = vpop.f32.mrf.mxu0
  %v490 = vadd.f32 %v136, %v489
  %v491 = vpop.f32.mrf.mxu0
  %492 = vmatprep.mubr.f32.mxu0 0.0
  %493 = vmatmul.mubr.f32.gmra.mxu0 %v190
  %v494 = vpop.f32.mrf.mxu0
  %v495 = vadd.f32 %v141, %v494
  %v496 = vpop.f32.mrf.mxu0
  %497 = vdwg.mxu0
  %v498 = vmax.f32 %v259, 0.0
  %v499 = vmax.f32 %v261, 0.0
  %v500 = vmax.f32 %v420, 0.0
  %v501 = vmax.f32 %v265, 0.0
  %v502 = vmax.f32 %v267, 0.0
  %v503 = vmax.f32 %v425, 0.0
  %v504 = vmax.f32 %v271, 0.0
  %v505 = vmax.f32 %v273, 0.0
  %v506 = vmax.f32 %v430, 0.0
  %v507 = vmax.f32 %v277, 0.0
  %v508 = vmax.f32 %v279, 0.0
  %v509 = vmax.f32 %v435, 0.0
  %v510 = vmax.f32 %v283, 0.0
  %v511 = vmax.f32 %v285, 0.0
  %v512 = vmax.f32 %v440, 0.0
  %v513 = vmax.f32 %v289, 0.0
  %v514 = vmax.f32 %v291, 0.0
  %v515 = vmax.f32 %v445, 0.0
  %v516 = vmax.f32 %v295, 0.0
  %v517 = vmax.f32 %v297, 0.0
  %v518 = vmax.f32 %v450, 0.0
  %v519 = vmax.f32 %v301, 0.0
  %v520 = vmax.f32 %v303, 0.0
  %v521 = vmax.f32 %v455, 0.0
  %v522 = vmax.f32 %v307, 0.0
  %v523 = vmax.f32 %v309, 0.0
  %v524 = vmax.f32 %v460, 0.0
  %v525 = vmax.f32 %v313, 0.0
  %v526 = vmax.f32 %v315, 0.0
  %v527 = vmax.f32 %v465, 0.0
  %v528 = vmax.f32 %v319, 0.0
  %v529 = vmax.f32 %v321, 0.0
  %v530 = vmax.f32 %v470, 0.0
  %v531 = vmax.f32 %v325, 0.0
  %v532 = vmax.f32 %v327, 0.0
  %v533 = vmax.f32 %v475, 0.0
  %v534 = vmax.f32 %v331, 0.0
  %v535 = vmax.f32 %v333, 0.0
  %v536 = vmax.f32 %v480, 0.0
  %v537 = vmax.f32 %v337, 0.0
  %v538 = vmax.f32 %v339, 0.0
  %v539 = vmax.f32 %v485, 0.0
  %v540 = vmax.f32 %v343, 0.0
  %v541 = vmax.f32 %v345, 0.0
  %v542 = vmax.f32 %v490, 0.0
  %v543 = vmax.f32 %v349, 0.0
  %v544 = vmax.f32 %v351, 0.0
  %v545 = vmax.f32 %v495, 0.0
  %v546 = vld [vmem:[%s3] sm:$0xff]
  %v547 = vld [vmem:[%s3 + $0x8] sm:$0xff]
  %v548 = vld [vmem:[%s3 + $0x10] sm:$0xff]
  %v549 = vld [vmem:[%s3 + $0x18] sm:$0xff]
  %v550 = vld [vmem:[%s3 + $0x20] sm:$0xff]
  %v551 = vld [vmem:[%s3 + $0x28] sm:$0xff]
  %v552 = vld [vmem:[%s3 + $0x30] sm:$0xff]
  %v553 = vld [vmem:[%s3 + $0x38] sm:$0xff]
  %v554 = vld [vmem:[%s3 + $0x40] sm:$0xff]
  %v555 = vld [vmem:[%s3 + $0x48] sm:$0xff]
  %v556 = vld [vmem:[%s3 + $0x50] sm:$0xff]
  %v557 = vld [vmem:[%s3 + $0x58] sm:$0xff]
  %v558 = vld [vmem:[%s3 + $0x60] sm:$0xff]
  %v559 = vld [vmem:[%s3 + $0x68] sm:$0xff]
  %v560 = vld [vmem:[%s3 + $0x70] sm:$0xff]
  %v561 = vld [vmem:[%s3 + $0x78] sm:$0xff]
  %v562 = vld [vmem:[%s4] sm:$0xff]
  %v563 = vld [vmem:[%s4 + $0x8] sm:$0xff]
  %v564 = vld [vmem:[%s4 + $0x10] sm:$0xff]
  %v565 = vld [vmem:[%s4 + $0x18] sm:$0xff]
  %v566 = vld [vmem:[%s4 + $0x20] sm:$0xff]
  %v567 = vld [vmem:[%s4 + $0x28] sm:$0xff]
  %v568 = vld [vmem:[%s4 + $0x30] sm:$0xff]
  %v569 = vld [vmem:[%s4 + $0x38] sm:$0xff]
  %v570 = vld [vmem:[%s4 + $0x40] sm:$0xff]
  %v571 = vld [vmem:[%s4 + $0x48] sm:$0xff]
  %v572 = vld [vmem:[%s4 + $0x50] sm:$0xff]
  %v573 = vld [vmem:[%s4 + $0x58] sm:$0xff]
  %v574 = vld [vmem:[%s4 + $0x60] sm:$0xff]
  %v575 = vld [vmem:[%s4 + $0x68] sm:$0xff]
  %v576 = vld [vmem:[%s4 + $0x70] sm:$0xff]
  %v577 = vld [vmem:[%s4 + $0x78] sm:$0xff]
  %579 = vset.pattern.permute.xlu0 0
  %580 = vperm.xlu0 %579, %v562
  %v581 = vpop.permute.xlu0 %580
  %584 = vset.pattern.permute.xlu0 0
  %585 = vperm.xlu0 %584, %v563
  %v586 = vpop.permute.xlu0 %585
  %589 = vset.pattern.permute.xlu0 0
  %590 = vperm.xlu0 %589, %v564
  %v591 = vpop.permute.xlu0 %590
  %594 = vset.pattern.permute.xlu0 0
  %595 = vperm.xlu0 %594, %v565
  %v596 = vpop.permute.xlu0 %595
  %599 = vset.pattern.permute.xlu0 0
  %600 = vperm.xlu0 %599, %v566
  %v601 = vpop.permute.xlu0 %600
  %604 = vset.pattern.permute.xlu0 0
  %605 = vperm.xlu0 %604, %v567
  %v606 = vpop.permute.xlu0 %605
  %609 = vset.pattern.permute.xlu0 0
  %610 = vperm.xlu0 %609, %v568
  %v611 = vpop.permute.xlu0 %610
  %614 = vset.pattern.permute.xlu0 0
  %615 = vperm.xlu0 %614, %v569
  %v616 = vpop.permute.xlu0 %615
  %619 = vset.pattern.permute.xlu0 0
  %620 = vperm.xlu0 %619, %v570
  %v621 = vpop.permute.xlu0 %620
  %624 = vset.pattern.permute.xlu0 0
  %625 = vperm.xlu0 %624, %v571
  %v626 = vpop.permute.xlu0 %625
  %629 = vset.pattern.permute.xlu0 0
  %630 = vperm.xlu0 %629, %v572
  %v631 = vpop.permute.xlu0 %630
  %634 = vset.pattern.permute.xlu0 0
  %635 = vperm.xlu0 %634, %v573
  %v636 = vpop.permute.xlu0 %635
  %639 = vset.pattern.permute.xlu0 0
  %640 = vperm.xlu0 %639, %v574
  %v641 = vpop.permute.xlu0 %640
  %644 = vset.pattern.permute.xlu0 0
  %645 = vperm.xlu0 %644, %v575
  %v646 = vpop.permute.xlu0 %645
  %649 = vset.pattern.permute.xlu0 0
  %650 = vperm.xlu0 %649, %v576
  %v651 = vpop.permute.xlu0 %650
  %654 = vset.pattern.permute.xlu0 0
  %655 = vperm.xlu0 %654, %v577
  %v656 = vpop.permute.xlu0 %655
  %658 = vmatprep.subr.mxu0 %v544
  %659 = vmatpush1.msra.mxu0 %v543
  %660 = vmatprep.subr.mxu0 %v541
  %661 = vmatpush1.msra.mxu0 %v540
  %662 = vmatprep.subr.mxu0 %v538
  %663 = vmatpush1.msra.mxu0 %v537
  %664 = vmatprep.subr.mxu0 %v535
  %665 = vmatpush1.msra.mxu0 %v534
  %666 = vmatprep.subr.mxu0 %v532
  %667 = vmatpush1.msra.mxu0 %v531
  %668 = vmatprep.subr.mxu0 %v529
  %669 = vmatpush1.msra.mxu0 %v528
  %670 = vmatprep.subr.mxu0 %v526
  %671 = vmatpush1.msra.mxu0 %v525
  %672 = vmatprep.subr.mxu0 %v523
  %673 = vmatpush1.msra.mxu0 %v522
  %674 = vmatprep.subr.mxu0 %v520
  %675 = vmatpush1.msra.mxu0 %v519
  %676 = vmatprep.subr.mxu0 %v517
  %677 = vmatpush1.msra.mxu0 %v516
  %678 = vmatprep.subr.mxu0 %v514
  %679 = vmatpush1.msra.mxu0 %v513
  %680 = vmatprep.subr.mxu0 %v511
  %681 = vmatpush1.msra.mxu0 %v510
  %682 = vmatprep.subr.mxu0 %v508
  %683 = vmatpush1.msra.mxu0 %v507
  %684 = vmatprep.subr.mxu0 %v505
  %685 = vmatpush1.msra.mxu0 %v504
  %686 = vmatprep.subr.mxu0 %v502
  %687 = vmatpush1.msra.mxu0 %v501
  %688 = vmatprep.subr.mxu0 %v499
  %689 = vmatpush1.msra.mxu0 %v498
  %690 = vmatprep.subr.mxu0 0.0
  %691 = vmatpush2.msra.mxu0 0.0
  %692 = vmatprep.subr.mxu0 0.0
  %693 = vmatpush2.msra.mxu0 0.0
  %694 = vmatprep.subr.mxu0 0.0
  %695 = vmatpush2.msra.mxu0 0.0
  %696 = vmatprep.subr.mxu0 0.0
  %697 = vmatpush2.msra.mxu0 0.0
  %698 = vmatprep.subr.mxu0 0.0
  %699 = vmatpush2.msra.mxu0 0.0
  %700 = vmatprep.subr.mxu0 0.0
  %701 = vmatpush2.msra.mxu0 0.0
  %702 = vmatprep.subr.mxu0 0.0
  %703 = vmatpush2.msra.mxu0 0.0
  %704 = vmatprep.subr.mxu0 0.0
  %705 = vmatpush2.msra.mxu0 0.0
  %706 = vmatprep.subr.mxu0 0.0
  %707 = vmatpush2.msra.mxu0 0.0
  %708 = vmatprep.subr.mxu0 0.0
  %709 = vmatpush2.msra.mxu0 0.0
  %710 = vmatprep.subr.mxu0 0.0
  %711 = vmatpush2.msra.mxu0 0.0
  %712 = vmatprep.subr.mxu0 0.0
  %713 = vmatpush2.msra.mxu0 0.0
  %714 = vmatprep.subr.mxu0 0.0
  %715 = vmatpush2.msra.mxu0 0.0
  %716 = vmatprep.subr.mxu0 0.0
  %717 = vmatpush2.msra.mxu0 0.0
  %718 = vmatprep.subr.mxu0 0.0
  %719 = vmatpush2.msra.mxu0 0.0
  %720 = vmatprep.subr.mxu0 0.0
  %721 = vmatpush2.msra.mxu0 0.0
  %722 = vmatprep.mubr.f32.mxu0 0.0
  %723 = vmatmul.mubr.f32.gmra.mxu0 %v546
  %v724 = vpop.f32.mrf.mxu0
  %v725 = vadd.f32 %v581, %v724
  %v726 = vpop.f32.mrf.mxu0
  %v727 = vadd.f32 %v581, %v726
  %728 = vmatprep.mubr.f32.mxu0 0.0
  %729 = vmatmul.mubr.f32.gmra.mxu0 %v547
  %v730 = vpop.f32.mrf.mxu0
  %v731 = vadd.f32 %v586, %v730
  %v732 = vpop.f32.mrf.mxu0
  %v733 = vadd.f32 %v586, %v732
  %734 = vmatprep.mubr.f32.mxu0 0.0
  %735 = vmatmul.mubr.f32.gmra.mxu0 %v548
  %v736 = vpop.f32.mrf.mxu0
  %v737 = vadd.f32 %v591, %v736
  %v738 = vpop.f32.mrf.mxu0
  %v739 = vadd.f32 %v591, %v738
  %740 = vmatprep.mubr.f32.mxu0 0.0
  %741 = vmatmul.mubr.f32.gmra.mxu0 %v549
  %v742 = vpop.f32.mrf.mxu0
  %v743 = vadd.f32 %v596, %v742
  %v744 = vpop.f32.mrf.mxu0
  %v745 = vadd.f32 %v596, %v744
  %746 = vmatprep.mubr.f32.mxu0 0.0
  %747 = vmatmul.mubr.f32.gmra.mxu0 %v550
  %v748 = vpop.f32.mrf.mxu0
  %v749 = vadd.f32 %v601, %v748
  %v750 = vpop.f32.mrf.mxu0
  %v751 = vadd.f32 %v601, %v750
  %752 = vmatprep.mubr.f32.mxu0 0.0
  %753 = vmatmul.mubr.f32.gmra.mxu0 %v551
  %v754 = vpop.f32.mrf.mxu0
  %v755 = vadd.f32 %v606, %v754
  %v756 = vpop.f32.mrf.mxu0
  %v757 = vadd.f32 %v606, %v756
  %758 = vmatprep.mubr.f32.mxu0 0.0
  %759 = vmatmul.mubr.f32.gmra.mxu0 %v552
  %v760 = vpop.f32.mrf.mxu0
  %v761 = vadd.f32 %v611, %v760
  %v762 = vpop.f32.mrf.mxu0
  %v763 = vadd.f32 %v611, %v762
  %764 = vmatprep.mubr.f32.mxu0 0.0
  %765 = vmatmul.mubr.f32.gmra.mxu0 %v553
  %v766 = vpop.f32.mrf.mxu0
  %v767 = vadd.f32 %v616, %v766
  %v768 = vpop.f32.mrf.mxu0
  %v769 = vadd.f32 %v616, %v768
  %770 = vmatprep.mubr.f32.mxu0 0.0
  %771 = vmatmul.mubr.f32.gmra.mxu0 %v554
  %v772 = vpop.f32.mrf.mxu0
  %v773 = vadd.f32 %v621, %v772
  %v774 = vpop.f32.mrf.mxu0
  %v775 = vadd.f32 %v621, %v774
  %776 = vmatprep.mubr.f32.mxu0 0.0
  %777 = vmatmul.mubr.f32.gmra.mxu0 %v555
  %v778 = vpop.f32.mrf.mxu0
  %v779 = vadd.f32 %v626, %v778
  %v780 = vpop.f32.mrf.mxu0
  %v781 = vadd.f32 %v626, %v780
  %782 = vmatprep.mubr.f32.mxu0 0.0
  %783 = vmatmul.mubr.f32.gmra.mxu0 %v556
  %v784 = vpop.f32.mrf.mxu0
  %v785 = vadd.f32 %v631, %v784
  %v786 = vpop.f32.mrf.mxu0
  %v787 = vadd.f32 %v631, %v786
  %788 = vmatprep.mubr.f32.mxu0 0.0
  %789 = vmatmul.mubr.f32.gmra.mxu0 %v557
  %v790 = vpop.f32.mrf.mxu0
  %v791 = vadd.f32 %v636, %v790
  %v792 = vpop.f32.mrf.mxu0
  %v793 = vadd.f32 %v636, %v792
  %794 = vmatprep.mubr.f32.mxu0 0.0
  %795 = vmatmul.mubr.f32.gmra.mxu0 %v558
  %v796 = vpop.f32.mrf.mxu0
  %v797 = vadd.f32 %v641, %v796
  %v798 = vpop.f32.mrf.mxu0
  %v799 = vadd.f32 %v641, %v798
  %800 = vmatprep.mubr.f32.mxu0 0.0
  %801 = vmatmul.mubr.f32.gmra.mxu0 %v559
  %v802 = vpop.f32.mrf.mxu0
  %v803 = vadd.f32 %v646, %v802
  %v804 = vpop.f32.mrf.mxu0
  %v805 = vadd.f32 %v646, %v804
  %806 = vmatprep.mubr.f32.mxu0 0.0
  %807 = vmatmul.mubr.f32.gmra.mxu0 %v560
  %v808 = vpop.f32.mrf.mxu0
  %v809 = vadd.f32 %v651, %v808
  %v810 = vpop.f32.mrf.mxu0
  %v811 = vadd.f32 %v651, %v810
  %812 = vmatprep.mubr.f32.mxu0 0.0
  %813 = vmatmul.mubr.f32.gmra.mxu0 %v561
  %v814 = vpop.f32.mrf.mxu0
  %v815 = vadd.f32 %v656, %v814
  %v816 = vpop.f32.mrf.mxu0
  %v817 = vadd.f32 %v656, %v816
  %818 = vdwg.mxu0
  %819 = vmatprep.subr.mxu0 0.0
  %820 = vmatpush1.msra.mxu0 %v545
  %821 = vmatprep.subr.mxu0 0.0
  %822 = vmatpush1.msra.mxu0 %v542
  %823 = vmatprep.subr.mxu0 0.0
  %824 = vmatpush1.msra.mxu0 %v539
  %825 = vmatprep.subr.mxu0 0.0
  %826 = vmatpush1.msra.mxu0 %v536
  %827 = vmatprep.subr.mxu0 0.0
  %828 = vmatpush1.msra.mxu0 %v533
  %829 = vmatprep.subr.mxu0 0.0
  %830 = vmatpush1.msra.mxu0 %v530
  %831 = vmatprep.subr.mxu0 0.0
  %832 = vmatpush1.msra.mxu0 %v527
  %833 = vmatprep.subr.mxu0 0.0
  %834 = vmatpush1.msra.mxu0 %v524
  %835 = vmatprep.subr.mxu0 0.0
  %836 = vmatpush1.msra.mxu0 %v521
  %837 = vmatprep.subr.mxu0 0.0
  %838 = vmatpush1.msra.mxu0 %v518
  %839 = vmatprep.subr.mxu0 0.0
  %840 = vmatpush1.msra.mxu0 %v515
  %841 = vmatprep.subr.mxu0 0.0
  %842 = vmatpush1.msra.mxu0 %v512
  %843 = vmatprep.subr.mxu0 0.0
  %844 = vmatpush1.msra.mxu0 %v509
  %845 = vmatprep.subr.mxu0 0.0
  %846 = vmatpush1.msra.mxu0 %v506
  %847 = vmatprep.subr.mxu0 0.0
  %848 = vmatpush1.msra.mxu0 %v503
  %849 = vmatprep.subr.mxu0 0.0
  %850 = vmatpush1.msra.mxu0 %v500
  %851 = vmatprep.subr.mxu0 0.0
  %852 = vmatpush2.msra.mxu0 0.0
  %853 = vmatprep.subr.mxu0 0.0
  %854 = vmatpush2.msra.mxu0 0.0
  %855 = vmatprep.subr.mxu0 0.0
  %856 = vmatpush2.msra.mxu0 0.0
  %857 = vmatprep.subr.mxu0 0.0
  %858 = vmatpush2.msra.mxu0 0.0
  %859 = vmatprep.subr.mxu0 0.0
  %860 = vmatpush2.msra.mxu0 0.0
  %861 = vmatprep.subr.mxu0 0.0
  %862 = vmatpush2.msra.mxu0 0.0
  %863 = vmatprep.subr.mxu0 0.0
  %864 = vmatpush2.msra.mxu0 0.0
  %865 = vmatprep.subr.mxu0 0.0
  %866 = vmatpush2.msra.mxu0 0.0
  %867 = vmatprep.subr.mxu0 0.0
  %868 = vmatpush2.msra.mxu0 0.0
  %869 = vmatprep.subr.mxu0 0.0
  %870 = vmatpush2.msra.mxu0 0.0
  %871 = vmatprep.subr.mxu0 0.0
  %872 = vmatpush2.msra.mxu0 0.0
  %873 = vmatprep.subr.mxu0 0.0
  %874 = vmatpush2.msra.mxu0 0.0
  %875 = vmatprep.subr.mxu0 0.0
  %876 = vmatpush2.msra.mxu0 0.0
  %877 = vmatprep.subr.mxu0 0.0
  %878 = vmatpush2.msra.mxu0 0.0
  %879 = vmatprep.subr.mxu0 0.0
  %880 = vmatpush2.msra.mxu0 0.0
  %881 = vmatprep.subr.mxu0 0.0
  %882 = vmatpush2.msra.mxu0 0.0
  %883 = vmatprep.mubr.f32.mxu0 0.0
  %884 = vmatmul.mubr.f32.gmra.mxu0 %v546
  %v885 = vpop.f32.mrf.mxu0
  %v886 = vadd.f32 %v581, %v885
  %v887 = vpop.f32.mrf.mxu0
  %888 = vmatprep.mubr.f32.mxu0 0.0
  %889 = vmatmul.mubr.f32.gmra.mxu0 %v547
  %v890 = vpop.f32.mrf.mxu0
  %v891 = vadd.f32 %v586, %v890
  %v892 = vpop.f32.mrf.mxu0
  %893 = vmatprep.mubr.f32.mxu0 0.0
  %894 = vmatmul.mubr.f32.gmra.mxu0 %v548
  %v895 = vpop.f32.mrf.mxu0
  %v896 = vadd.f32 %v591, %v895
  %v897 = vpop.f32.mrf.mxu0
  %898 = vmatprep.mubr.f32.mxu0 0.0
  %899 = vmatmul.mubr.f32.gmra.mxu0 %v549
  %v900 = vpop.f32.mrf.mxu0
  %v901 = vadd.f32 %v596, %v900
  %v902 = vpop.f32.mrf.mxu0
  %903 = vmatprep.mubr.f32.mxu0 0.0
  %904 = vmatmul.mubr.f32.gmra.mxu0 %v550
  %v905 = vpop.f32.mrf.mxu0
  %v906 = vadd.f32 %v601, %v905
  %v907 = vpop.f32.mrf.mxu0
  %908 = vmatprep.mubr.f32.mxu0 0.0
  %909 = vmatmul.mubr.f32.gmra.mxu0 %v551
  %v910 = vpop.f32.mrf.mxu0
  %v911 = vadd.f32 %v606, %v910
  %v912 = vpop.f32.mrf.mxu0
  %913 = vmatprep.mubr.f32.mxu0 0.0
  %914 = vmatmul.mubr.f32.gmra.mxu0 %v552
  %v915 = vpop.f32.mrf.mxu0
  %v916 = vadd.f32 %v611, %v915
  %v917 = vpop.f32.mrf.mxu0
  %918 = vmatprep.mubr.f32.mxu0 0.0
  %919 = vmatmul.mubr.f32.gmra.mxu0 %v553
  %v920 = vpop.f32.mrf.mxu0
  %v921 = vadd.f32 %v616, %v920
  %v922 = vpop.f32.mrf.mxu0
  %923 = vmatprep.mubr.f32.mxu0 0.0
  %924 = vmatmul.mubr.f32.gmra.mxu0 %v554
  %v925 = vpop.f32.mrf.mxu0
  %v926 = vadd.f32 %v621, %v925
  %v927 = vpop.f32.mrf.mxu0
  %928 = vmatprep.mubr.f32.mxu0 0.0
  %929 = vmatmul.mubr.f32.gmra.mxu0 %v555
  %v930 = vpop.f32.mrf.mxu0
  %v931 = vadd.f32 %v626, %v930
  %v932 = vpop.f32.mrf.mxu0
  %933 = vmatprep.mubr.f32.mxu0 0.0
  %934 = vmatmul.mubr.f32.gmra.mxu0 %v556
  %v935 = vpop.f32.mrf.mxu0
  %v936 = vadd.f32 %v631, %v935
  %v937 = vpop.f32.mrf.mxu0
  %938 = vmatprep.mubr.f32.mxu0 0.0
  %939 = vmatmul.mubr.f32.gmra.mxu0 %v557
  %v940 = vpop.f32.mrf.mxu0
  %v941 = vadd.f32 %v636, %v940
  %v942 = vpop.f32.mrf.mxu0
  %943 = vmatprep.mubr.f32.mxu0 0.0
  %944 = vmatmul.mubr.f32.gmra.mxu0 %v558
  %v945 = vpop.f32.mrf.mxu0
  %v946 = vadd.f32 %v641, %v945
  %v947 = vpop.f32.mrf.mxu0
  %948 = vmatprep.mubr.f32.mxu0 0.0
  %949 = vmatmul.mubr.f32.gmra.mxu0 %v559
  %v950 = vpop.f32.mrf.mxu0
  %v951 = vadd.f32 %v646, %v950
  %v952 = vpop.f32.mrf.mxu0
  %953 = vmatprep.mubr.f32.mxu0 0.0
  %954 = vmatmul.mubr.f32.gmra.mxu0 %v560
  %v955 = vpop.f32.mrf.mxu0
  %v956 = vadd.f32 %v651, %v955
  %v957 = vpop.f32.mrf.mxu0
  %958 = vmatprep.mubr.f32.mxu0 0.0
  %959 = vmatmul.mubr.f32.gmra.mxu0 %v561
  %v960 = vpop.f32.mrf.mxu0
  %v961 = vadd.f32 %v656, %v960
  %v962 = vpop.f32.mrf.mxu0
  %963 = vdwg.mxu0
  %v964 = vmax.f32 %v725, 0.0
  %v965 = vmax.f32 %v727, 0.0
  %v966 = vmax.f32 %v886, 0.0
  %v967 = vmax.f32 %v731, 0.0
  %v968 = vmax.f32 %v733, 0.0
  %v969 = vmax.f32 %v891, 0.0
  %v970 = vmax.f32 %v737, 0.0
  %v971 = vmax.f32 %v739, 0.0
  %v972 = vmax.f32 %v896, 0.0
  %v973 = vmax.f32 %v743, 0.0
  %v974 = vmax.f32 %v745, 0.0
  %v975 = vmax.f32 %v901, 0.0
  %v976 = vmax.f32 %v749, 0.0
  %v977 = vmax.f32 %v751, 0.0
  %v978 = vmax.f32 %v906, 0.0
  %v979 = vmax.f32 %v755, 0.0
  %v980 = vmax.f32 %v757, 0.0
  %v981 = vmax.f32 %v911, 0.0
  %v982 = vmax.f32 %v761, 0.0
  %v983 = vmax.f32 %v763, 0.0
  %v984 = vmax.f32 %v916, 0.0
  %v985 = vmax.f32 %v767, 0.0
  %v986 = vmax.f32 %v769, 0.0
  %v987 = vmax.f32 %v921, 0.0
  %v988 = vmax.f32 %v773, 0.0
  %v989 = vmax.f32 %v775, 0.0
  %v990 = vmax.f32 %v926, 0.0
  %v991 = vmax.f32 %v779, 0.0
  %v992 = vmax.f32 %v781, 0.0
  %v993 = vmax.f32 %v931, 0.0
  %v994 = vmax.f32 %v785, 0.0
  %v995 = vmax.f32 %v787, 0.0
  %v996 = vmax.f32 %v936, 0.0
  %v997 = vmax.f32 %v791, 0.0
  %v998 = vmax.f32 %v793, 0.0
  %v999 = vmax.f32 %v941, 0.0
  %v1000 = vmax.f32 %v797, 0.0
  %v1001 = vmax.f32 %v799, 0.0
  %v1002 = vmax.f32 %v946, 0.0
  %v1003 = vmax.f32 %v803, 0.0
  %v1004 = vmax.f32 %v805, 0.0
  %v1005 = vmax.f32 %v951, 0.0
  %v1006 = vmax.f32 %v809, 0.0
  %v1007 = vmax.f32 %v811, 0.0
  %v1008 = vmax.f32 %v956, 0.0
  %v1009 = vmax.f32 %v815, 0.0
  %v1010 = vmax.f32 %v817, 0.0
  %v1011 = vmax.f32 %v961, 0.0
  %s1012 = scalar_lea.vmem %s3, 128
  %v1013 = vld [vmem:[%s1012] sm:$0xff]
  %v1014 = vld [vmem:[%s1012 + $0x8] sm:$0xff]
  %v1015 = vld [vmem:[%s1012 + $0x10] sm:$0xff]
  %v1016 = vld [vmem:[%s1012 + $0x18] sm:$0xff]
  %v1017 = vld [vmem:[%s1012 + $0x20] sm:$0xff]
  %v1018 = vld [vmem:[%s1012 + $0x28] sm:$0xff]
  %v1019 = vld [vmem:[%s1012 + $0x30] sm:$0xff]
  %v1020 = vld [vmem:[%s1012 + $0x38] sm:$0xff]
  %v1021 = vld [vmem:[%s1012 + $0x40] sm:$0xff]
  %v1022 = vld [vmem:[%s1012 + $0x48] sm:$0xff]
  %v1023 = vld [vmem:[%s1012 + $0x50] sm:$0xff]
  %v1024 = vld [vmem:[%s1012 + $0x58] sm:$0xff]
  %v1025 = vld [vmem:[%s1012 + $0x60] sm:$0xff]
  %v1026 = vld [vmem:[%s1012 + $0x68] sm:$0xff]
  %v1027 = vld [vmem:[%s1012 + $0x70] sm:$0xff]
  %v1028 = vld [vmem:[%s1012 + $0x78] sm:$0xff]
  %s1029 = scalar_lea.vmem %s4, 128
  %v1030 = vld [vmem:[%s1029] sm:$0xff]
  %v1031 = vld [vmem:[%s1029 + $0x8] sm:$0xff]
  %v1032 = vld [vmem:[%s1029 + $0x10] sm:$0xff]
  %v1033 = vld [vmem:[%s1029 + $0x18] sm:$0xff]
  %v1034 = vld [vmem:[%s1029 + $0x20] sm:$0xff]
  %v1035 = vld [vmem:[%s1029 + $0x28] sm:$0xff]
  %v1036 = vld [vmem:[%s1029 + $0x30] sm:$0xff]
  %v1037 = vld [vmem:[%s1029 + $0x38] sm:$0xff]
  %v1038 = vld [vmem:[%s1029 + $0x40] sm:$0xff]
  %v1039 = vld [vmem:[%s1029 + $0x48] sm:$0xff]
  %v1040 = vld [vmem:[%s1029 + $0x50] sm:$0xff]
  %v1041 = vld [vmem:[%s1029 + $0x58] sm:$0xff]
  %v1042 = vld [vmem:[%s1029 + $0x60] sm:$0xff]
  %v1043 = vld [vmem:[%s1029 + $0x68] sm:$0xff]
  %v1044 = vld [vmem:[%s1029 + $0x70] sm:$0xff]
  %v1045 = vld [vmem:[%s1029 + $0x78] sm:$0xff]
  %1047 = vset.pattern.permute.xlu0 0
  %1048 = vperm.xlu0 %1047, %v1030
  %v1049 = vpop.permute.xlu0 %1048
  %1052 = vset.pattern.permute.xlu0 0
  %1053 = vperm.xlu0 %1052, %v1031
  %v1054 = vpop.permute.xlu0 %1053
  %1057 = vset.pattern.permute.xlu0 0
  %1058 = vperm.xlu0 %1057, %v1032
  %v1059 = vpop.permute.xlu0 %1058
  %1062 = vset.pattern.permute.xlu0 0
  %1063 = vperm.xlu0 %1062, %v1033
  %v1064 = vpop.permute.xlu0 %1063
  %1067 = vset.pattern.permute.xlu0 0
  %1068 = vperm.xlu0 %1067, %v1034
  %v1069 = vpop.permute.xlu0 %1068
  %1072 = vset.pattern.permute.xlu0 0
  %1073 = vperm.xlu0 %1072, %v1035
  %v1074 = vpop.permute.xlu0 %1073
  %1077 = vset.pattern.permute.xlu0 0
  %1078 = vperm.xlu0 %1077, %v1036
  %v1079 = vpop.permute.xlu0 %1078
  %1082 = vset.pattern.permute.xlu0 0
  %1083 = vperm.xlu0 %1082, %v1037
  %v1084 = vpop.permute.xlu0 %1083
  %1087 = vset.pattern.permute.xlu0 0
  %1088 = vperm.xlu0 %1087, %v1038
  %v1089 = vpop.permute.xlu0 %1088
  %1092 = vset.pattern.permute.xlu0 0
  %1093 = vperm.xlu0 %1092, %v1039
  %v1094 = vpop.permute.xlu0 %1093
  %1097 = vset.pattern.permute.xlu0 0
  %1098 = vperm.xlu0 %1097, %v1040
  %v1099 = vpop.permute.xlu0 %1098
  %1102 = vset.pattern.permute.xlu0 0
  %1103 = vperm.xlu0 %1102, %v1041
  %v1104 = vpop.permute.xlu0 %1103
  %1107 = vset.pattern.permute.xlu0 0
  %1108 = vperm.xlu0 %1107, %v1042
  %v1109 = vpop.permute.xlu0 %1108
  %1112 = vset.pattern.permute.xlu0 0
  %1113 = vperm.xlu0 %1112, %v1043
  %v1114 = vpop.permute.xlu0 %1113
  %1117 = vset.pattern.permute.xlu0 0
  %1118 = vperm.xlu0 %1117, %v1044
  %v1119 = vpop.permute.xlu0 %1118
  %1122 = vset.pattern.permute.xlu0 0
  %1123 = vperm.xlu0 %1122, %v1045
  %v1124 = vpop.permute.xlu0 %1123
  %1126 = vmatprep.subr.mxu0 %v1010
  %1127 = vmatpush1.msra.mxu0 %v1009
  %1128 = vmatprep.subr.mxu0 %v1007
  %1129 = vmatpush1.msra.mxu0 %v1006
  %1130 = vmatprep.subr.mxu0 %v1004
  %1131 = vmatpush1.msra.mxu0 %v1003
  %1132 = vmatprep.subr.mxu0 %v1001
  %1133 = vmatpush1.msra.mxu0 %v1000
  %1134 = vmatprep.subr.mxu0 %v998
  %1135 = vmatpush1.msra.mxu0 %v997
  %1136 = vmatprep.subr.mxu0 %v995
  %1137 = vmatpush1.msra.mxu0 %v994
  %1138 = vmatprep.subr.mxu0 %v992
  %1139 = vmatpush1.msra.mxu0 %v991
  %1140 = vmatprep.subr.mxu0 %v989
  %1141 = vmatpush1.msra.mxu0 %v988
  %1142 = vmatprep.subr.mxu0 %v986
  %1143 = vmatpush1.msra.mxu0 %v985
  %1144 = vmatprep.subr.mxu0 %v983
  %1145 = vmatpush1.msra.mxu0 %v982
  %1146 = vmatprep.subr.mxu0 %v980
  %1147 = vmatpush1.msra.mxu0 %v979
  %1148 = vmatprep.subr.mxu0 %v977
  %1149 = vmatpush1.msra.mxu0 %v976
  %1150 = vmatprep.subr.mxu0 %v974
  %1151 = vmatpush1.msra.mxu0 %v973
  %1152 = vmatprep.subr.mxu0 %v971
  %1153 = vmatpush1.msra.mxu0 %v970
  %1154 = vmatprep.subr.mxu0 %v968
  %1155 = vmatpush1.msra.mxu0 %v967
  %1156 = vmatprep.subr.mxu0 %v965
  %1157 = vmatpush1.msra.mxu0 %v964
  %1158 = vmatprep.subr.mxu0 0.0
  %1159 = vmatpush2.msra.mxu0 0.0
  %1160 = vmatprep.subr.mxu0 0.0
  %1161 = vmatpush2.msra.mxu0 0.0
  %1162 = vmatprep.subr.mxu0 0.0
  %1163 = vmatpush2.msra.mxu0 0.0
  %1164 = vmatprep.subr.mxu0 0.0
  %1165 = vmatpush2.msra.mxu0 0.0
  %1166 = vmatprep.subr.mxu0 0.0
  %1167 = vmatpush2.msra.mxu0 0.0
  %1168 = vmatprep.subr.mxu0 0.0
  %1169 = vmatpush2.msra.mxu0 0.0
  %1170 = vmatprep.subr.mxu0 0.0
  %1171 = vmatpush2.msra.mxu0 0.0
  %1172 = vmatprep.subr.mxu0 0.0
  %1173 = vmatpush2.msra.mxu0 0.0
  %1174 = vmatprep.subr.mxu0 0.0
  %1175 = vmatpush2.msra.mxu0 0.0
  %1176 = vmatprep.subr.mxu0 0.0
  %1177 = vmatpush2.msra.mxu0 0.0
  %1178 = vmatprep.subr.mxu0 0.0
  %1179 = vmatpush2.msra.mxu0 0.0
  %1180 = vmatprep.subr.mxu0 0.0
  %1181 = vmatpush2.msra.mxu0 0.0
  %1182 = vmatprep.subr.mxu0 0.0
  %1183 = vmatpush2.msra.mxu0 0.0
  %1184 = vmatprep.subr.mxu0 0.0
  %1185 = vmatpush2.msra.mxu0 0.0
  %1186 = vmatprep.subr.mxu0 0.0
  %1187 = vmatpush2.msra.mxu0 0.0
  %1188 = vmatprep.subr.mxu0 0.0
  %1189 = vmatpush2.msra.mxu0 0.0
  %1190 = vmatprep.mubr.f32.mxu0 0.0
  %1191 = vmatmul.mubr.f32.gmra.mxu0 %v1013
  %v1192 = vpop.f32.mrf.mxu0
  %v1193 = vadd.f32 %v1049, %v1192
  %v1194 = vpop.f32.mrf.mxu0
  %v1195 = vadd.f32 %v1049, %v1194
  %1196 = vmatprep.mubr.f32.mxu0 0.0
  %1197 = vmatmul.mubr.f32.gmra.mxu0 %v1014
  %v1198 = vpop.f32.mrf.mxu0
  %v1199 = vadd.f32 %v1054, %v1198
  %v1200 = vpop.f32.mrf.mxu0
  %v1201 = vadd.f32 %v1054, %v1200
  %1202 = vmatprep.mubr.f32.mxu0 0.0
  %1203 = vmatmul.mubr.f32.gmra.mxu0 %v1015
  %v1204 = vpop.f32.mrf.mxu0
  %v1205 = vadd.f32 %v1059, %v1204
  %v1206 = vpop.f32.mrf.mxu0
  %v1207 = vadd.f32 %v1059, %v1206
  %1208 = vmatprep.mubr.f32.mxu0 0.0
  %1209 = vmatmul.mubr.f32.gmra.mxu0 %v1016
  %v1210 = vpop.f32.mrf.mxu0
  %v1211 = vadd.f32 %v1064, %v1210
  %v1212 = vpop.f32.mrf.mxu0
  %v1213 = vadd.f32 %v1064, %v1212
  %1214 = vmatprep.mubr.f32.mxu0 0.0
  %1215 = vmatmul.mubr.f32.gmra.mxu0 %v1017
  %v1216 = vpop.f32.mrf.mxu0
  %v1217 = vadd.f32 %v1069, %v1216
  %v1218 = vpop.f32.mrf.mxu0
  %v1219 = vadd.f32 %v1069, %v1218
  %1220 = vmatprep.mubr.f32.mxu0 0.0
  %1221 = vmatmul.mubr.f32.gmra.mxu0 %v1018
  %v1222 = vpop.f32.mrf.mxu0
  %v1223 = vadd.f32 %v1074, %v1222
  %v1224 = vpop.f32.mrf.mxu0
  %v1225 = vadd.f32 %v1074, %v1224
  %1226 = vmatprep.mubr.f32.mxu0 0.0
  %1227 = vmatmul.mubr.f32.gmra.mxu0 %v1019
  %v1228 = vpop.f32.mrf.mxu0
  %v1229 = vadd.f32 %v1079, %v1228
  %v1230 = vpop.f32.mrf.mxu0
  %v1231 = vadd.f32 %v1079, %v1230
  %1232 = vmatprep.mubr.f32.mxu0 0.0
  %1233 = vmatmul.mubr.f32.gmra.mxu0 %v1020
  %v1234 = vpop.f32.mrf.mxu0
  %v1235 = vadd.f32 %v1084, %v1234
  %v1236 = vpop.f32.mrf.mxu0
  %v1237 = vadd.f32 %v1084, %v1236
  %1238 = vmatprep.mubr.f32.mxu0 0.0
  %1239 = vmatmul.mubr.f32.gmra.mxu0 %v1021
  %v1240 = vpop.f32.mrf.mxu0
  %v1241 = vadd.f32 %v1089, %v1240
  %v1242 = vpop.f32.mrf.mxu0
  %v1243 = vadd.f32 %v1089, %v1242
  %1244 = vmatprep.mubr.f32.mxu0 0.0
  %1245 = vmatmul.mubr.f32.gmra.mxu0 %v1022
  %v1246 = vpop.f32.mrf.mxu0
  %v1247 = vadd.f32 %v1094, %v1246
  %v1248 = vpop.f32.mrf.mxu0
  %v1249 = vadd.f32 %v1094, %v1248
  %1250 = vmatprep.mubr.f32.mxu0 0.0
  %1251 = vmatmul.mubr.f32.gmra.mxu0 %v1023
  %v1252 = vpop.f32.mrf.mxu0
  %v1253 = vadd.f32 %v1099, %v1252
  %v1254 = vpop.f32.mrf.mxu0
  %v1255 = vadd.f32 %v1099, %v1254
  %1256 = vmatprep.mubr.f32.mxu0 0.0
  %1257 = vmatmul.mubr.f32.gmra.mxu0 %v1024
  %v1258 = vpop.f32.mrf.mxu0
  %v1259 = vadd.f32 %v1104, %v1258
  %v1260 = vpop.f32.mrf.mxu0
  %v1261 = vadd.f32 %v1104, %v1260
  %1262 = vmatprep.mubr.f32.mxu0 0.0
  %1263 = vmatmul.mubr.f32.gmra.mxu0 %v1025
  %v1264 = vpop.f32.mrf.mxu0
  %v1265 = vadd.f32 %v1109, %v1264
  %v1266 = vpop.f32.mrf.mxu0
  %v1267 = vadd.f32 %v1109, %v1266
  %1268 = vmatprep.mubr.f32.mxu0 0.0
  %1269 = vmatmul.mubr.f32.gmra.mxu0 %v1026
  %v1270 = vpop.f32.mrf.mxu0
  %v1271 = vadd.f32 %v1114, %v1270
  %v1272 = vpop.f32.mrf.mxu0
  %v1273 = vadd.f32 %v1114, %v1272
  %1274 = vmatprep.mubr.f32.mxu0 0.0
  %1275 = vmatmul.mubr.f32.gmra.mxu0 %v1027
  %v1276 = vpop.f32.mrf.mxu0
  %v1277 = vadd.f32 %v1119, %v1276
  %v1278 = vpop.f32.mrf.mxu0
  %v1279 = vadd.f32 %v1119, %v1278
  %1280 = vmatprep.mubr.f32.mxu0 0.0
  %1281 = vmatmul.mubr.f32.gmra.mxu0 %v1028
  %v1282 = vpop.f32.mrf.mxu0
  %v1283 = vadd.f32 %v1124, %v1282
  %v1284 = vpop.f32.mrf.mxu0
  %v1285 = vadd.f32 %v1124, %v1284
  %1286 = vdwg.mxu0
  %1287 = vmatprep.subr.mxu0 0.0
  %1288 = vmatpush1.msra.mxu0 %v1011
  %1289 = vmatprep.subr.mxu0 0.0
  %1290 = vmatpush1.msra.mxu0 %v1008
  %1291 = vmatprep.subr.mxu0 0.0
  %1292 = vmatpush1.msra.mxu0 %v1005
  %1293 = vmatprep.subr.mxu0 0.0
  %1294 = vmatpush1.msra.mxu0 %v1002
  %1295 = vmatprep.subr.mxu0 0.0
  %1296 = vmatpush1.msra.mxu0 %v999
  %1297 = vmatprep.subr.mxu0 0.0
  %1298 = vmatpush1.msra.mxu0 %v996
  %1299 = vmatprep.subr.mxu0 0.0
  %1300 = vmatpush1.msra.mxu0 %v993
  %1301 = vmatprep.subr.mxu0 0.0
  %1302 = vmatpush1.msra.mxu0 %v990
  %1303 = vmatprep.subr.mxu0 0.0
  %1304 = vmatpush1.msra.mxu0 %v987
  %1305 = vmatprep.subr.mxu0 0.0
  %1306 = vmatpush1.msra.mxu0 %v984
  %1307 = vmatprep.subr.mxu0 0.0
  %1308 = vmatpush1.msra.mxu0 %v981
  %1309 = vmatprep.subr.mxu0 0.0
  %1310 = vmatpush1.msra.mxu0 %v978
  %1311 = vmatprep.subr.mxu0 0.0
  %1312 = vmatpush1.msra.mxu0 %v975
  %1313 = vmatprep.subr.mxu0 0.0
  %1314 = vmatpush1.msra.mxu0 %v972
  %1315 = vmatprep.subr.mxu0 0.0
  %1316 = vmatpush1.msra.mxu0 %v969
  %1317 = vmatprep.subr.mxu0 0.0
  %1318 = vmatpush1.msra.mxu0 %v966
  %1319 = vmatprep.subr.mxu0 0.0
  %1320 = vmatpush2.msra.mxu0 0.0
  %1321 = vmatprep.subr.mxu0 0.0
  %1322 = vmatpush2.msra.mxu0 0.0
  %1323 = vmatprep.subr.mxu0 0.0
  %1324 = vmatpush2.msra.mxu0 0.0
  %1325 = vmatprep.subr.mxu0 0.0
  %1326 = vmatpush2.msra.mxu0 0.0
  %1327 = vmatprep.subr.mxu0 0.0
  %1328 = vmatpush2.msra.mxu0 0.0
  %1329 = vmatprep.subr.mxu0 0.0
  %1330 = vmatpush2.msra.mxu0 0.0
  %1331 = vmatprep.subr.mxu0 0.0
  %1332 = vmatpush2.msra.mxu0 0.0
  %1333 = vmatprep.subr.mxu0 0.0
  %1334 = vmatpush2.msra.mxu0 0.0
  %1335 = vmatprep.subr.mxu0 0.0
  %1336 = vmatpush2.msra.mxu0 0.0
  %1337 = vmatprep.subr.mxu0 0.0
  %1338 = vmatpush2.msra.mxu0 0.0
  %1339 = vmatprep.subr.mxu0 0.0
  %1340 = vmatpush2.msra.mxu0 0.0
  %1341 = vmatprep.subr.mxu0 0.0
  %1342 = vmatpush2.msra.mxu0 0.0
  %1343 = vmatprep.subr.mxu0 0.0
  %1344 = vmatpush2.msra.mxu0 0.0
  %1345 = vmatprep.subr.mxu0 0.0
  %1346 = vmatpush2.msra.mxu0 0.0
  %1347 = vmatprep.subr.mxu0 0.0
  %1348 = vmatpush2.msra.mxu0 0.0
  %1349 = vmatprep.subr.mxu0 0.0
  %1350 = vmatpush2.msra.mxu0 0.0
  %1351 = vmatprep.mubr.f32.mxu0 0.0
  %1352 = vmatmul.mubr.f32.gmra.mxu0 %v1013
  %v1353 = vpop.f32.mrf.mxu0
  %v1354 = vadd.f32 %v1049, %v1353
  %v1355 = vpop.f32.mrf.mxu0
  %1356 = vmatprep.mubr.f32.mxu0 0.0
  %1357 = vmatmul.mubr.f32.gmra.mxu0 %v1014
  %v1358 = vpop.f32.mrf.mxu0
  %v1359 = vadd.f32 %v1054, %v1358
  %v1360 = vpop.f32.mrf.mxu0
  %1361 = vmatprep.mubr.f32.mxu0 0.0
  %1362 = vmatmul.mubr.f32.gmra.mxu0 %v1015
  %v1363 = vpop.f32.mrf.mxu0
  %v1364 = vadd.f32 %v1059, %v1363
  %v1365 = vpop.f32.mrf.mxu0
  %1366 = vmatprep.mubr.f32.mxu0 0.0
  %1367 = vmatmul.mubr.f32.gmra.mxu0 %v1016
  %v1368 = vpop.f32.mrf.mxu0
  %v1369 = vadd.f32 %v1064, %v1368
  %v1370 = vpop.f32.mrf.mxu0
  %1371 = vmatprep.mubr.f32.mxu0 0.0
  %1372 = vmatmul.mubr.f32.gmra.mxu0 %v1017
  %v1373 = vpop.f32.mrf.mxu0
  %v1374 = vadd.f32 %v1069, %v1373
  %v1375 = vpop.f32.mrf.mxu0
  %1376 = vmatprep.mubr.f32.mxu0 0.0
  %1377 = vmatmul.mubr.f32.gmra.mxu0 %v1018
  %v1378 = vpop.f32.mrf.mxu0
  %v1379 = vadd.f32 %v1074, %v1378
  %v1380 = vpop.f32.mrf.mxu0
  %1381 = vmatprep.mubr.f32.mxu0 0.0
  %1382 = vmatmul.mubr.f32.gmra.mxu0 %v1019
  %v1383 = vpop.f32.mrf.mxu0
  %v1384 = vadd.f32 %v1079, %v1383
  %v1385 = vpop.f32.mrf.mxu0
  %1386 = vmatprep.mubr.f32.mxu0 0.0
  %1387 = vmatmul.mubr.f32.gmra.mxu0 %v1020
  %v1388 = vpop.f32.mrf.mxu0
  %v1389 = vadd.f32 %v1084, %v1388
  %v1390 = vpop.f32.mrf.mxu0
  %1391 = vmatprep.mubr.f32.mxu0 0.0
  %1392 = vmatmul.mubr.f32.gmra.mxu0 %v1021
  %v1393 = vpop.f32.mrf.mxu0
  %v1394 = vadd.f32 %v1089, %v1393
  %v1395 = vpop.f32.mrf.mxu0
  %1396 = vmatprep.mubr.f32.mxu0 0.0
  %1397 = vmatmul.mubr.f32.gmra.mxu0 %v1022
  %v1398 = vpop.f32.mrf.mxu0
  %v1399 = vadd.f32 %v1094, %v1398
  %v1400 = vpop.f32.mrf.mxu0
  %1401 = vmatprep.mubr.f32.mxu0 0.0
  %1402 = vmatmul.mubr.f32.gmra.mxu0 %v1023
  %v1403 = vpop.f32.mrf.mxu0
  %v1404 = vadd.f32 %v1099, %v1403
  %v1405 = vpop.f32.mrf.mxu0
  %1406 = vmatprep.mubr.f32.mxu0 0.0
  %1407 = vmatmul.mubr.f32.gmra.mxu0 %v1024
  %v1408 = vpop.f32.mrf.mxu0
  %v1409 = vadd.f32 %v1104, %v1408
  %v1410 = vpop.f32.mrf.mxu0
  %1411 = vmatprep.mubr.f32.mxu0 0.0
  %1412 = vmatmul.mubr.f32.gmra.mxu0 %v1025
  %v1413 = vpop.f32.mrf.mxu0
  %v1414 = vadd.f32 %v1109, %v1413
  %v1415 = vpop.f32.mrf.mxu0
  %1416 = vmatprep.mubr.f32.mxu0 0.0
  %1417 = vmatmul.mubr.f32.gmra.mxu0 %v1026
  %v1418 = vpop.f32.mrf.mxu0
  %v1419 = vadd.f32 %v1114, %v1418
  %v1420 = vpop.f32.mrf.mxu0
  %1421 = vmatprep.mubr.f32.mxu0 0.0
  %1422 = vmatmul.mubr.f32.gmra.mxu0 %v1027
  %v1423 = vpop.f32.mrf.mxu0
  %v1424 = vadd.f32 %v1119, %v1423
  %v1425 = vpop.f32.mrf.mxu0
  %1426 = vmatprep.mubr.f32.mxu0 0.0
  %1427 = vmatmul.mubr.f32.gmra.mxu0 %v1028
  %v1428 = vpop.f32.mrf.mxu0
  %v1429 = vadd.f32 %v1124, %v1428
  %v1430 = vpop.f32.mrf.mxu0
  %1431 = vdwg.mxu0
  %v1432 = vmax.f32 %v1193, 0.0
  %v1433 = vmax.f32 %v1195, 0.0
  %v1434 = vmax.f32 %v1354, 0.0
  %v1435 = vmax.f32 %v1199, 0.0
  %v1436 = vmax.f32 %v1201, 0.0
  %v1437 = vmax.f32 %v1359, 0.0
  %v1438 = vmax.f32 %v1205, 0.0
  %v1439 = vmax.f32 %v1207, 0.0
  %v1440 = vmax.f32 %v1364, 0.0
  %v1441 = vmax.f32 %v1211, 0.0
  %v1442 = vmax.f32 %v1213, 0.0
  %v1443 = vmax.f32 %v1369, 0.0
  %v1444 = vmax.f32 %v1217, 0.0
  %v1445 = vmax.f32 %v1219, 0.0
  %v1446 = vmax.f32 %v1374, 0.0
  %v1447 = vmax.f32 %v1223, 0.0
  %v1448 = vmax.f32 %v1225, 0.0
  %v1449 = vmax.f32 %v1379, 0.0
  %v1450 = vmax.f32 %v1229, 0.0
  %v1451 = vmax.f32 %v1231, 0.0
  %v1452 = vmax.f32 %v1384, 0.0
  %v1453 = vmax.f32 %v1235, 0.0
  %v1454 = vmax.f32 %v1237, 0.0
  %v1455 = vmax.f32 %v1389, 0.0
  %v1456 = vmax.f32 %v1241, 0.0
  %v1457 = vmax.f32 %v1243, 0.0
  %v1458 = vmax.f32 %v1394, 0.0
  %v1459 = vmax.f32 %v1247, 0.0
  %v1460 = vmax.f32 %v1249, 0.0
  %v1461 = vmax.f32 %v1399, 0.0
  %v1462 = vmax.f32 %v1253, 0.0
  %v1463 = vmax.f32 %v1255, 0.0
  %v1464 = vmax.f32 %v1404, 0.0
  %v1465 = vmax.f32 %v1259, 0.0
  %v1466 = vmax.f32 %v1261, 0.0
  %v1467 = vmax.f32 %v1409, 0.0
  %v1468 = vmax.f32 %v1265, 0.0
  %v1469 = vmax.f32 %v1267, 0.0
  %v1470 = vmax.f32 %v1414, 0.0
  %v1471 = vmax.f32 %v1271, 0.0
  %v1472 = vmax.f32 %v1273, 0.0
  %v1473 = vmax.f32 %v1419, 0.0
  %v1474 = vmax.f32 %v1277, 0.0
  %v1475 = vmax.f32 %v1279, 0.0
  %v1476 = vmax.f32 %v1424, 0.0
  %v1477 = vmax.f32 %v1283, 0.0
  %v1478 = vmax.f32 %v1285, 0.0
  %v1479 = vmax.f32 %v1429, 0.0
  %s1480 = scalar_lea.vmem %s3, 256
  %v1481 = vld [vmem:[%s1480] sm:$0xff]
  %v1482 = vld [vmem:[%s1480 + $0x8] sm:$0xff]
  %v1483 = vld [vmem:[%s1480 + $0x10] sm:$0xff]
  %v1484 = vld [vmem:[%s1480 + $0x18] sm:$0xff]
  %v1485 = vld [vmem:[%s1480 + $0x20] sm:$0xff]
  %v1486 = vld [vmem:[%s1480 + $0x28] sm:$0xff]
  %v1487 = vld [vmem:[%s1480 + $0x30] sm:$0xff]
  %v1488 = vld [vmem:[%s1480 + $0x38] sm:$0xff]
  %v1489 = vld [vmem:[%s1480 + $0x40] sm:$0xff]
  %v1490 = vld [vmem:[%s1480 + $0x48] sm:$0xff]
  %v1491 = vld [vmem:[%s1480 + $0x50] sm:$0xff]
  %v1492 = vld [vmem:[%s1480 + $0x58] sm:$0xff]
  %v1493 = vld [vmem:[%s1480 + $0x60] sm:$0xff]
  %v1494 = vld [vmem:[%s1480 + $0x68] sm:$0xff]
  %v1495 = vld [vmem:[%s1480 + $0x70] sm:$0xff]
  %v1496 = vld [vmem:[%s1480 + $0x78] sm:$0xff]
  %s1497 = scalar_lea.vmem %s4, 256
  %v1498 = vld [vmem:[%s1497] sm:$0xff]
  %v1499 = vld [vmem:[%s1497 + $0x8] sm:$0xff]
  %v1500 = vld [vmem:[%s1497 + $0x10] sm:$0xff]
  %v1501 = vld [vmem:[%s1497 + $0x18] sm:$0xff]
  %v1502 = vld [vmem:[%s1497 + $0x20] sm:$0xff]
  %v1503 = vld [vmem:[%s1497 + $0x28] sm:$0xff]
  %v1504 = vld [vmem:[%s1497 + $0x30] sm:$0xff]
  %v1505 = vld [vmem:[%s1497 + $0x38] sm:$0xff]
  %v1506 = vld [vmem:[%s1497 + $0x40] sm:$0xff]
  %v1507 = vld [vmem:[%s1497 + $0x48] sm:$0xff]
  %v1508 = vld [vmem:[%s1497 + $0x50] sm:$0xff]
  %v1509 = vld [vmem:[%s1497 + $0x58] sm:$0xff]
  %v1510 = vld [vmem:[%s1497 + $0x60] sm:$0xff]
  %v1511 = vld [vmem:[%s1497 + $0x68] sm:$0xff]
  %v1512 = vld [vmem:[%s1497 + $0x70] sm:$0xff]
  %v1513 = vld [vmem:[%s1497 + $0x78] sm:$0xff]
  %1515 = vset.pattern.permute.xlu0 0
  %1516 = vperm.xlu0 %1515, %v1498
  %v1517 = vpop.permute.xlu0 %1516
  %1520 = vset.pattern.permute.xlu0 0
  %1521 = vperm.xlu0 %1520, %v1499
  %v1522 = vpop.permute.xlu0 %1521
  %1525 = vset.pattern.permute.xlu0 0
  %1526 = vperm.xlu0 %1525, %v1500
  %v1527 = vpop.permute.xlu0 %1526
  %1530 = vset.pattern.permute.xlu0 0
  %1531 = vperm.xlu0 %1530, %v1501
  %v1532 = vpop.permute.xlu0 %1531
  %1535 = vset.pattern.permute.xlu0 0
  %1536 = vperm.xlu0 %1535, %v1502
  %v1537 = vpop.permute.xlu0 %1536
  %1540 = vset.pattern.permute.xlu0 0
  %1541 = vperm.xlu0 %1540, %v1503
  %v1542 = vpop.permute.xlu0 %1541
  %1545 = vset.pattern.permute.xlu0 0
  %1546 = vperm.xlu0 %1545, %v1504
  %v1547 = vpop.permute.xlu0 %1546
  %1550 = vset.pattern.permute.xlu0 0
  %1551 = vperm.xlu0 %1550, %v1505
  %v1552 = vpop.permute.xlu0 %1551
  %1555 = vset.pattern.permute.xlu0 0
  %1556 = vperm.xlu0 %1555, %v1506
  %v1557 = vpop.permute.xlu0 %1556
  %1560 = vset.pattern.permute.xlu0 0
  %1561 = vperm.xlu0 %1560, %v1507
  %v1562 = vpop.permute.xlu0 %1561
  %1565 = vset.pattern.permute.xlu0 0
  %1566 = vperm.xlu0 %1565, %v1508
  %v1567 = vpop.permute.xlu0 %1566
  %1570 = vset.pattern.permute.xlu0 0
  %1571 = vperm.xlu0 %1570, %v1509
  %v1572 = vpop.permute.xlu0 %1571
  %1575 = vset.pattern.permute.xlu0 0
  %1576 = vperm.xlu0 %1575, %v1510
  %v1577 = vpop.permute.xlu0 %1576
  %1580 = vset.pattern.permute.xlu0 0
  %1581 = vperm.xlu0 %1580, %v1511
  %v1582 = vpop.permute.xlu0 %1581
  %1585 = vset.pattern.permute.xlu0 0
  %1586 = vperm.xlu0 %1585, %v1512
  %v1587 = vpop.permute.xlu0 %1586
  %1590 = vset.pattern.permute.xlu0 0
  %1591 = vperm.xlu0 %1590, %v1513
  %v1592 = vpop.permute.xlu0 %1591
  %1594 = vmatprep.subr.mxu0 %v1478
  %1595 = vmatpush1.msra.mxu0 %v1477
  %1596 = vmatprep.subr.mxu0 %v1475
  %1597 = vmatpush1.msra.mxu0 %v1474
  %1598 = vmatprep.subr.mxu0 %v1472
  %1599 = vmatpush1.msra.mxu0 %v1471
  %1600 = vmatprep.subr.mxu0 %v1469
  %1601 = vmatpush1.msra.mxu0 %v1468
  %1602 = vmatprep.subr.mxu0 %v1466
  %1603 = vmatpush1.msra.mxu0 %v1465
  %1604 = vmatprep.subr.mxu0 %v1463
  %1605 = vmatpush1.msra.mxu0 %v1462
  %1606 = vmatprep.subr.mxu0 %v1460
  %1607 = vmatpush1.msra.mxu0 %v1459
  %1608 = vmatprep.subr.mxu0 %v1457
  %1609 = vmatpush1.msra.mxu0 %v1456
  %1610 = vmatprep.subr.mxu0 %v1454
  %1611 = vmatpush1.msra.mxu0 %v1453
  %1612 = vmatprep.subr.mxu0 %v1451
  %1613 = vmatpush1.msra.mxu0 %v1450
  %1614 = vmatprep.subr.mxu0 %v1448
  %1615 = vmatpush1.msra.mxu0 %v1447
  %1616 = vmatprep.subr.mxu0 %v1445
  %1617 = vmatpush1.msra.mxu0 %v1444
  %1618 = vmatprep.subr.mxu0 %v1442
  %1619 = vmatpush1.msra.mxu0 %v1441
  %1620 = vmatprep.subr.mxu0 %v1439
  %1621 = vmatpush1.msra.mxu0 %v1438
  %1622 = vmatprep.subr.mxu0 %v1436
  %1623 = vmatpush1.msra.mxu0 %v1435
  %1624 = vmatprep.subr.mxu0 %v1433
  %1625 = vmatpush1.msra.mxu0 %v1432
  %1626 = vmatprep.subr.mxu0 0.0
  %1627 = vmatpush2.msra.mxu0 0.0
  %1628 = vmatprep.subr.mxu0 0.0
  %1629 = vmatpush2.msra.mxu0 0.0
  %1630 = vmatprep.subr.mxu0 0.0
  %1631 = vmatpush2.msra.mxu0 0.0
  %1632 = vmatprep.subr.mxu0 0.0
  %1633 = vmatpush2.msra.mxu0 0.0
  %1634 = vmatprep.subr.mxu0 0.0
  %1635 = vmatpush2.msra.mxu0 0.0
  %1636 = vmatprep.subr.mxu0 0.0
  %1637 = vmatpush2.msra.mxu0 0.0
  %1638 = vmatprep.subr.mxu0 0.0
  %1639 = vmatpush2.msra.mxu0 0.0
  %1640 = vmatprep.subr.mxu0 0.0
  %1641 = vmatpush2.msra.mxu0 0.0
  %1642 = vmatprep.subr.mxu0 0.0
  %1643 = vmatpush2.msra.mxu0 0.0
  %1644 = vmatprep.subr.mxu0 0.0
  %1645 = vmatpush2.msra.mxu0 0.0
  %1646 = vmatprep.subr.mxu0 0.0
  %1647 = vmatpush2.msra.mxu0 0.0
  %1648 = vmatprep.subr.mxu0 0.0
  %1649 = vmatpush2.msra.mxu0 0.0
  %1650 = vmatprep.subr.mxu0 0.0
  %1651 = vmatpush2.msra.mxu0 0.0
  %1652 = vmatprep.subr.mxu0 0.0
  %1653 = vmatpush2.msra.mxu0 0.0
  %1654 = vmatprep.subr.mxu0 0.0
  %1655 = vmatpush2.msra.mxu0 0.0
  %1656 = vmatprep.subr.mxu0 0.0
  %1657 = vmatpush2.msra.mxu0 0.0
  %1658 = vmatprep.mubr.f32.mxu0 0.0
  %1659 = vmatmul.mubr.f32.gmra.mxu0 %v1481
  %v1660 = vpop.f32.mrf.mxu0
  %v1661 = vadd.f32 %v1517, %v1660
  %v1662 = vpop.f32.mrf.mxu0
  %v1663 = vadd.f32 %v1517, %v1662
  %1664 = vmatprep.mubr.f32.mxu0 0.0
  %1665 = vmatmul.mubr.f32.gmra.mxu0 %v1482
  %v1666 = vpop.f32.mrf.mxu0
  %v1667 = vadd.f32 %v1522, %v1666
  %v1668 = vpop.f32.mrf.mxu0
  %v1669 = vadd.f32 %v1522, %v1668
  %1670 = vmatprep.mubr.f32.mxu0 0.0
  %1671 = vmatmul.mubr.f32.gmra.mxu0 %v1483
  %v1672 = vpop.f32.mrf.mxu0
  %v1673 = vadd.f32 %v1527, %v1672
  %v1674 = vpop.f32.mrf.mxu0
  %v1675 = vadd.f32 %v1527, %v1674
  %1676 = vmatprep.mubr.f32.mxu0 0.0
  %1677 = vmatmul.mubr.f32.gmra.mxu0 %v1484
  %v1678 = vpop.f32.mrf.mxu0
  %v1679 = vadd.f32 %v1532, %v1678
  %v1680 = vpop.f32.mrf.mxu0
  %v1681 = vadd.f32 %v1532, %v1680
  %1682 = vmatprep.mubr.f32.mxu0 0.0
  %1683 = vmatmul.mubr.f32.gmra.mxu0 %v1485
  %v1684 = vpop.f32.mrf.mxu0
  %v1685 = vadd.f32 %v1537, %v1684
  %v1686 = vpop.f32.mrf.mxu0
  %v1687 = vadd.f32 %v1537, %v1686
  %1688 = vmatprep.mubr.f32.mxu0 0.0
  %1689 = vmatmul.mubr.f32.gmra.mxu0 %v1486
  %v1690 = vpop.f32.mrf.mxu0
  %v1691 = vadd.f32 %v1542, %v1690
  %v1692 = vpop.f32.mrf.mxu0
  %v1693 = vadd.f32 %v1542, %v1692
  %1694 = vmatprep.mubr.f32.mxu0 0.0
  %1695 = vmatmul.mubr.f32.gmra.mxu0 %v1487
  %v1696 = vpop.f32.mrf.mxu0
  %v1697 = vadd.f32 %v1547, %v1696
  %v1698 = vpop.f32.mrf.mxu0
  %v1699 = vadd.f32 %v1547, %v1698
  %1700 = vmatprep.mubr.f32.mxu0 0.0
  %1701 = vmatmul.mubr.f32.gmra.mxu0 %v1488
  %v1702 = vpop.f32.mrf.mxu0
  %v1703 = vadd.f32 %v1552, %v1702
  %v1704 = vpop.f32.mrf.mxu0
  %v1705 = vadd.f32 %v1552, %v1704
  %1706 = vmatprep.mubr.f32.mxu0 0.0
  %1707 = vmatmul.mubr.f32.gmra.mxu0 %v1489
  %v1708 = vpop.f32.mrf.mxu0
  %v1709 = vadd.f32 %v1557, %v1708
  %v1710 = vpop.f32.mrf.mxu0
  %v1711 = vadd.f32 %v1557, %v1710
  %1712 = vmatprep.mubr.f32.mxu0 0.0
  %1713 = vmatmul.mubr.f32.gmra.mxu0 %v1490
  %v1714 = vpop.f32.mrf.mxu0
  %v1715 = vadd.f32 %v1562, %v1714
  %v1716 = vpop.f32.mrf.mxu0
  %v1717 = vadd.f32 %v1562, %v1716
  %1718 = vmatprep.mubr.f32.mxu0 0.0
  %1719 = vmatmul.mubr.f32.gmra.mxu0 %v1491
  %v1720 = vpop.f32.mrf.mxu0
  %v1721 = vadd.f32 %v1567, %v1720
  %v1722 = vpop.f32.mrf.mxu0
  %v1723 = vadd.f32 %v1567, %v1722
  %1724 = vmatprep.mubr.f32.mxu0 0.0
  %1725 = vmatmul.mubr.f32.gmra.mxu0 %v1492
  %v1726 = vpop.f32.mrf.mxu0
  %v1727 = vadd.f32 %v1572, %v1726
  %v1728 = vpop.f32.mrf.mxu0
  %v1729 = vadd.f32 %v1572, %v1728
  %1730 = vmatprep.mubr.f32.mxu0 0.0
  %1731 = vmatmul.mubr.f32.gmra.mxu0 %v1493
  %v1732 = vpop.f32.mrf.mxu0
  %v1733 = vadd.f32 %v1577, %v1732
  %v1734 = vpop.f32.mrf.mxu0
  %v1735 = vadd.f32 %v1577, %v1734
  %1736 = vmatprep.mubr.f32.mxu0 0.0
  %1737 = vmatmul.mubr.f32.gmra.mxu0 %v1494
  %v1738 = vpop.f32.mrf.mxu0
  %v1739 = vadd.f32 %v1582, %v1738
  %v1740 = vpop.f32.mrf.mxu0
  %v1741 = vadd.f32 %v1582, %v1740
  %1742 = vmatprep.mubr.f32.mxu0 0.0
  %1743 = vmatmul.mubr.f32.gmra.mxu0 %v1495
  %v1744 = vpop.f32.mrf.mxu0
  %v1745 = vadd.f32 %v1587, %v1744
  %v1746 = vpop.f32.mrf.mxu0
  %v1747 = vadd.f32 %v1587, %v1746
  %1748 = vmatprep.mubr.f32.mxu0 0.0
  %1749 = vmatmul.mubr.f32.gmra.mxu0 %v1496
  %v1750 = vpop.f32.mrf.mxu0
  %v1751 = vadd.f32 %v1592, %v1750
  %v1752 = vpop.f32.mrf.mxu0
  %v1753 = vadd.f32 %v1592, %v1752
  %1754 = vdwg.mxu0
  %1755 = vmatprep.subr.mxu0 0.0
  %1756 = vmatpush1.msra.mxu0 %v1479
  %1757 = vmatprep.subr.mxu0 0.0
  %1758 = vmatpush1.msra.mxu0 %v1476
  %1759 = vmatprep.subr.mxu0 0.0
  %1760 = vmatpush1.msra.mxu0 %v1473
  %1761 = vmatprep.subr.mxu0 0.0
  %1762 = vmatpush1.msra.mxu0 %v1470
  %1763 = vmatprep.subr.mxu0 0.0
  %1764 = vmatpush1.msra.mxu0 %v1467
  %1765 = vmatprep.subr.mxu0 0.0
  %1766 = vmatpush1.msra.mxu0 %v1464
  %1767 = vmatprep.subr.mxu0 0.0
  %1768 = vmatpush1.msra.mxu0 %v1461
  %1769 = vmatprep.subr.mxu0 0.0
  %1770 = vmatpush1.msra.mxu0 %v1458
  %1771 = vmatprep.subr.mxu0 0.0
  %1772 = vmatpush1.msra.mxu0 %v1455
  %1773 = vmatprep.subr.mxu0 0.0
  %1774 = vmatpush1.msra.mxu0 %v1452
  %1775 = vmatprep.subr.mxu0 0.0
  %1776 = vmatpush1.msra.mxu0 %v1449
  %1777 = vmatprep.subr.mxu0 0.0
  %1778 = vmatpush1.msra.mxu0 %v1446
  %1779 = vmatprep.subr.mxu0 0.0
  %1780 = vmatpush1.msra.mxu0 %v1443
  %1781 = vmatprep.subr.mxu0 0.0
  %1782 = vmatpush1.msra.mxu0 %v1440
  %1783 = vmatprep.subr.mxu0 0.0
  %1784 = vmatpush1.msra.mxu0 %v1437
  %1785 = vmatprep.subr.mxu0 0.0
  %1786 = vmatpush1.msra.mxu0 %v1434
  %1787 = vmatprep.subr.mxu0 0.0
  %1788 = vmatpush2.msra.mxu0 0.0
  %1789 = vmatprep.subr.mxu0 0.0
  %1790 = vmatpush2.msra.mxu0 0.0
  %1791 = vmatprep.subr.mxu0 0.0
  %1792 = vmatpush2.msra.mxu0 0.0
  %1793 = vmatprep.subr.mxu0 0.0
  %1794 = vmatpush2.msra.mxu0 0.0
  %1795 = vmatprep.subr.mxu0 0.0
  %1796 = vmatpush2.msra.mxu0 0.0
  %1797 = vmatprep.subr.mxu0 0.0
  %1798 = vmatpush2.msra.mxu0 0.0
  %1799 = vmatprep.subr.mxu0 0.0
  %1800 = vmatpush2.msra.mxu0 0.0
  %1801 = vmatprep.subr.mxu0 0.0
  %1802 = vmatpush2.msra.mxu0 0.0
  %1803 = vmatprep.subr.mxu0 0.0
  %1804 = vmatpush2.msra.mxu0 0.0
  %1805 = vmatprep.subr.mxu0 0.0
  %1806 = vmatpush2.msra.mxu0 0.0
  %1807 = vmatprep.subr.mxu0 0.0
  %1808 = vmatpush2.msra.mxu0 0.0
  %1809 = vmatprep.subr.mxu0 0.0
  %1810 = vmatpush2.msra.mxu0 0.0
  %1811 = vmatprep.subr.mxu0 0.0
  %1812 = vmatpush2.msra.mxu0 0.0
  %1813 = vmatprep.subr.mxu0 0.0
  %1814 = vmatpush2.msra.mxu0 0.0
  %1815 = vmatprep.subr.mxu0 0.0
  %1816 = vmatpush2.msra.mxu0 0.0
  %1817 = vmatprep.subr.mxu0 0.0
  %1818 = vmatpush2.msra.mxu0 0.0
  %1819 = vmatprep.mubr.f32.mxu0 0.0
  %1820 = vmatmul.mubr.f32.gmra.mxu0 %v1481
  %v1821 = vpop.f32.mrf.mxu0
  %v1822 = vadd.f32 %v1517, %v1821
  %v1823 = vpop.f32.mrf.mxu0
  %1824 = vmatprep.mubr.f32.mxu0 0.0
  %1825 = vmatmul.mubr.f32.gmra.mxu0 %v1482
  %v1826 = vpop.f32.mrf.mxu0
  %v1827 = vadd.f32 %v1522, %v1826
  %v1828 = vpop.f32.mrf.mxu0
  %1829 = vmatprep.mubr.f32.mxu0 0.0
  %1830 = vmatmul.mubr.f32.gmra.mxu0 %v1483
  %v1831 = vpop.f32.mrf.mxu0
  %v1832 = vadd.f32 %v1527, %v1831
  %v1833 = vpop.f32.mrf.mxu0
  %1834 = vmatprep.mubr.f32.mxu0 0.0
  %1835 = vmatmul.mubr.f32.gmra.mxu0 %v1484
  %v1836 = vpop.f32.mrf.mxu0
  %v1837 = vadd.f32 %v1532, %v1836
  %v1838 = vpop.f32.mrf.mxu0
  %1839 = vmatprep.mubr.f32.mxu0 0.0
  %1840 = vmatmul.mubr.f32.gmra.mxu0 %v1485
  %v1841 = vpop.f32.mrf.mxu0
  %v1842 = vadd.f32 %v1537, %v1841
  %v1843 = vpop.f32.mrf.mxu0
  %1844 = vmatprep.mubr.f32.mxu0 0.0
  %1845 = vmatmul.mubr.f32.gmra.mxu0 %v1486
  %v1846 = vpop.f32.mrf.mxu0
  %v1847 = vadd.f32 %v1542, %v1846
  %v1848 = vpop.f32.mrf.mxu0
  %1849 = vmatprep.mubr.f32.mxu0 0.0
  %1850 = vmatmul.mubr.f32.gmra.mxu0 %v1487
  %v1851 = vpop.f32.mrf.mxu0
  %v1852 = vadd.f32 %v1547, %v1851
  %v1853 = vpop.f32.mrf.mxu0
  %1854 = vmatprep.mubr.f32.mxu0 0.0
  %1855 = vmatmul.mubr.f32.gmra.mxu0 %v1488
  %v1856 = vpop.f32.mrf.mxu0
  %v1857 = vadd.f32 %v1552, %v1856
  %v1858 = vpop.f32.mrf.mxu0
  %1859 = vmatprep.mubr.f32.mxu0 0.0
  %1860 = vmatmul.mubr.f32.gmra.mxu0 %v1489
  %v1861 = vpop.f32.mrf.mxu0
  %v1862 = vadd.f32 %v1557, %v1861
  %v1863 = vpop.f32.mrf.mxu0
  %1864 = vmatprep.mubr.f32.mxu0 0.0
  %1865 = vmatmul.mubr.f32.gmra.mxu0 %v1490
  %v1866 = vpop.f32.mrf.mxu0
  %v1867 = vadd.f32 %v1562, %v1866
  %v1868 = vpop.f32.mrf.mxu0
  %1869 = vmatprep.mubr.f32.mxu0 0.0
  %1870 = vmatmul.mubr.f32.gmra.mxu0 %v1491
  %v1871 = vpop.f32.mrf.mxu0
  %v1872 = vadd.f32 %v1567, %v1871
  %v1873 = vpop.f32.mrf.mxu0
  %1874 = vmatprep.mubr.f32.mxu0 0.0
  %1875 = vmatmul.mubr.f32.gmra.mxu0 %v1492
  %v1876 = vpop.f32.mrf.mxu0
  %v1877 = vadd.f32 %v1572, %v1876
  %v1878 = vpop.f32.mrf.mxu0
  %1879 = vmatprep.mubr.f32.mxu0 0.0
  %1880 = vmatmul.mubr.f32.gmra.mxu0 %v1493
  %v1881 = vpop.f32.mrf.mxu0
  %v1882 = vadd.f32 %v1577, %v1881
  %v1883 = vpop.f32.mrf.mxu0
  %1884 = vmatprep.mubr.f32.mxu0 0.0
  %1885 = vmatmul.mubr.f32.gmra.mxu0 %v1494
  %v1886 = vpop.f32.mrf.mxu0
  %v1887 = vadd.f32 %v1582, %v1886
  %v1888 = vpop.f32.mrf.mxu0
  %1889 = vmatprep.mubr.f32.mxu0 0.0
  %1890 = vmatmul.mubr.f32.gmra.mxu0 %v1495
  %v1891 = vpop.f32.mrf.mxu0
  %v1892 = vadd.f32 %v1587, %v1891
  %v1893 = vpop.f32.mrf.mxu0
  %1894 = vmatprep.mubr.f32.mxu0 0.0
  %1895 = vmatmul.mubr.f32.gmra.mxu0 %v1496
  %v1896 = vpop.f32.mrf.mxu0
  %v1897 = vadd.f32 %v1592, %v1896
  %v1898 = vpop.f32.mrf.mxu0
  %1899 = vdwg.mxu0
  %v1900 = vmax.f32 %v1661, 0.0
  %v1901 = vmax.f32 %v1663, 0.0
  %v1902 = vmax.f32 %v1822, 0.0
  %v1903 = vmax.f32 %v1667, 0.0
  %v1904 = vmax.f32 %v1669, 0.0
  %v1905 = vmax.f32 %v1827, 0.0
  %v1906 = vmax.f32 %v1673, 0.0
  %v1907 = vmax.f32 %v1675, 0.0
  %v1908 = vmax.f32 %v1832, 0.0
  %v1909 = vmax.f32 %v1679, 0.0
  %v1910 = vmax.f32 %v1681, 0.0
  %v1911 = vmax.f32 %v1837, 0.0
  %v1912 = vmax.f32 %v1685, 0.0
  %v1913 = vmax.f32 %v1687, 0.0
  %v1914 = vmax.f32 %v1842, 0.0
  %v1915 = vmax.f32 %v1691, 0.0
  %v1916 = vmax.f32 %v1693, 0.0
  %v1917 = vmax.f32 %v1847, 0.0
  %v1918 = vmax.f32 %v1697, 0.0
  %v1919 = vmax.f32 %v1699, 0.0
  %v1920 = vmax.f32 %v1852, 0.0
  %v1921 = vmax.f32 %v1703, 0.0
  %v1922 = vmax.f32 %v1705, 0.0
  %v1923 = vmax.f32 %v1857, 0.0
  %v1924 = vmax.f32 %v1709, 0.0
  %v1925 = vmax.f32 %v1711, 0.0
  %v1926 = vmax.f32 %v1862, 0.0
  %v1927 = vmax.f32 %v1715, 0.0
  %v1928 = vmax.f32 %v1717, 0.0
  %v1929 = vmax.f32 %v1867, 0.0
  %v1930 = vmax.f32 %v1721, 0.0
  %v1931 = vmax.f32 %v1723, 0.0
  %v1932 = vmax.f32 %v1872, 0.0
  %v1933 = vmax.f32 %v1727, 0.0
  %v1934 = vmax.f32 %v1729, 0.0
  %v1935 = vmax.f32 %v1877, 0.0
  %v1936 = vmax.f32 %v1733, 0.0
  %v1937 = vmax.f32 %v1735, 0.0
  %v1938 = vmax.f32 %v1882, 0.0
  %v1939 = vmax.f32 %v1739, 0.0
  %v1940 = vmax.f32 %v1741, 0.0
  %v1941 = vmax.f32 %v1887, 0.0
  %v1942 = vmax.f32 %v1745, 0.0
  %v1943 = vmax.f32 %v1747, 0.0
  %v1944 = vmax.f32 %v1892, 0.0
  %v1945 = vmax.f32 %v1751, 0.0
  %v1946 = vmax.f32 %v1753, 0.0
  %v1947 = vmax.f32 %v1897, 0.0
  %s1948 = scalar_lea.vmem %s3, 384
  %v1949 = vld [vmem:[%s1948] sm:$0xff]
  %v1950 = vld [vmem:[%s1948 + $0x8] sm:$0xff]
  %v1951 = vld [vmem:[%s1948 + $0x10] sm:$0xff]
  %v1952 = vld [vmem:[%s1948 + $0x18] sm:$0xff]
  %v1953 = vld [vmem:[%s1948 + $0x20] sm:$0xff]
  %v1954 = vld [vmem:[%s1948 + $0x28] sm:$0xff]
  %v1955 = vld [vmem:[%s1948 + $0x30] sm:$0xff]
  %v1956 = vld [vmem:[%s1948 + $0x38] sm:$0xff]
  %v1957 = vld [vmem:[%s1948 + $0x40] sm:$0xff]
  %v1958 = vld [vmem:[%s1948 + $0x48] sm:$0xff]
  %v1959 = vld [vmem:[%s1948 + $0x50] sm:$0xff]
  %v1960 = vld [vmem:[%s1948 + $0x58] sm:$0xff]
  %v1961 = vld [vmem:[%s1948 + $0x60] sm:$0xff]
  %v1962 = vld [vmem:[%s1948 + $0x68] sm:$0xff]
  %v1963 = vld [vmem:[%s1948 + $0x70] sm:$0xff]
  %v1964 = vld [vmem:[%s1948 + $0x78] sm:$0xff]
  %s1965 = scalar_lea.vmem %s4, 384
  %v1966 = vld [vmem:[%s1965] sm:$0xff]
  %v1967 = vld [vmem:[%s1965 + $0x8] sm:$0xff]
  %v1968 = vld [vmem:[%s1965 + $0x10] sm:$0xff]
  %v1969 = vld [vmem:[%s1965 + $0x18] sm:$0xff]
  %v1970 = vld [vmem:[%s1965 + $0x20] sm:$0xff]
  %v1971 = vld [vmem:[%s1965 + $0x28] sm:$0xff]
  %v1972 = vld [vmem:[%s1965 + $0x30] sm:$0xff]
  %v1973 = vld [vmem:[%s1965 + $0x38] sm:$0xff]
  %v1974 = vld [vmem:[%s1965 + $0x40] sm:$0xff]
  %v1975 = vld [vmem:[%s1965 + $0x48] sm:$0xff]
  %v1976 = vld [vmem:[%s1965 + $0x50] sm:$0xff]
  %v1977 = vld [vmem:[%s1965 + $0x58] sm:$0xff]
  %v1978 = vld [vmem:[%s1965 + $0x60] sm:$0xff]
  %v1979 = vld [vmem:[%s1965 + $0x68] sm:$0xff]
  %v1980 = vld [vmem:[%s1965 + $0x70] sm:$0xff]
  %v1981 = vld [vmem:[%s1965 + $0x78] sm:$0xff]
  %1983 = vset.pattern.permute.xlu0 0
  %1984 = vperm.xlu0 %1983, %v1966
  %v1985 = vpop.permute.xlu0 %1984
  %1988 = vset.pattern.permute.xlu0 0
  %1989 = vperm.xlu0 %1988, %v1967
  %v1990 = vpop.permute.xlu0 %1989
  %1993 = vset.pattern.permute.xlu0 0
  %1994 = vperm.xlu0 %1993, %v1968
  %v1995 = vpop.permute.xlu0 %1994
  %1998 = vset.pattern.permute.xlu0 0
  %1999 = vperm.xlu0 %1998, %v1969
  %v2000 = vpop.permute.xlu0 %1999
  %2003 = vset.pattern.permute.xlu0 0
  %2004 = vperm.xlu0 %2003, %v1970
  %v2005 = vpop.permute.xlu0 %2004
  %2008 = vset.pattern.permute.xlu0 0
  %2009 = vperm.xlu0 %2008, %v1971
  %v2010 = vpop.permute.xlu0 %2009
  %2013 = vset.pattern.permute.xlu0 0
  %2014 = vperm.xlu0 %2013, %v1972
  %v2015 = vpop.permute.xlu0 %2014
  %2018 = vset.pattern.permute.xlu0 0
  %2019 = vperm.xlu0 %2018, %v1973
  %v2020 = vpop.permute.xlu0 %2019
  %2023 = vset.pattern.permute.xlu0 0
  %2024 = vperm.xlu0 %2023, %v1974
  %v2025 = vpop.permute.xlu0 %2024
  %2028 = vset.pattern.permute.xlu0 0
  %2029 = vperm.xlu0 %2028, %v1975
  %v2030 = vpop.permute.xlu0 %2029
  %2033 = vset.pattern.permute.xlu0 0
  %2034 = vperm.xlu0 %2033, %v1976
  %v2035 = vpop.permute.xlu0 %2034
  %2038 = vset.pattern.permute.xlu0 0
  %2039 = vperm.xlu0 %2038, %v1977
  %v2040 = vpop.permute.xlu0 %2039
  %2043 = vset.pattern.permute.xlu0 0
  %2044 = vperm.xlu0 %2043, %v1978
  %v2045 = vpop.permute.xlu0 %2044
  %2048 = vset.pattern.permute.xlu0 0
  %2049 = vperm.xlu0 %2048, %v1979
  %v2050 = vpop.permute.xlu0 %2049
  %2053 = vset.pattern.permute.xlu0 0
  %2054 = vperm.xlu0 %2053, %v1980
  %v2055 = vpop.permute.xlu0 %2054
  %2058 = vset.pattern.permute.xlu0 0
  %2059 = vperm.xlu0 %2058, %v1981
  %v2060 = vpop.permute.xlu0 %2059
  %2062 = vmatprep.subr.mxu0 %v1946
  %2063 = vmatpush1.msra.mxu0 %v1945
  %2064 = vmatprep.subr.mxu0 %v1943
  %2065 = vmatpush1.msra.mxu0 %v1942
  %2066 = vmatprep.subr.mxu0 %v1940
  %2067 = vmatpush1.msra.mxu0 %v1939
  %2068 = vmatprep.subr.mxu0 %v1937
  %2069 = vmatpush1.msra.mxu0 %v1936
  %2070 = vmatprep.subr.mxu0 %v1934
  %2071 = vmatpush1.msra.mxu0 %v1933
  %2072 = vmatprep.subr.mxu0 %v1931
  %2073 = vmatpush1.msra.mxu0 %v1930
  %2074 = vmatprep.subr.mxu0 %v1928
  %2075 = vmatpush1.msra.mxu0 %v1927
  %2076 = vmatprep.subr.mxu0 %v1925
  %2077 = vmatpush1.msra.mxu0 %v1924
  %2078 = vmatprep.subr.mxu0 %v1922
  %2079 = vmatpush1.msra.mxu0 %v1921
  %2080 = vmatprep.subr.mxu0 %v1919
  %2081 = vmatpush1.msra.mxu0 %v1918
  %2082 = vmatprep.subr.mxu0 %v1916
  %2083 = vmatpush1.msra.mxu0 %v1915
  %2084 = vmatprep.subr.mxu0 %v1913
  %2085 = vmatpush1.msra.mxu0 %v1912
  %2086 = vmatprep.subr.mxu0 %v1910
  %2087 = vmatpush1.msra.mxu0 %v1909
  %2088 = vmatprep.subr.mxu0 %v1907
  %2089 = vmatpush1.msra.mxu0 %v1906
  %2090 = vmatprep.subr.mxu0 %v1904
  %2091 = vmatpush1.msra.mxu0 %v1903
  %2092 = vmatprep.subr.mxu0 %v1901
  %2093 = vmatpush1.msra.mxu0 %v1900
  %2094 = vmatprep.subr.mxu0 0.0
  %2095 = vmatpush2.msra.mxu0 0.0
  %2096 = vmatprep.subr.mxu0 0.0
  %2097 = vmatpush2.msra.mxu0 0.0
  %2098 = vmatprep.subr.mxu0 0.0
  %2099 = vmatpush2.msra.mxu0 0.0
  %2100 = vmatprep.subr.mxu0 0.0
  %2101 = vmatpush2.msra.mxu0 0.0
  %2102 = vmatprep.subr.mxu0 0.0
  %2103 = vmatpush2.msra.mxu0 0.0
  %2104 = vmatprep.subr.mxu0 0.0
  %2105 = vmatpush2.msra.mxu0 0.0
  %2106 = vmatprep.subr.mxu0 0.0
  %2107 = vmatpush2.msra.mxu0 0.0
  %2108 = vmatprep.subr.mxu0 0.0
  %2109 = vmatpush2.msra.mxu0 0.0
  %2110 = vmatprep.subr.mxu0 0.0
  %2111 = vmatpush2.msra.mxu0 0.0
  %2112 = vmatprep.subr.mxu0 0.0
  %2113 = vmatpush2.msra.mxu0 0.0
  %2114 = vmatprep.subr.mxu0 0.0
  %2115 = vmatpush2.msra.mxu0 0.0
  %2116 = vmatprep.subr.mxu0 0.0
  %2117 = vmatpush2.msra.mxu0 0.0
  %2118 = vmatprep.subr.mxu0 0.0
  %2119 = vmatpush2.msra.mxu0 0.0
  %2120 = vmatprep.subr.mxu0 0.0
  %2121 = vmatpush2.msra.mxu0 0.0
  %2122 = vmatprep.subr.mxu0 0.0
  %2123 = vmatpush2.msra.mxu0 0.0
  %2124 = vmatprep.subr.mxu0 0.0
  %2125 = vmatpush2.msra.mxu0 0.0
  %2126 = vmatprep.mubr.f32.mxu0 0.0
  %2127 = vmatmul.mubr.f32.gmra.mxu0 %v1949
  %v2128 = vpop.f32.mrf.mxu0
  %v2129 = vadd.f32 %v1985, %v2128
  %v2130 = vpop.f32.mrf.mxu0
  %v2131 = vadd.f32 %v1985, %v2130
  %2132 = vmatprep.mubr.f32.mxu0 0.0
  %2133 = vmatmul.mubr.f32.gmra.mxu0 %v1950
  %v2134 = vpop.f32.mrf.mxu0
  %v2135 = vadd.f32 %v1990, %v2134
  %v2136 = vpop.f32.mrf.mxu0
  %v2137 = vadd.f32 %v1990, %v2136
  %2138 = vmatprep.mubr.f32.mxu0 0.0
  %2139 = vmatmul.mubr.f32.gmra.mxu0 %v1951
  %v2140 = vpop.f32.mrf.mxu0
  %v2141 = vadd.f32 %v1995, %v2140
  %v2142 = vpop.f32.mrf.mxu0
  %v2143 = vadd.f32 %v1995, %v2142
  %2144 = vmatprep.mubr.f32.mxu0 0.0
  %2145 = vmatmul.mubr.f32.gmra.mxu0 %v1952
  %v2146 = vpop.f32.mrf.mxu0
  %v2147 = vadd.f32 %v2000, %v2146
  %v2148 = vpop.f32.mrf.mxu0
  %v2149 = vadd.f32 %v2000, %v2148
  %2150 = vmatprep.mubr.f32.mxu0 0.0
  %2151 = vmatmul.mubr.f32.gmra.mxu0 %v1953
  %v2152 = vpop.f32.mrf.mxu0
  %v2153 = vadd.f32 %v2005, %v2152
  %v2154 = vpop.f32.mrf.mxu0
  %v2155 = vadd.f32 %v2005, %v2154
  %2156 = vmatprep.mubr.f32.mxu0 0.0
  %2157 = vmatmul.mubr.f32.gmra.mxu0 %v1954
  %v2158 = vpop.f32.mrf.mxu0
  %v2159 = vadd.f32 %v2010, %v2158
  %v2160 = vpop.f32.mrf.mxu0
  %v2161 = vadd.f32 %v2010, %v2160
  %2162 = vmatprep.mubr.f32.mxu0 0.0
  %2163 = vmatmul.mubr.f32.gmra.mxu0 %v1955
  %v2164 = vpop.f32.mrf.mxu0
  %v2165 = vadd.f32 %v2015, %v2164
  %v2166 = vpop.f32.mrf.mxu0
  %v2167 = vadd.f32 %v2015, %v2166
  %2168 = vmatprep.mubr.f32.mxu0 0.0
  %2169 = vmatmul.mubr.f32.gmra.mxu0 %v1956
  %v2170 = vpop.f32.mrf.mxu0
  %v2171 = vadd.f32 %v2020, %v2170
  %v2172 = vpop.f32.mrf.mxu0
  %v2173 = vadd.f32 %v2020, %v2172
  %2174 = vmatprep.mubr.f32.mxu0 0.0
  %2175 = vmatmul.mubr.f32.gmra.mxu0 %v1957
  %v2176 = vpop.f32.mrf.mxu0
  %v2177 = vadd.f32 %v2025, %v2176
  %v2178 = vpop.f32.mrf.mxu0
  %v2179 = vadd.f32 %v2025, %v2178
  %2180 = vmatprep.mubr.f32.mxu0 0.0
  %2181 = vmatmul.mubr.f32.gmra.mxu0 %v1958
  %v2182 = vpop.f32.mrf.mxu0
  %v2183 = vadd.f32 %v2030, %v2182
  %v2184 = vpop.f32.mrf.mxu0
  %v2185 = vadd.f32 %v2030, %v2184
  %2186 = vmatprep.mubr.f32.mxu0 0.0
  %2187 = vmatmul.mubr.f32.gmra.mxu0 %v1959
  %v2188 = vpop.f32.mrf.mxu0
  %v2189 = vadd.f32 %v2035, %v2188
  %v2190 = vpop.f32.mrf.mxu0
  %v2191 = vadd.f32 %v2035, %v2190
  %2192 = vmatprep.mubr.f32.mxu0 0.0
  %2193 = vmatmul.mubr.f32.gmra.mxu0 %v1960
  %v2194 = vpop.f32.mrf.mxu0
  %v2195 = vadd.f32 %v2040, %v2194
  %v2196 = vpop.f32.mrf.mxu0
  %v2197 = vadd.f32 %v2040, %v2196
  %2198 = vmatprep.mubr.f32.mxu0 0.0
  %2199 = vmatmul.mubr.f32.gmra.mxu0 %v1961
  %v2200 = vpop.f32.mrf.mxu0
  %v2201 = vadd.f32 %v2045, %v2200
  %v2202 = vpop.f32.mrf.mxu0
  %v2203 = vadd.f32 %v2045, %v2202
  %2204 = vmatprep.mubr.f32.mxu0 0.0
  %2205 = vmatmul.mubr.f32.gmra.mxu0 %v1962
  %v2206 = vpop.f32.mrf.mxu0
  %v2207 = vadd.f32 %v2050, %v2206
  %v2208 = vpop.f32.mrf.mxu0
  %v2209 = vadd.f32 %v2050, %v2208
  %2210 = vmatprep.mubr.f32.mxu0 0.0
  %2211 = vmatmul.mubr.f32.gmra.mxu0 %v1963
  %v2212 = vpop.f32.mrf.mxu0
  %v2213 = vadd.f32 %v2055, %v2212
  %v2214 = vpop.f32.mrf.mxu0
  %v2215 = vadd.f32 %v2055, %v2214
  %2216 = vmatprep.mubr.f32.mxu0 0.0
  %2217 = vmatmul.mubr.f32.gmra.mxu0 %v1964
  %v2218 = vpop.f32.mrf.mxu0
  %v2219 = vadd.f32 %v2060, %v2218
  %v2220 = vpop.f32.mrf.mxu0
  %v2221 = vadd.f32 %v2060, %v2220
  %2222 = vdwg.mxu0
  %2223 = vmatprep.subr.mxu0 0.0
  %2224 = vmatpush1.msra.mxu0 %v1947
  %2225 = vmatprep.subr.mxu0 0.0
  %2226 = vmatpush1.msra.mxu0 %v1944
  %2227 = vmatprep.subr.mxu0 0.0
  %2228 = vmatpush1.msra.mxu0 %v1941
  %2229 = vmatprep.subr.mxu0 0.0
  %2230 = vmatpush1.msra.mxu0 %v1938
  %2231 = vmatprep.subr.mxu0 0.0
  %2232 = vmatpush1.msra.mxu0 %v1935
  %2233 = vmatprep.subr.mxu0 0.0
  %2234 = vmatpush1.msra.mxu0 %v1932
  %2235 = vmatprep.subr.mxu0 0.0
  %2236 = vmatpush1.msra.mxu0 %v1929
  %2237 = vmatprep.subr.mxu0 0.0
  %2238 = vmatpush1.msra.mxu0 %v1926
  %2239 = vmatprep.subr.mxu0 0.0
  %2240 = vmatpush1.msra.mxu0 %v1923
  %2241 = vmatprep.subr.mxu0 0.0
  %2242 = vmatpush1.msra.mxu0 %v1920
  %2243 = vmatprep.subr.mxu0 0.0
  %2244 = vmatpush1.msra.mxu0 %v1917
  %2245 = vmatprep.subr.mxu0 0.0
  %2246 = vmatpush1.msra.mxu0 %v1914
  %2247 = vmatprep.subr.mxu0 0.0
  %2248 = vmatpush1.msra.mxu0 %v1911
  %2249 = vmatprep.subr.mxu0 0.0
  %2250 = vmatpush1.msra.mxu0 %v1908
  %2251 = vmatprep.subr.mxu0 0.0
  %2252 = vmatpush1.msra.mxu0 %v1905
  %2253 = vmatprep.subr.mxu0 0.0
  %2254 = vmatpush1.msra.mxu0 %v1902
  %2255 = vmatprep.subr.mxu0 0.0
  %2256 = vmatpush2.msra.mxu0 0.0
  %2257 = vmatprep.subr.mxu0 0.0
  %2258 = vmatpush2.msra.mxu0 0.0
  %2259 = vmatprep.subr.mxu0 0.0
  %2260 = vmatpush2.msra.mxu0 0.0
  %2261 = vmatprep.subr.mxu0 0.0
  %2262 = vmatpush2.msra.mxu0 0.0
  %2263 = vmatprep.subr.mxu0 0.0
  %2264 = vmatpush2.msra.mxu0 0.0
  %2265 = vmatprep.subr.mxu0 0.0
  %2266 = vmatpush2.msra.mxu0 0.0
  %2267 = vmatprep.subr.mxu0 0.0
  %2268 = vmatpush2.msra.mxu0 0.0
  %2269 = vmatprep.subr.mxu0 0.0
  %2270 = vmatpush2.msra.mxu0 0.0
  %2271 = vmatprep.subr.mxu0 0.0
  %2272 = vmatpush2.msra.mxu0 0.0
  %2273 = vmatprep.subr.mxu0 0.0
  %2274 = vmatpush2.msra.mxu0 0.0
  %2275 = vmatprep.subr.mxu0 0.0
  %2276 = vmatpush2.msra.mxu0 0.0
  %2277 = vmatprep.subr.mxu0 0.0
  %2278 = vmatpush2.msra.mxu0 0.0
  %2279 = vmatprep.subr.mxu0 0.0
  %2280 = vmatpush2.msra.mxu0 0.0
  %2281 = vmatprep.subr.mxu0 0.0
  %2282 = vmatpush2.msra.mxu0 0.0
  %2283 = vmatprep.subr.mxu0 0.0
  %2284 = vmatpush2.msra.mxu0 0.0
  %2285 = vmatprep.subr.mxu0 0.0
  %2286 = vmatpush2.msra.mxu0 0.0
  %2287 = vmatprep.mubr.f32.mxu0 0.0
  %2288 = vmatmul.mubr.f32.gmra.mxu0 %v1949
  %v2289 = vpop.f32.mrf.mxu0
  %v2290 = vadd.f32 %v1985, %v2289
  %v2291 = vpop.f32.mrf.mxu0
  %2292 = vmatprep.mubr.f32.mxu0 0.0
  %2293 = vmatmul.mubr.f32.gmra.mxu0 %v1950
  %v2294 = vpop.f32.mrf.mxu0
  %v2295 = vadd.f32 %v1990, %v2294
  %v2296 = vpop.f32.mrf.mxu0
  %2297 = vmatprep.mubr.f32.mxu0 0.0
  %2298 = vmatmul.mubr.f32.gmra.mxu0 %v1951
  %v2299 = vpop.f32.mrf.mxu0
  %v2300 = vadd.f32 %v1995, %v2299
  %v2301 = vpop.f32.mrf.mxu0
  %2302 = vmatprep.mubr.f32.mxu0 0.0
  %2303 = vmatmul.mubr.f32.gmra.mxu0 %v1952
  %v2304 = vpop.f32.mrf.mxu0
  %v2305 = vadd.f32 %v2000, %v2304
  %v2306 = vpop.f32.mrf.mxu0
  %2307 = vmatprep.mubr.f32.mxu0 0.0
  %2308 = vmatmul.mubr.f32.gmra.mxu0 %v1953
  %v2309 = vpop.f32.mrf.mxu0
  %v2310 = vadd.f32 %v2005, %v2309
  %v2311 = vpop.f32.mrf.mxu0
  %2312 = vmatprep.mubr.f32.mxu0 0.0
  %2313 = vmatmul.mubr.f32.gmra.mxu0 %v1954
  %v2314 = vpop.f32.mrf.mxu0
  %v2315 = vadd.f32 %v2010, %v2314
  %v2316 = vpop.f32.mrf.mxu0
  %2317 = vmatprep.mubr.f32.mxu0 0.0
  %2318 = vmatmul.mubr.f32.gmra.mxu0 %v1955
  %v2319 = vpop.f32.mrf.mxu0
  %v2320 = vadd.f32 %v2015, %v2319
  %v2321 = vpop.f32.mrf.mxu0
  %2322 = vmatprep.mubr.f32.mxu0 0.0
  %2323 = vmatmul.mubr.f32.gmra.mxu0 %v1956
  %v2324 = vpop.f32.mrf.mxu0
  %v2325 = vadd.f32 %v2020, %v2324
  %v2326 = vpop.f32.mrf.mxu0
  %2327 = vmatprep.mubr.f32.mxu0 0.0
  %2328 = vmatmul.mubr.f32.gmra.mxu0 %v1957
  %v2329 = vpop.f32.mrf.mxu0
  %v2330 = vadd.f32 %v2025, %v2329
  %v2331 = vpop.f32.mrf.mxu0
  %2332 = vmatprep.mubr.f32.mxu0 0.0
  %2333 = vmatmul.mubr.f32.gmra.mxu0 %v1958
  %v2334 = vpop.f32.mrf.mxu0
  %v2335 = vadd.f32 %v2030, %v2334
  %v2336 = vpop.f32.mrf.mxu0
  %2337 = vmatprep.mubr.f32.mxu0 0.0
  %2338 = vmatmul.mubr.f32.gmra.mxu0 %v1959
  %v2339 = vpop.f32.mrf.mxu0
  %v2340 = vadd.f32 %v2035, %v2339
  %v2341 = vpop.f32.mrf.mxu0
  %2342 = vmatprep.mubr.f32.mxu0 0.0
  %2343 = vmatmul.mubr.f32.gmra.mxu0 %v1960
  %v2344 = vpop.f32.mrf.mxu0
  %v2345 = vadd.f32 %v2040, %v2344
  %v2346 = vpop.f32.mrf.mxu0
  %2347 = vmatprep.mubr.f32.mxu0 0.0
  %2348 = vmatmul.mubr.f32.gmra.mxu0 %v1961
  %v2349 = vpop.f32.mrf.mxu0
  %v2350 = vadd.f32 %v2045, %v2349
  %v2351 = vpop.f32.mrf.mxu0
  %2352 = vmatprep.mubr.f32.mxu0 0.0
  %2353 = vmatmul.mubr.f32.gmra.mxu0 %v1962
  %v2354 = vpop.f32.mrf.mxu0
  %v2355 = vadd.f32 %v2050, %v2354
  %v2356 = vpop.f32.mrf.mxu0
  %2357 = vmatprep.mubr.f32.mxu0 0.0
  %2358 = vmatmul.mubr.f32.gmra.mxu0 %v1963
  %v2359 = vpop.f32.mrf.mxu0
  %v2360 = vadd.f32 %v2055, %v2359
  %v2361 = vpop.f32.mrf.mxu0
  %2362 = vmatprep.mubr.f32.mxu0 0.0
  %2363 = vmatmul.mubr.f32.gmra.mxu0 %v1964
  %v2364 = vpop.f32.mrf.mxu0
  %v2365 = vadd.f32 %v2060, %v2364
  %v2366 = vpop.f32.mrf.mxu0
  %2367 = vdwg.mxu0
  %v2368 = vmax.f32 %v2129, 0.0
  %v2369 = vmax.f32 %v2131, 0.0
  %v2370 = vmax.f32 %v2290, 0.0
  %v2371 = vmax.f32 %v2135, 0.0
  %v2372 = vmax.f32 %v2137, 0.0
  %v2373 = vmax.f32 %v2295, 0.0
  %v2374 = vmax.f32 %v2141, 0.0
  %v2375 = vmax.f32 %v2143, 0.0
  %v2376 = vmax.f32 %v2300, 0.0
  %v2377 = vmax.f32 %v2147, 0.0
  %v2378 = vmax.f32 %v2149, 0.0
  %v2379 = vmax.f32 %v2305, 0.0
  %v2380 = vmax.f32 %v2153, 0.0
  %v2381 = vmax.f32 %v2155, 0.0
  %v2382 = vmax.f32 %v2310, 0.0
  %v2383 = vmax.f32 %v2159, 0.0
  %v2384 = vmax.f32 %v2161, 0.0
  %v2385 = vmax.f32 %v2315, 0.0
  %v2386 = vmax.f32 %v2165, 0.0
  %v2387 = vmax.f32 %v2167, 0.0
  %v2388 = vmax.f32 %v2320, 0.0
  %v2389 = vmax.f32 %v2171, 0.0
  %v2390 = vmax.f32 %v2173, 0.0
  %v2391 = vmax.f32 %v2325, 0.0
  %v2392 = vmax.f32 %v2177, 0.0
  %v2393 = vmax.f32 %v2179, 0.0
  %v2394 = vmax.f32 %v2330, 0.0
  %v2395 = vmax.f32 %v2183, 0.0
  %v2396 = vmax.f32 %v2185, 0.0
  %v2397 = vmax.f32 %v2335, 0.0
  %v2398 = vmax.f32 %v2189, 0.0
  %v2399 = vmax.f32 %v2191, 0.0
  %v2400 = vmax.f32 %v2340, 0.0
  %v2401 = vmax.f32 %v2195, 0.0
  %v2402 = vmax.f32 %v2197, 0.0
  %v2403 = vmax.f32 %v2345, 0.0
  %v2404 = vmax.f32 %v2201, 0.0
  %v2405 = vmax.f32 %v2203, 0.0
  %v2406 = vmax.f32 %v2350, 0.0
  %v2407 = vmax.f32 %v2207, 0.0
  %v2408 = vmax.f32 %v2209, 0.0
  %v2409 = vmax.f32 %v2355, 0.0
  %v2410 = vmax.f32 %v2213, 0.0
  %v2411 = vmax.f32 %v2215, 0.0
  %v2412 = vmax.f32 %v2360, 0.0
  %v2413 = vmax.f32 %v2219, 0.0
  %v2414 = vmax.f32 %v2221, 0.0
  %v2415 = vmax.f32 %v2365, 0.0
  %s2416 = scalar_lea.vmem %s3, 512
  %v2417 = vld [vmem:[%s2416] sm:$0xff]
  %v2418 = vld [vmem:[%s2416 + $0x8] sm:$0xff]
  %v2419 = vld [vmem:[%s2416 + $0x10] sm:$0xff]
  %v2420 = vld [vmem:[%s2416 + $0x18] sm:$0xff]
  %v2421 = vld [vmem:[%s2416 + $0x20] sm:$0xff]
  %v2422 = vld [vmem:[%s2416 + $0x28] sm:$0xff]
  %v2423 = vld [vmem:[%s2416 + $0x30] sm:$0xff]
  %v2424 = vld [vmem:[%s2416 + $0x38] sm:$0xff]
  %v2425 = vld [vmem:[%s2416 + $0x40] sm:$0xff]
  %v2426 = vld [vmem:[%s2416 + $0x48] sm:$0xff]
  %v2427 = vld [vmem:[%s2416 + $0x50] sm:$0xff]
  %v2428 = vld [vmem:[%s2416 + $0x58] sm:$0xff]
  %v2429 = vld [vmem:[%s2416 + $0x60] sm:$0xff]
  %v2430 = vld [vmem:[%s2416 + $0x68] sm:$0xff]
  %v2431 = vld [vmem:[%s2416 + $0x70] sm:$0xff]
  %v2432 = vld [vmem:[%s2416 + $0x78] sm:$0xff]
  %s2433 = scalar_lea.vmem %s4, 512
  %v2434 = vld [vmem:[%s2433] sm:$0xff]
  %v2435 = vld [vmem:[%s2433 + $0x8] sm:$0xff]
  %v2436 = vld [vmem:[%s2433 + $0x10] sm:$0xff]
  %v2437 = vld [vmem:[%s2433 + $0x18] sm:$0xff]
  %v2438 = vld [vmem:[%s2433 + $0x20] sm:$0xff]
  %v2439 = vld [vmem:[%s2433 + $0x28] sm:$0xff]
  %v2440 = vld [vmem:[%s2433 + $0x30] sm:$0xff]
  %v2441 = vld [vmem:[%s2433 + $0x38] sm:$0xff]
  %v2442 = vld [vmem:[%s2433 + $0x40] sm:$0xff]
  %v2443 = vld [vmem:[%s2433 + $0x48] sm:$0xff]
  %v2444 = vld [vmem:[%s2433 + $0x50] sm:$0xff]
  %v2445 = vld [vmem:[%s2433 + $0x58] sm:$0xff]
  %v2446 = vld [vmem:[%s2433 + $0x60] sm:$0xff]
  %v2447 = vld [vmem:[%s2433 + $0x68] sm:$0xff]
  %v2448 = vld [vmem:[%s2433 + $0x70] sm:$0xff]
  %v2449 = vld [vmem:[%s2433 + $0x78] sm:$0xff]
  %2451 = vset.pattern.permute.xlu0 0
  %2452 = vperm.xlu0 %2451, %v2434
  %v2453 = vpop.permute.xlu0 %2452
  %2456 = vset.pattern.permute.xlu0 0
  %2457 = vperm.xlu0 %2456, %v2435
  %v2458 = vpop.permute.xlu0 %2457
  %2461 = vset.pattern.permute.xlu0 0
  %2462 = vperm.xlu0 %2461, %v2436
  %v2463 = vpop.permute.xlu0 %2462
  %2466 = vset.pattern.permute.xlu0 0
  %2467 = vperm.xlu0 %2466, %v2437
  %v2468 = vpop.permute.xlu0 %2467
  %2471 = vset.pattern.permute.xlu0 0
  %2472 = vperm.xlu0 %2471, %v2438
  %v2473 = vpop.permute.xlu0 %2472
  %2476 = vset.pattern.permute.xlu0 0
  %2477 = vperm.xlu0 %2476, %v2439
  %v2478 = vpop.permute.xlu0 %2477
  %2481 = vset.pattern.permute.xlu0 0
  %2482 = vperm.xlu0 %2481, %v2440
  %v2483 = vpop.permute.xlu0 %2482
  %2486 = vset.pattern.permute.xlu0 0
  %2487 = vperm.xlu0 %2486, %v2441
  %v2488 = vpop.permute.xlu0 %2487
  %2491 = vset.pattern.permute.xlu0 0
  %2492 = vperm.xlu0 %2491, %v2442
  %v2493 = vpop.permute.xlu0 %2492
  %2496 = vset.pattern.permute.xlu0 0
  %2497 = vperm.xlu0 %2496, %v2443
  %v2498 = vpop.permute.xlu0 %2497
  %2501 = vset.pattern.permute.xlu0 0
  %2502 = vperm.xlu0 %2501, %v2444
  %v2503 = vpop.permute.xlu0 %2502
  %2506 = vset.pattern.permute.xlu0 0
  %2507 = vperm.xlu0 %2506, %v2445
  %v2508 = vpop.permute.xlu0 %2507
  %2511 = vset.pattern.permute.xlu0 0
  %2512 = vperm.xlu0 %2511, %v2446
  %v2513 = vpop.permute.xlu0 %2512
  %2516 = vset.pattern.permute.xlu0 0
  %2517 = vperm.xlu0 %2516, %v2447
  %v2518 = vpop.permute.xlu0 %2517
  %2521 = vset.pattern.permute.xlu0 0
  %2522 = vperm.xlu0 %2521, %v2448
  %v2523 = vpop.permute.xlu0 %2522
  %2526 = vset.pattern.permute.xlu0 0
  %2527 = vperm.xlu0 %2526, %v2449
  %v2528 = vpop.permute.xlu0 %2527
  %2530 = vmatprep.subr.mxu0 %v2414
  %2531 = vmatpush1.msra.mxu0 %v2413
  %2532 = vmatprep.subr.mxu0 %v2411
  %2533 = vmatpush1.msra.mxu0 %v2410
  %2534 = vmatprep.subr.mxu0 %v2408
  %2535 = vmatpush1.msra.mxu0 %v2407
  %2536 = vmatprep.subr.mxu0 %v2405
  %2537 = vmatpush1.msra.mxu0 %v2404
  %2538 = vmatprep.subr.mxu0 %v2402
  %2539 = vmatpush1.msra.mxu0 %v2401
  %2540 = vmatprep.subr.mxu0 %v2399
  %2541 = vmatpush1.msra.mxu0 %v2398
  %2542 = vmatprep.subr.mxu0 %v2396
  %2543 = vmatpush1.msra.mxu0 %v2395
  %2544 = vmatprep.subr.mxu0 %v2393
  %2545 = vmatpush1.msra.mxu0 %v2392
  %2546 = vmatprep.subr.mxu0 %v2390
  %2547 = vmatpush1.msra.mxu0 %v2389
  %2548 = vmatprep.subr.mxu0 %v2387
  %2549 = vmatpush1.msra.mxu0 %v2386
  %2550 = vmatprep.subr.mxu0 %v2384
  %2551 = vmatpush1.msra.mxu0 %v2383
  %2552 = vmatprep.subr.mxu0 %v2381
  %2553 = vmatpush1.msra.mxu0 %v2380
  %2554 = vmatprep.subr.mxu0 %v2378
  %2555 = vmatpush1.msra.mxu0 %v2377
  %2556 = vmatprep.subr.mxu0 %v2375
  %2557 = vmatpush1.msra.mxu0 %v2374
  %2558 = vmatprep.subr.mxu0 %v2372
  %2559 = vmatpush1.msra.mxu0 %v2371
  %2560 = vmatprep.subr.mxu0 %v2369
  %2561 = vmatpush1.msra.mxu0 %v2368
  %2562 = vmatprep.subr.mxu0 0.0
  %2563 = vmatpush2.msra.mxu0 0.0
  %2564 = vmatprep.subr.mxu0 0.0
  %2565 = vmatpush2.msra.mxu0 0.0
  %2566 = vmatprep.subr.mxu0 0.0
  %2567 = vmatpush2.msra.mxu0 0.0
  %2568 = vmatprep.subr.mxu0 0.0
  %2569 = vmatpush2.msra.mxu0 0.0
  %2570 = vmatprep.subr.mxu0 0.0
  %2571 = vmatpush2.msra.mxu0 0.0
  %2572 = vmatprep.subr.mxu0 0.0
  %2573 = vmatpush2.msra.mxu0 0.0
  %2574 = vmatprep.subr.mxu0 0.0
  %2575 = vmatpush2.msra.mxu0 0.0
  %2576 = vmatprep.subr.mxu0 0.0
  %2577 = vmatpush2.msra.mxu0 0.0
  %2578 = vmatprep.subr.mxu0 0.0
  %2579 = vmatpush2.msra.mxu0 0.0
  %2580 = vmatprep.subr.mxu0 0.0
  %2581 = vmatpush2.msra.mxu0 0.0
  %2582 = vmatprep.subr.mxu0 0.0
  %2583 = vmatpush2.msra.mxu0 0.0
  %2584 = vmatprep.subr.mxu0 0.0
  %2585 = vmatpush2.msra.mxu0 0.0
  %2586 = vmatprep.subr.mxu0 0.0
  %2587 = vmatpush2.msra.mxu0 0.0
  %2588 = vmatprep.subr.mxu0 0.0
  %2589 = vmatpush2.msra.mxu0 0.0
  %2590 = vmatprep.subr.mxu0 0.0
  %2591 = vmatpush2.msra.mxu0 0.0
  %2592 = vmatprep.subr.mxu0 0.0
  %2593 = vmatpush2.msra.mxu0 0.0
  %2594 = vmatprep.mubr.f32.mxu0 0.0
  %2595 = vmatmul.mubr.f32.gmra.mxu0 %v2417
  %v2596 = vpop.f32.mrf.mxu0
  %v2597 = vadd.f32 %v2453, %v2596
  %v2598 = vpop.f32.mrf.mxu0
  %v2599 = vadd.f32 %v2453, %v2598
  %2600 = vmatprep.mubr.f32.mxu0 0.0
  %2601 = vmatmul.mubr.f32.gmra.mxu0 %v2418
  %v2602 = vpop.f32.mrf.mxu0
  %v2603 = vadd.f32 %v2458, %v2602
  %v2604 = vpop.f32.mrf.mxu0
  %v2605 = vadd.f32 %v2458, %v2604
  %2606 = vmatprep.mubr.f32.mxu0 0.0
  %2607 = vmatmul.mubr.f32.gmra.mxu0 %v2419
  %v2608 = vpop.f32.mrf.mxu0
  %v2609 = vadd.f32 %v2463, %v2608
  %v2610 = vpop.f32.mrf.mxu0
  %v2611 = vadd.f32 %v2463, %v2610
  %2612 = vmatprep.mubr.f32.mxu0 0.0
  %2613 = vmatmul.mubr.f32.gmra.mxu0 %v2420
  %v2614 = vpop.f32.mrf.mxu0
  %v2615 = vadd.f32 %v2468, %v2614
  %v2616 = vpop.f32.mrf.mxu0
  %v2617 = vadd.f32 %v2468, %v2616
  %2618 = vmatprep.mubr.f32.mxu0 0.0
  %2619 = vmatmul.mubr.f32.gmra.mxu0 %v2421
  %v2620 = vpop.f32.mrf.mxu0
  %v2621 = vadd.f32 %v2473, %v2620
  %v2622 = vpop.f32.mrf.mxu0
  %v2623 = vadd.f32 %v2473, %v2622
  %2624 = vmatprep.mubr.f32.mxu0 0.0
  %2625 = vmatmul.mubr.f32.gmra.mxu0 %v2422
  %v2626 = vpop.f32.mrf.mxu0
  %v2627 = vadd.f32 %v2478, %v2626
  %v2628 = vpop.f32.mrf.mxu0
  %v2629 = vadd.f32 %v2478, %v2628
  %2630 = vmatprep.mubr.f32.mxu0 0.0
  %2631 = vmatmul.mubr.f32.gmra.mxu0 %v2423
  %v2632 = vpop.f32.mrf.mxu0
  %v2633 = vadd.f32 %v2483, %v2632
  %v2634 = vpop.f32.mrf.mxu0
  %v2635 = vadd.f32 %v2483, %v2634
  %2636 = vmatprep.mubr.f32.mxu0 0.0
  %2637 = vmatmul.mubr.f32.gmra.mxu0 %v2424
  %v2638 = vpop.f32.mrf.mxu0
  %v2639 = vadd.f32 %v2488, %v2638
  %v2640 = vpop.f32.mrf.mxu0
  %v2641 = vadd.f32 %v2488, %v2640
  %2642 = vmatprep.mubr.f32.mxu0 0.0
  %2643 = vmatmul.mubr.f32.gmra.mxu0 %v2425
  %v2644 = vpop.f32.mrf.mxu0
  %v2645 = vadd.f32 %v2493, %v2644
  %v2646 = vpop.f32.mrf.mxu0
  %v2647 = vadd.f32 %v2493, %v2646
  %2648 = vmatprep.mubr.f32.mxu0 0.0
  %2649 = vmatmul.mubr.f32.gmra.mxu0 %v2426
  %v2650 = vpop.f32.mrf.mxu0
  %v2651 = vadd.f32 %v2498, %v2650
  %v2652 = vpop.f32.mrf.mxu0
  %v2653 = vadd.f32 %v2498, %v2652
  %2654 = vmatprep.mubr.f32.mxu0 0.0
  %2655 = vmatmul.mubr.f32.gmra.mxu0 %v2427
  %v2656 = vpop.f32.mrf.mxu0
  %v2657 = vadd.f32 %v2503, %v2656
  %v2658 = vpop.f32.mrf.mxu0
  %v2659 = vadd.f32 %v2503, %v2658
  %2660 = vmatprep.mubr.f32.mxu0 0.0
  %2661 = vmatmul.mubr.f32.gmra.mxu0 %v2428
  %v2662 = vpop.f32.mrf.mxu0
  %v2663 = vadd.f32 %v2508, %v2662
  %v2664 = vpop.f32.mrf.mxu0
  %v2665 = vadd.f32 %v2508, %v2664
  %2666 = vmatprep.mubr.f32.mxu0 0.0
  %2667 = vmatmul.mubr.f32.gmra.mxu0 %v2429
  %v2668 = vpop.f32.mrf.mxu0
  %v2669 = vadd.f32 %v2513, %v2668
  %v2670 = vpop.f32.mrf.mxu0
  %v2671 = vadd.f32 %v2513, %v2670
  %2672 = vmatprep.mubr.f32.mxu0 0.0
  %2673 = vmatmul.mubr.f32.gmra.mxu0 %v2430
  %v2674 = vpop.f32.mrf.mxu0
  %v2675 = vadd.f32 %v2518, %v2674
  %v2676 = vpop.f32.mrf.mxu0
  %v2677 = vadd.f32 %v2518, %v2676
  %2678 = vmatprep.mubr.f32.mxu0 0.0
  %2679 = vmatmul.mubr.f32.gmra.mxu0 %v2431
  %v2680 = vpop.f32.mrf.mxu0
  %v2681 = vadd.f32 %v2523, %v2680
  %v2682 = vpop.f32.mrf.mxu0
  %v2683 = vadd.f32 %v2523, %v2682
  %2684 = vmatprep.mubr.f32.mxu0 0.0
  %2685 = vmatmul.mubr.f32.gmra.mxu0 %v2432
  %v2686 = vpop.f32.mrf.mxu0
  %v2687 = vadd.f32 %v2528, %v2686
  %v2688 = vpop.f32.mrf.mxu0
  %v2689 = vadd.f32 %v2528, %v2688
  %2690 = vdwg.mxu0
  %2691 = vmatprep.subr.mxu0 0.0
  %2692 = vmatpush1.msra.mxu0 %v2415
  %2693 = vmatprep.subr.mxu0 0.0
  %2694 = vmatpush1.msra.mxu0 %v2412
  %2695 = vmatprep.subr.mxu0 0.0
  %2696 = vmatpush1.msra.mxu0 %v2409
  %2697 = vmatprep.subr.mxu0 0.0
  %2698 = vmatpush1.msra.mxu0 %v2406
  %2699 = vmatprep.subr.mxu0 0.0
  %2700 = vmatpush1.msra.mxu0 %v2403
  %2701 = vmatprep.subr.mxu0 0.0
  %2702 = vmatpush1.msra.mxu0 %v2400
  %2703 = vmatprep.subr.mxu0 0.0
  %2704 = vmatpush1.msra.mxu0 %v2397
  %2705 = vmatprep.subr.mxu0 0.0
  %2706 = vmatpush1.msra.mxu0 %v2394
  %2707 = vmatprep.subr.mxu0 0.0
  %2708 = vmatpush1.msra.mxu0 %v2391
  %2709 = vmatprep.subr.mxu0 0.0
  %2710 = vmatpush1.msra.mxu0 %v2388
  %2711 = vmatprep.subr.mxu0 0.0
  %2712 = vmatpush1.msra.mxu0 %v2385
  %2713 = vmatprep.subr.mxu0 0.0
  %2714 = vmatpush1.msra.mxu0 %v2382
  %2715 = vmatprep.subr.mxu0 0.0
  %2716 = vmatpush1.msra.mxu0 %v2379
  %2717 = vmatprep.subr.mxu0 0.0
  %2718 = vmatpush1.msra.mxu0 %v2376
  %2719 = vmatprep.subr.mxu0 0.0
  %2720 = vmatpush1.msra.mxu0 %v2373
  %2721 = vmatprep.subr.mxu0 0.0
  %2722 = vmatpush1.msra.mxu0 %v2370
  %2723 = vmatprep.subr.mxu0 0.0
  %2724 = vmatpush2.msra.mxu0 0.0
  %2725 = vmatprep.subr.mxu0 0.0
  %2726 = vmatpush2.msra.mxu0 0.0
  %2727 = vmatprep.subr.mxu0 0.0
  %2728 = vmatpush2.msra.mxu0 0.0
  %2729 = vmatprep.subr.mxu0 0.0
  %2730 = vmatpush2.msra.mxu0 0.0
  %2731 = vmatprep.subr.mxu0 0.0
  %2732 = vmatpush2.msra.mxu0 0.0
  %2733 = vmatprep.subr.mxu0 0.0
  %2734 = vmatpush2.msra.mxu0 0.0
  %2735 = vmatprep.subr.mxu0 0.0
  %2736 = vmatpush2.msra.mxu0 0.0
  %2737 = vmatprep.subr.mxu0 0.0
  %2738 = vmatpush2.msra.mxu0 0.0
  %2739 = vmatprep.subr.mxu0 0.0
  %2740 = vmatpush2.msra.mxu0 0.0
  %2741 = vmatprep.subr.mxu0 0.0
  %2742 = vmatpush2.msra.mxu0 0.0
  %2743 = vmatprep.subr.mxu0 0.0
  %2744 = vmatpush2.msra.mxu0 0.0
  %2745 = vmatprep.subr.mxu0 0.0
  %2746 = vmatpush2.msra.mxu0 0.0
  %2747 = vmatprep.subr.mxu0 0.0
  %2748 = vmatpush2.msra.mxu0 0.0
  %2749 = vmatprep.subr.mxu0 0.0
  %2750 = vmatpush2.msra.mxu0 0.0
  %2751 = vmatprep.subr.mxu0 0.0
  %2752 = vmatpush2.msra.mxu0 0.0
  %2753 = vmatprep.subr.mxu0 0.0
  %2754 = vmatpush2.msra.mxu0 0.0
  %2755 = vmatprep.mubr.f32.mxu0 0.0
  %2756 = vmatmul.mubr.f32.gmra.mxu0 %v2417
  %v2757 = vpop.f32.mrf.mxu0
  %v2758 = vadd.f32 %v2453, %v2757
  %v2759 = vpop.f32.mrf.mxu0
  %2760 = vmatprep.mubr.f32.mxu0 0.0
  %2761 = vmatmul.mubr.f32.gmra.mxu0 %v2418
  %v2762 = vpop.f32.mrf.mxu0
  %v2763 = vadd.f32 %v2458, %v2762
  %v2764 = vpop.f32.mrf.mxu0
  %2765 = vmatprep.mubr.f32.mxu0 0.0
  %2766 = vmatmul.mubr.f32.gmra.mxu0 %v2419
  %v2767 = vpop.f32.mrf.mxu0
  %v2768 = vadd.f32 %v2463, %v2767
  %v2769 = vpop.f32.mrf.mxu0
  %2770 = vmatprep.mubr.f32.mxu0 0.0
  %2771 = vmatmul.mubr.f32.gmra.mxu0 %v2420
  %v2772 = vpop.f32.mrf.mxu0
  %v2773 = vadd.f32 %v2468, %v2772
  %v2774 = vpop.f32.mrf.mxu0
  %2775 = vmatprep.mubr.f32.mxu0 0.0
  %2776 = vmatmul.mubr.f32.gmra.mxu0 %v2421
  %v2777 = vpop.f32.mrf.mxu0
  %v2778 = vadd.f32 %v2473, %v2777
  %v2779 = vpop.f32.mrf.mxu0
  %2780 = vmatprep.mubr.f32.mxu0 0.0
  %2781 = vmatmul.mubr.f32.gmra.mxu0 %v2422
  %v2782 = vpop.f32.mrf.mxu0
  %v2783 = vadd.f32 %v2478, %v2782
  %v2784 = vpop.f32.mrf.mxu0
  %2785 = vmatprep.mubr.f32.mxu0 0.0
  %2786 = vmatmul.mubr.f32.gmra.mxu0 %v2423
  %v2787 = vpop.f32.mrf.mxu0
  %v2788 = vadd.f32 %v2483, %v2787
  %v2789 = vpop.f32.mrf.mxu0
  %2790 = vmatprep.mubr.f32.mxu0 0.0
  %2791 = vmatmul.mubr.f32.gmra.mxu0 %v2424
  %v2792 = vpop.f32.mrf.mxu0
  %v2793 = vadd.f32 %v2488, %v2792
  %v2794 = vpop.f32.mrf.mxu0
  %2795 = vmatprep.mubr.f32.mxu0 0.0
  %2796 = vmatmul.mubr.f32.gmra.mxu0 %v2425
  %v2797 = vpop.f32.mrf.mxu0
  %v2798 = vadd.f32 %v2493, %v2797
  %v2799 = vpop.f32.mrf.mxu0
  %2800 = vmatprep.mubr.f32.mxu0 0.0
  %2801 = vmatmul.mubr.f32.gmra.mxu0 %v2426
  %v2802 = vpop.f32.mrf.mxu0
  %v2803 = vadd.f32 %v2498, %v2802
  %v2804 = vpop.f32.mrf.mxu0
  %2805 = vmatprep.mubr.f32.mxu0 0.0
  %2806 = vmatmul.mubr.f32.gmra.mxu0 %v2427
  %v2807 = vpop.f32.mrf.mxu0
  %v2808 = vadd.f32 %v2503, %v2807
  %v2809 = vpop.f32.mrf.mxu0
  %2810 = vmatprep.mubr.f32.mxu0 0.0
  %2811 = vmatmul.mubr.f32.gmra.mxu0 %v2428
  %v2812 = vpop.f32.mrf.mxu0
  %v2813 = vadd.f32 %v2508, %v2812
  %v2814 = vpop.f32.mrf.mxu0
  %2815 = vmatprep.mubr.f32.mxu0 0.0
  %2816 = vmatmul.mubr.f32.gmra.mxu0 %v2429
  %v2817 = vpop.f32.mrf.mxu0
  %v2818 = vadd.f32 %v2513, %v2817
  %v2819 = vpop.f32.mrf.mxu0
  %2820 = vmatprep.mubr.f32.mxu0 0.0
  %2821 = vmatmul.mubr.f32.gmra.mxu0 %v2430
  %v2822 = vpop.f32.mrf.mxu0
  %v2823 = vadd.f32 %v2518, %v2822
  %v2824 = vpop.f32.mrf.mxu0
  %2825 = vmatprep.mubr.f32.mxu0 0.0
  %2826 = vmatmul.mubr.f32.gmra.mxu0 %v2431
  %v2827 = vpop.f32.mrf.mxu0
  %v2828 = vadd.f32 %v2523, %v2827
  %v2829 = vpop.f32.mrf.mxu0
  %2830 = vmatprep.mubr.f32.mxu0 0.0
  %2831 = vmatmul.mubr.f32.gmra.mxu0 %v2432
  %v2832 = vpop.f32.mrf.mxu0
  %v2833 = vadd.f32 %v2528, %v2832
  %v2834 = vpop.f32.mrf.mxu0
  %2835 = vdwg.mxu0
  %v2836 = vmax.f32 %v2597, 0.0
  %v2837 = vmax.f32 %v2599, 0.0
  %v2838 = vmax.f32 %v2758, 0.0
  %v2839 = vmax.f32 %v2603, 0.0
  %v2840 = vmax.f32 %v2605, 0.0
  %v2841 = vmax.f32 %v2763, 0.0
  %v2842 = vmax.f32 %v2609, 0.0
  %v2843 = vmax.f32 %v2611, 0.0
  %v2844 = vmax.f32 %v2768, 0.0
  %v2845 = vmax.f32 %v2615, 0.0
  %v2846 = vmax.f32 %v2617, 0.0
  %v2847 = vmax.f32 %v2773, 0.0
  %v2848 = vmax.f32 %v2621, 0.0
  %v2849 = vmax.f32 %v2623, 0.0
  %v2850 = vmax.f32 %v2778, 0.0
  %v2851 = vmax.f32 %v2627, 0.0
  %v2852 = vmax.f32 %v2629, 0.0
  %v2853 = vmax.f32 %v2783, 0.0
  %v2854 = vmax.f32 %v2633, 0.0
  %v2855 = vmax.f32 %v2635, 0.0
  %v2856 = vmax.f32 %v2788, 0.0
  %v2857 = vmax.f32 %v2639, 0.0
  %v2858 = vmax.f32 %v2641, 0.0
  %v2859 = vmax.f32 %v2793, 0.0
  %v2860 = vmax.f32 %v2645, 0.0
  %v2861 = vmax.f32 %v2647, 0.0
  %v2862 = vmax.f32 %v2798, 0.0
  %v2863 = vmax.f32 %v2651, 0.0
  %v2864 = vmax.f32 %v2653, 0.0
  %v2865 = vmax.f32 %v2803, 0.0
  %v2866 = vmax.f32 %v2657, 0.0
  %v2867 = vmax.f32 %v2659, 0.0
  %v2868 = vmax.f32 %v2808, 0.0
  %v2869 = vmax.f32 %v2663, 0.0
  %v2870 = vmax.f32 %v2665, 0.0
  %v2871 = vmax.f32 %v2813, 0.0
  %v2872 = vmax.f32 %v2669, 0.0
  %v2873 = vmax.f32 %v2671, 0.0
  %v2874 = vmax.f32 %v2818, 0.0
  %v2875 = vmax.f32 %v2675, 0.0
  %v2876 = vmax.f32 %v2677, 0.0
  %v2877 = vmax.f32 %v2823, 0.0
  %v2878 = vmax.f32 %v2681, 0.0
  %v2879 = vmax.f32 %v2683, 0.0
  %v2880 = vmax.f32 %v2828, 0.0
  %v2881 = vmax.f32 %v2687, 0.0
  %v2882 = vmax.f32 %v2689, 0.0
  %v2883 = vmax.f32 %v2833, 0.0
  %s2884 = scalar_lea.vmem %s3, 640
  %v2885 = vld [vmem:[%s2884] sm:$0xff]
  %v2886 = vld [vmem:[%s2884 + $0x8] sm:$0xff]
  %v2887 = vld [vmem:[%s2884 + $0x10] sm:$0xff]
  %v2888 = vld [vmem:[%s2884 + $0x18] sm:$0xff]
  %v2889 = vld [vmem:[%s2884 + $0x20] sm:$0xff]
  %v2890 = vld [vmem:[%s2884 + $0x28] sm:$0xff]
  %v2891 = vld [vmem:[%s2884 + $0x30] sm:$0xff]
  %v2892 = vld [vmem:[%s2884 + $0x38] sm:$0xff]
  %v2893 = vld [vmem:[%s2884 + $0x40] sm:$0xff]
  %v2894 = vld [vmem:[%s2884 + $0x48] sm:$0xff]
  %v2895 = vld [vmem:[%s2884 + $0x50] sm:$0xff]
  %v2896 = vld [vmem:[%s2884 + $0x58] sm:$0xff]
  %v2897 = vld [vmem:[%s2884 + $0x60] sm:$0xff]
  %v2898 = vld [vmem:[%s2884 + $0x68] sm:$0xff]
  %v2899 = vld [vmem:[%s2884 + $0x70] sm:$0xff]
  %v2900 = vld [vmem:[%s2884 + $0x78] sm:$0xff]
  %s2901 = scalar_lea.vmem %s4, 640
  %v2902 = vld [vmem:[%s2901] sm:$0xff]
  %v2903 = vld [vmem:[%s2901 + $0x8] sm:$0xff]
  %v2904 = vld [vmem:[%s2901 + $0x10] sm:$0xff]
  %v2905 = vld [vmem:[%s2901 + $0x18] sm:$0xff]
  %v2906 = vld [vmem:[%s2901 + $0x20] sm:$0xff]
  %v2907 = vld [vmem:[%s2901 + $0x28] sm:$0xff]
  %v2908 = vld [vmem:[%s2901 + $0x30] sm:$0xff]
  %v2909 = vld [vmem:[%s2901 + $0x38] sm:$0xff]
  %v2910 = vld [vmem:[%s2901 + $0x40] sm:$0xff]
  %v2911 = vld [vmem:[%s2901 + $0x48] sm:$0xff]
  %v2912 = vld [vmem:[%s2901 + $0x50] sm:$0xff]
  %v2913 = vld [vmem:[%s2901 + $0x58] sm:$0xff]
  %v2914 = vld [vmem:[%s2901 + $0x60] sm:$0xff]
  %v2915 = vld [vmem:[%s2901 + $0x68] sm:$0xff]
  %v2916 = vld [vmem:[%s2901 + $0x70] sm:$0xff]
  %v2917 = vld [vmem:[%s2901 + $0x78] sm:$0xff]
  %2919 = vset.pattern.permute.xlu0 0
  %2920 = vperm.xlu0 %2919, %v2902
  %v2921 = vpop.permute.xlu0 %2920
  %2924 = vset.pattern.permute.xlu0 0
  %2925 = vperm.xlu0 %2924, %v2903
  %v2926 = vpop.permute.xlu0 %2925
  %2929 = vset.pattern.permute.xlu0 0
  %2930 = vperm.xlu0 %2929, %v2904
  %v2931 = vpop.permute.xlu0 %2930
  %2934 = vset.pattern.permute.xlu0 0
  %2935 = vperm.xlu0 %2934, %v2905
  %v2936 = vpop.permute.xlu0 %2935
  %2939 = vset.pattern.permute.xlu0 0
  %2940 = vperm.xlu0 %2939, %v2906
  %v2941 = vpop.permute.xlu0 %2940
  %2944 = vset.pattern.permute.xlu0 0
  %2945 = vperm.xlu0 %2944, %v2907
  %v2946 = vpop.permute.xlu0 %2945
  %2949 = vset.pattern.permute.xlu0 0
  %2950 = vperm.xlu0 %2949, %v2908
  %v2951 = vpop.permute.xlu0 %2950
  %2954 = vset.pattern.permute.xlu0 0
  %2955 = vperm.xlu0 %2954, %v2909
  %v2956 = vpop.permute.xlu0 %2955
  %2959 = vset.pattern.permute.xlu0 0
  %2960 = vperm.xlu0 %2959, %v2910
  %v2961 = vpop.permute.xlu0 %2960
  %2964 = vset.pattern.permute.xlu0 0
  %2965 = vperm.xlu0 %2964, %v2911
  %v2966 = vpop.permute.xlu0 %2965
  %2969 = vset.pattern.permute.xlu0 0
  %2970 = vperm.xlu0 %2969, %v2912
  %v2971 = vpop.permute.xlu0 %2970
  %2974 = vset.pattern.permute.xlu0 0
  %2975 = vperm.xlu0 %2974, %v2913
  %v2976 = vpop.permute.xlu0 %2975
  %2979 = vset.pattern.permute.xlu0 0
  %2980 = vperm.xlu0 %2979, %v2914
  %v2981 = vpop.permute.xlu0 %2980
  %2984 = vset.pattern.permute.xlu0 0
  %2985 = vperm.xlu0 %2984, %v2915
  %v2986 = vpop.permute.xlu0 %2985
  %2989 = vset.pattern.permute.xlu0 0
  %2990 = vperm.xlu0 %2989, %v2916
  %v2991 = vpop.permute.xlu0 %2990
  %2994 = vset.pattern.permute.xlu0 0
  %2995 = vperm.xlu0 %2994, %v2917
  %v2996 = vpop.permute.xlu0 %2995
  %2998 = vmatprep.subr.mxu0 %v2882
  %2999 = vmatpush1.msra.mxu0 %v2881
  %3000 = vmatprep.subr.mxu0 %v2879
  %3001 = vmatpush1.msra.mxu0 %v2878
  %3002 = vmatprep.subr.mxu0 %v2876
  %3003 = vmatpush1.msra.mxu0 %v2875
  %3004 = vmatprep.subr.mxu0 %v2873
  %3005 = vmatpush1.msra.mxu0 %v2872
  %3006 = vmatprep.subr.mxu0 %v2870
  %3007 = vmatpush1.msra.mxu0 %v2869
  %3008 = vmatprep.subr.mxu0 %v2867
  %3009 = vmatpush1.msra.mxu0 %v2866
  %3010 = vmatprep.subr.mxu0 %v2864
  %3011 = vmatpush1.msra.mxu0 %v2863
  %3012 = vmatprep.subr.mxu0 %v2861
  %3013 = vmatpush1.msra.mxu0 %v2860
  %3014 = vmatprep.subr.mxu0 %v2858
  %3015 = vmatpush1.msra.mxu0 %v2857
  %3016 = vmatprep.subr.mxu0 %v2855
  %3017 = vmatpush1.msra.mxu0 %v2854
  %3018 = vmatprep.subr.mxu0 %v2852
  %3019 = vmatpush1.msra.mxu0 %v2851
  %3020 = vmatprep.subr.mxu0 %v2849
  %3021 = vmatpush1.msra.mxu0 %v2848
  %3022 = vmatprep.subr.mxu0 %v2846
  %3023 = vmatpush1.msra.mxu0 %v2845
  %3024 = vmatprep.subr.mxu0 %v2843
  %3025 = vmatpush1.msra.mxu0 %v2842
  %3026 = vmatprep.subr.mxu0 %v2840
  %3027 = vmatpush1.msra.mxu0 %v2839
  %3028 = vmatprep.subr.mxu0 %v2837
  %3029 = vmatpush1.msra.mxu0 %v2836
  %3030 = vmatprep.subr.mxu0 0.0
  %3031 = vmatpush2.msra.mxu0 0.0
  %3032 = vmatprep.subr.mxu0 0.0
  %3033 = vmatpush2.msra.mxu0 0.0
  %3034 = vmatprep.subr.mxu0 0.0
  %3035 = vmatpush2.msra.mxu0 0.0
  %3036 = vmatprep.subr.mxu0 0.0
  %3037 = vmatpush2.msra.mxu0 0.0
  %3038 = vmatprep.subr.mxu0 0.0
  %3039 = vmatpush2.msra.mxu0 0.0
  %3040 = vmatprep.subr.mxu0 0.0
  %3041 = vmatpush2.msra.mxu0 0.0
  %3042 = vmatprep.subr.mxu0 0.0
  %3043 = vmatpush2.msra.mxu0 0.0
  %3044 = vmatprep.subr.mxu0 0.0
  %3045 = vmatpush2.msra.mxu0 0.0
  %3046 = vmatprep.subr.mxu0 0.0
  %3047 = vmatpush2.msra.mxu0 0.0
  %3048 = vmatprep.subr.mxu0 0.0
  %3049 = vmatpush2.msra.mxu0 0.0
  %3050 = vmatprep.subr.mxu0 0.0
  %3051 = vmatpush2.msra.mxu0 0.0
  %3052 = vmatprep.subr.mxu0 0.0
  %3053 = vmatpush2.msra.mxu0 0.0
  %3054 = vmatprep.subr.mxu0 0.0
  %3055 = vmatpush2.msra.mxu0 0.0
  %3056 = vmatprep.subr.mxu0 0.0
  %3057 = vmatpush2.msra.mxu0 0.0
  %3058 = vmatprep.subr.mxu0 0.0
  %3059 = vmatpush2.msra.mxu0 0.0
  %3060 = vmatprep.subr.mxu0 0.0
  %3061 = vmatpush2.msra.mxu0 0.0
  %3062 = vmatprep.mubr.f32.mxu0 0.0
  %3063 = vmatmul.mubr.f32.gmra.mxu0 %v2885
  %v3064 = vpop.f32.mrf.mxu0
  %v3065 = vadd.f32 %v2921, %v3064
  %v3066 = vpop.f32.mrf.mxu0
  %v3067 = vadd.f32 %v2921, %v3066
  %3068 = vmatprep.mubr.f32.mxu0 0.0
  %3069 = vmatmul.mubr.f32.gmra.mxu0 %v2886
  %v3070 = vpop.f32.mrf.mxu0
  %v3071 = vadd.f32 %v2926, %v3070
  %v3072 = vpop.f32.mrf.mxu0
  %v3073 = vadd.f32 %v2926, %v3072
  %3074 = vmatprep.mubr.f32.mxu0 0.0
  %3075 = vmatmul.mubr.f32.gmra.mxu0 %v2887
  %v3076 = vpop.f32.mrf.mxu0
  %v3077 = vadd.f32 %v2931, %v3076
  %v3078 = vpop.f32.mrf.mxu0
  %v3079 = vadd.f32 %v2931, %v3078
  %3080 = vmatprep.mubr.f32.mxu0 0.0
  %3081 = vmatmul.mubr.f32.gmra.mxu0 %v2888
  %v3082 = vpop.f32.mrf.mxu0
  %v3083 = vadd.f32 %v2936, %v3082
  %v3084 = vpop.f32.mrf.mxu0
  %v3085 = vadd.f32 %v2936, %v3084
  %3086 = vmatprep.mubr.f32.mxu0 0.0
  %3087 = vmatmul.mubr.f32.gmra.mxu0 %v2889
  %v3088 = vpop.f32.mrf.mxu0
  %v3089 = vadd.f32 %v2941, %v3088
  %v3090 = vpop.f32.mrf.mxu0
  %v3091 = vadd.f32 %v2941, %v3090
  %3092 = vmatprep.mubr.f32.mxu0 0.0
  %3093 = vmatmul.mubr.f32.gmra.mxu0 %v2890
  %v3094 = vpop.f32.mrf.mxu0
  %v3095 = vadd.f32 %v2946, %v3094
  %v3096 = vpop.f32.mrf.mxu0
  %v3097 = vadd.f32 %v2946, %v3096
  %3098 = vmatprep.mubr.f32.mxu0 0.0
  %3099 = vmatmul.mubr.f32.gmra.mxu0 %v2891
  %v3100 = vpop.f32.mrf.mxu0
  %v3101 = vadd.f32 %v2951, %v3100
  %v3102 = vpop.f32.mrf.mxu0
  %v3103 = vadd.f32 %v2951, %v3102
  %3104 = vmatprep.mubr.f32.mxu0 0.0
  %3105 = vmatmul.mubr.f32.gmra.mxu0 %v2892
  %v3106 = vpop.f32.mrf.mxu0
  %v3107 = vadd.f32 %v2956, %v3106
  %v3108 = vpop.f32.mrf.mxu0
  %v3109 = vadd.f32 %v2956, %v3108
  %3110 = vmatprep.mubr.f32.mxu0 0.0
  %3111 = vmatmul.mubr.f32.gmra.mxu0 %v2893
  %v3112 = vpop.f32.mrf.mxu0
  %v3113 = vadd.f32 %v2961, %v3112
  %v3114 = vpop.f32.mrf.mxu0
  %v3115 = vadd.f32 %v2961, %v3114
  %3116 = vmatprep.mubr.f32.mxu0 0.0
  %3117 = vmatmul.mubr.f32.gmra.mxu0 %v2894
  %v3118 = vpop.f32.mrf.mxu0
  %v3119 = vadd.f32 %v2966, %v3118
  %v3120 = vpop.f32.mrf.mxu0
  %v3121 = vadd.f32 %v2966, %v3120
  %3122 = vmatprep.mubr.f32.mxu0 0.0
  %3123 = vmatmul.mubr.f32.gmra.mxu0 %v2895
  %v3124 = vpop.f32.mrf.mxu0
  %v3125 = vadd.f32 %v2971, %v3124
  %v3126 = vpop.f32.mrf.mxu0
  %v3127 = vadd.f32 %v2971, %v3126
  %3128 = vmatprep.mubr.f32.mxu0 0.0
  %3129 = vmatmul.mubr.f32.gmra.mxu0 %v2896
  %v3130 = vpop.f32.mrf.mxu0
  %v3131 = vadd.f32 %v2976, %v3130
  %v3132 = vpop.f32.mrf.mxu0
  %v3133 = vadd.f32 %v2976, %v3132
  %3134 = vmatprep.mubr.f32.mxu0 0.0
  %3135 = vmatmul.mubr.f32.gmra.mxu0 %v2897
  %v3136 = vpop.f32.mrf.mxu0
  %v3137 = vadd.f32 %v2981, %v3136
  %v3138 = vpop.f32.mrf.mxu0
  %v3139 = vadd.f32 %v2981, %v3138
  %3140 = vmatprep.mubr.f32.mxu0 0.0
  %3141 = vmatmul.mubr.f32.gmra.mxu0 %v2898
  %v3142 = vpop.f32.mrf.mxu0
  %v3143 = vadd.f32 %v2986, %v3142
  %v3144 = vpop.f32.mrf.mxu0
  %v3145 = vadd.f32 %v2986, %v3144
  %3146 = vmatprep.mubr.f32.mxu0 0.0
  %3147 = vmatmul.mubr.f32.gmra.mxu0 %v2899
  %v3148 = vpop.f32.mrf.mxu0
  %v3149 = vadd.f32 %v2991, %v3148
  %v3150 = vpop.f32.mrf.mxu0
  %v3151 = vadd.f32 %v2991, %v3150
  %3152 = vmatprep.mubr.f32.mxu0 0.0
  %3153 = vmatmul.mubr.f32.gmra.mxu0 %v2900
  %v3154 = vpop.f32.mrf.mxu0
  %v3155 = vadd.f32 %v2996, %v3154
  %v3156 = vpop.f32.mrf.mxu0
  %v3157 = vadd.f32 %v2996, %v3156
  %3158 = vdwg.mxu0
  %3159 = vmatprep.subr.mxu0 0.0
  %3160 = vmatpush1.msra.mxu0 %v2883
  %3161 = vmatprep.subr.mxu0 0.0
  %3162 = vmatpush1.msra.mxu0 %v2880
  %3163 = vmatprep.subr.mxu0 0.0
  %3164 = vmatpush1.msra.mxu0 %v2877
  %3165 = vmatprep.subr.mxu0 0.0
  %3166 = vmatpush1.msra.mxu0 %v2874
  %3167 = vmatprep.subr.mxu0 0.0
  %3168 = vmatpush1.msra.mxu0 %v2871
  %3169 = vmatprep.subr.mxu0 0.0
  %3170 = vmatpush1.msra.mxu0 %v2868
  %3171 = vmatprep.subr.mxu0 0.0
  %3172 = vmatpush1.msra.mxu0 %v2865
  %3173 = vmatprep.subr.mxu0 0.0
  %3174 = vmatpush1.msra.mxu0 %v2862
  %3175 = vmatprep.subr.mxu0 0.0
  %3176 = vmatpush1.msra.mxu0 %v2859
  %3177 = vmatprep.subr.mxu0 0.0
  %3178 = vmatpush1.msra.mxu0 %v2856
  %3179 = vmatprep.subr.mxu0 0.0
  %3180 = vmatpush1.msra.mxu0 %v2853
  %3181 = vmatprep.subr.mxu0 0.0
  %3182 = vmatpush1.msra.mxu0 %v2850
  %3183 = vmatprep.subr.mxu0 0.0
  %3184 = vmatpush1.msra.mxu0 %v2847
  %3185 = vmatprep.subr.mxu0 0.0
  %3186 = vmatpush1.msra.mxu0 %v2844
  %3187 = vmatprep.subr.mxu0 0.0
  %3188 = vmatpush1.msra.mxu0 %v2841
  %3189 = vmatprep.subr.mxu0 0.0
  %3190 = vmatpush1.msra.mxu0 %v2838
  %3191 = vmatprep.subr.mxu0 0.0
  %3192 = vmatpush2.msra.mxu0 0.0
  %3193 = vmatprep.subr.mxu0 0.0
  %3194 = vmatpush2.msra.mxu0 0.0
  %3195 = vmatprep.subr.mxu0 0.0
  %3196 = vmatpush2.msra.mxu0 0.0
  %3197 = vmatprep.subr.mxu0 0.0
  %3198 = vmatpush2.msra.mxu0 0.0
  %3199 = vmatprep.subr.mxu0 0.0
  %3200 = vmatpush2.msra.mxu0 0.0
  %3201 = vmatprep.subr.mxu0 0.0
  %3202 = vmatpush2.msra.mxu0 0.0
  %3203 = vmatprep.subr.mxu0 0.0
  %3204 = vmatpush2.msra.mxu0 0.0
  %3205 = vmatprep.subr.mxu0 0.0
  %3206 = vmatpush2.msra.mxu0 0.0
  %3207 = vmatprep.subr.mxu0 0.0
  %3208 = vmatpush2.msra.mxu0 0.0
  %3209 = vmatprep.subr.mxu0 0.0
  %3210 = vmatpush2.msra.mxu0 0.0
  %3211 = vmatprep.subr.mxu0 0.0
  %3212 = vmatpush2.msra.mxu0 0.0
  %3213 = vmatprep.subr.mxu0 0.0
  %3214 = vmatpush2.msra.mxu0 0.0
  %3215 = vmatprep.subr.mxu0 0.0
  %3216 = vmatpush2.msra.mxu0 0.0
  %3217 = vmatprep.subr.mxu0 0.0
  %3218 = vmatpush2.msra.mxu0 0.0
  %3219 = vmatprep.subr.mxu0 0.0
  %3220 = vmatpush2.msra.mxu0 0.0
  %3221 = vmatprep.subr.mxu0 0.0
  %3222 = vmatpush2.msra.mxu0 0.0
  %3223 = vmatprep.mubr.f32.mxu0 0.0
  %3224 = vmatmul.mubr.f32.gmra.mxu0 %v2885
  %v3225 = vpop.f32.mrf.mxu0
  %v3226 = vadd.f32 %v2921, %v3225
  %v3227 = vpop.f32.mrf.mxu0
  %3228 = vmatprep.mubr.f32.mxu0 0.0
  %3229 = vmatmul.mubr.f32.gmra.mxu0 %v2886
  %v3230 = vpop.f32.mrf.mxu0
  %v3231 = vadd.f32 %v2926, %v3230
  %v3232 = vpop.f32.mrf.mxu0
  %3233 = vmatprep.mubr.f32.mxu0 0.0
  %3234 = vmatmul.mubr.f32.gmra.mxu0 %v2887
  %v3235 = vpop.f32.mrf.mxu0
  %v3236 = vadd.f32 %v2931, %v3235
  %v3237 = vpop.f32.mrf.mxu0
  %3238 = vmatprep.mubr.f32.mxu0 0.0
  %3239 = vmatmul.mubr.f32.gmra.mxu0 %v2888
  %v3240 = vpop.f32.mrf.mxu0
  %v3241 = vadd.f32 %v2936, %v3240
  %v3242 = vpop.f32.mrf.mxu0
  %3243 = vmatprep.mubr.f32.mxu0 0.0
  %3244 = vmatmul.mubr.f32.gmra.mxu0 %v2889
  %v3245 = vpop.f32.mrf.mxu0
  %v3246 = vadd.f32 %v2941, %v3245
  %v3247 = vpop.f32.mrf.mxu0
  %3248 = vmatprep.mubr.f32.mxu0 0.0
  %3249 = vmatmul.mubr.f32.gmra.mxu0 %v2890
  %v3250 = vpop.f32.mrf.mxu0
  %v3251 = vadd.f32 %v2946, %v3250
  %v3252 = vpop.f32.mrf.mxu0
  %3253 = vmatprep.mubr.f32.mxu0 0.0
  %3254 = vmatmul.mubr.f32.gmra.mxu0 %v2891
  %v3255 = vpop.f32.mrf.mxu0
  %v3256 = vadd.f32 %v2951, %v3255
  %v3257 = vpop.f32.mrf.mxu0
  %3258 = vmatprep.mubr.f32.mxu0 0.0
  %3259 = vmatmul.mubr.f32.gmra.mxu0 %v2892
  %v3260 = vpop.f32.mrf.mxu0
  %v3261 = vadd.f32 %v2956, %v3260
  %v3262 = vpop.f32.mrf.mxu0
  %3263 = vmatprep.mubr.f32.mxu0 0.0
  %3264 = vmatmul.mubr.f32.gmra.mxu0 %v2893
  %v3265 = vpop.f32.mrf.mxu0
  %v3266 = vadd.f32 %v2961, %v3265
  %v3267 = vpop.f32.mrf.mxu0
  %3268 = vmatprep.mubr.f32.mxu0 0.0
  %3269 = vmatmul.mubr.f32.gmra.mxu0 %v2894
  %v3270 = vpop.f32.mrf.mxu0
  %v3271 = vadd.f32 %v2966, %v3270
  %v3272 = vpop.f32.mrf.mxu0
  %3273 = vmatprep.mubr.f32.mxu0 0.0
  %3274 = vmatmul.mubr.f32.gmra.mxu0 %v2895
  %v3275 = vpop.f32.mrf.mxu0
  %v3276 = vadd.f32 %v2971, %v3275
  %v3277 = vpop.f32.mrf.mxu0
  %3278 = vmatprep.mubr.f32.mxu0 0.0
  %3279 = vmatmul.mubr.f32.gmra.mxu0 %v2896
  %v3280 = vpop.f32.mrf.mxu0
  %v3281 = vadd.f32 %v2976, %v3280
  %v3282 = vpop.f32.mrf.mxu0
  %3283 = vmatprep.mubr.f32.mxu0 0.0
  %3284 = vmatmul.mubr.f32.gmra.mxu0 %v2897
  %v3285 = vpop.f32.mrf.mxu0
  %v3286 = vadd.f32 %v2981, %v3285
  %v3287 = vpop.f32.mrf.mxu0
  %3288 = vmatprep.mubr.f32.mxu0 0.0
  %3289 = vmatmul.mubr.f32.gmra.mxu0 %v2898
  %v3290 = vpop.f32.mrf.mxu0
  %v3291 = vadd.f32 %v2986, %v3290
  %v3292 = vpop.f32.mrf.mxu0
  %3293 = vmatprep.mubr.f32.mxu0 0.0
  %3294 = vmatmul.mubr.f32.gmra.mxu0 %v2899
  %v3295 = vpop.f32.mrf.mxu0
  %v3296 = vadd.f32 %v2991, %v3295
  %v3297 = vpop.f32.mrf.mxu0
  %3298 = vmatprep.mubr.f32.mxu0 0.0
  %3299 = vmatmul.mubr.f32.gmra.mxu0 %v2900
  %v3300 = vpop.f32.mrf.mxu0
  %v3301 = vadd.f32 %v2996, %v3300
  %v3302 = vpop.f32.mrf.mxu0
  %3303 = vdwg.mxu0
  %v3304 = vmax.f32 %v3065, 0.0
  %v3305 = vmax.f32 %v3067, 0.0
  %v3306 = vmax.f32 %v3226, 0.0
  %v3307 = vmax.f32 %v3071, 0.0
  %v3308 = vmax.f32 %v3073, 0.0
  %v3309 = vmax.f32 %v3231, 0.0
  %v3310 = vmax.f32 %v3077, 0.0
  %v3311 = vmax.f32 %v3079, 0.0
  %v3312 = vmax.f32 %v3236, 0.0
  %v3313 = vmax.f32 %v3083, 0.0
  %v3314 = vmax.f32 %v3085, 0.0
  %v3315 = vmax.f32 %v3241, 0.0
  %v3316 = vmax.f32 %v3089, 0.0
  %v3317 = vmax.f32 %v3091, 0.0
  %v3318 = vmax.f32 %v3246, 0.0
  %v3319 = vmax.f32 %v3095, 0.0
  %v3320 = vmax.f32 %v3097, 0.0
  %v3321 = vmax.f32 %v3251, 0.0
  %v3322 = vmax.f32 %v3101, 0.0
  %v3323 = vmax.f32 %v3103, 0.0
  %v3324 = vmax.f32 %v3256, 0.0
  %v3325 = vmax.f32 %v3107, 0.0
  %v3326 = vmax.f32 %v3109, 0.0
  %v3327 = vmax.f32 %v3261, 0.0
  %v3328 = vmax.f32 %v3113, 0.0
  %v3329 = vmax.f32 %v3115, 0.0
  %v3330 = vmax.f32 %v3266, 0.0
  %v3331 = vmax.f32 %v3119, 0.0
  %v3332 = vmax.f32 %v3121, 0.0
  %v3333 = vmax.f32 %v3271, 0.0
  %v3334 = vmax.f32 %v3125, 0.0
  %v3335 = vmax.f32 %v3127, 0.0
  %v3336 = vmax.f32 %v3276, 0.0
  %v3337 = vmax.f32 %v3131, 0.0
  %v3338 = vmax.f32 %v3133, 0.0
  %v3339 = vmax.f32 %v3281, 0.0
  %v3340 = vmax.f32 %v3137, 0.0
  %v3341 = vmax.f32 %v3139, 0.0
  %v3342 = vmax.f32 %v3286, 0.0
  %v3343 = vmax.f32 %v3143, 0.0
  %v3344 = vmax.f32 %v3145, 0.0
  %v3345 = vmax.f32 %v3291, 0.0
  %v3346 = vmax.f32 %v3149, 0.0
  %v3347 = vmax.f32 %v3151, 0.0
  %v3348 = vmax.f32 %v3296, 0.0
  %v3349 = vmax.f32 %v3155, 0.0
  %v3350 = vmax.f32 %v3157, 0.0
  %v3351 = vmax.f32 %v3301, 0.0
  %s3352 = scalar_lea.vmem %s3, 768
  %v3353 = vld [vmem:[%s3352] sm:$0xff]
  %v3354 = vld [vmem:[%s3352 + $0x8] sm:$0xff]
  %v3355 = vld [vmem:[%s3352 + $0x10] sm:$0xff]
  %v3356 = vld [vmem:[%s3352 + $0x18] sm:$0xff]
  %v3357 = vld [vmem:[%s3352 + $0x20] sm:$0xff]
  %v3358 = vld [vmem:[%s3352 + $0x28] sm:$0xff]
  %v3359 = vld [vmem:[%s3352 + $0x30] sm:$0xff]
  %v3360 = vld [vmem:[%s3352 + $0x38] sm:$0xff]
  %v3361 = vld [vmem:[%s3352 + $0x40] sm:$0xff]
  %v3362 = vld [vmem:[%s3352 + $0x48] sm:$0xff]
  %v3363 = vld [vmem:[%s3352 + $0x50] sm:$0xff]
  %v3364 = vld [vmem:[%s3352 + $0x58] sm:$0xff]
  %v3365 = vld [vmem:[%s3352 + $0x60] sm:$0xff]
  %v3366 = vld [vmem:[%s3352 + $0x68] sm:$0xff]
  %v3367 = vld [vmem:[%s3352 + $0x70] sm:$0xff]
  %v3368 = vld [vmem:[%s3352 + $0x78] sm:$0xff]
  %s3369 = scalar_lea.vmem %s4, 768
  %v3370 = vld [vmem:[%s3369] sm:$0xff]
  %v3371 = vld [vmem:[%s3369 + $0x8] sm:$0xff]
  %v3372 = vld [vmem:[%s3369 + $0x10] sm:$0xff]
  %v3373 = vld [vmem:[%s3369 + $0x18] sm:$0xff]
  %v3374 = vld [vmem:[%s3369 + $0x20] sm:$0xff]
  %v3375 = vld [vmem:[%s3369 + $0x28] sm:$0xff]
  %v3376 = vld [vmem:[%s3369 + $0x30] sm:$0xff]
  %v3377 = vld [vmem:[%s3369 + $0x38] sm:$0xff]
  %v3378 = vld [vmem:[%s3369 + $0x40] sm:$0xff]
  %v3379 = vld [vmem:[%s3369 + $0x48] sm:$0xff]
  %v3380 = vld [vmem:[%s3369 + $0x50] sm:$0xff]
  %v3381 = vld [vmem:[%s3369 + $0x58] sm:$0xff]
  %v3382 = vld [vmem:[%s3369 + $0x60] sm:$0xff]
  %v3383 = vld [vmem:[%s3369 + $0x68] sm:$0xff]
  %v3384 = vld [vmem:[%s3369 + $0x70] sm:$0xff]
  %v3385 = vld [vmem:[%s3369 + $0x78] sm:$0xff]
  %3387 = vset.pattern.permute.xlu0 0
  %3388 = vperm.xlu0 %3387, %v3370
  %v3389 = vpop.permute.xlu0 %3388
  %3392 = vset.pattern.permute.xlu0 0
  %3393 = vperm.xlu0 %3392, %v3371
  %v3394 = vpop.permute.xlu0 %3393
  %3397 = vset.pattern.permute.xlu0 0
  %3398 = vperm.xlu0 %3397, %v3372
  %v3399 = vpop.permute.xlu0 %3398
  %3402 = vset.pattern.permute.xlu0 0
  %3403 = vperm.xlu0 %3402, %v3373
  %v3404 = vpop.permute.xlu0 %3403
  %3407 = vset.pattern.permute.xlu0 0
  %3408 = vperm.xlu0 %3407, %v3374
  %v3409 = vpop.permute.xlu0 %3408
  %3412 = vset.pattern.permute.xlu0 0
  %3413 = vperm.xlu0 %3412, %v3375
  %v3414 = vpop.permute.xlu0 %3413
  %3417 = vset.pattern.permute.xlu0 0
  %3418 = vperm.xlu0 %3417, %v3376
  %v3419 = vpop.permute.xlu0 %3418
  %3422 = vset.pattern.permute.xlu0 0
  %3423 = vperm.xlu0 %3422, %v3377
  %v3424 = vpop.permute.xlu0 %3423
  %3427 = vset.pattern.permute.xlu0 0
  %3428 = vperm.xlu0 %3427, %v3378
  %v3429 = vpop.permute.xlu0 %3428
  %3432 = vset.pattern.permute.xlu0 0
  %3433 = vperm.xlu0 %3432, %v3379
  %v3434 = vpop.permute.xlu0 %3433
  %3437 = vset.pattern.permute.xlu0 0
  %3438 = vperm.xlu0 %3437, %v3380
  %v3439 = vpop.permute.xlu0 %3438
  %3442 = vset.pattern.permute.xlu0 0
  %3443 = vperm.xlu0 %3442, %v3381
  %v3444 = vpop.permute.xlu0 %3443
  %3447 = vset.pattern.permute.xlu0 0
  %3448 = vperm.xlu0 %3447, %v3382
  %v3449 = vpop.permute.xlu0 %3448
  %3452 = vset.pattern.permute.xlu0 0
  %3453 = vperm.xlu0 %3452, %v3383
  %v3454 = vpop.permute.xlu0 %3453
  %3457 = vset.pattern.permute.xlu0 0
  %3458 = vperm.xlu0 %3457, %v3384
  %v3459 = vpop.permute.xlu0 %3458
  %3462 = vset.pattern.permute.xlu0 0
  %3463 = vperm.xlu0 %3462, %v3385
  %v3464 = vpop.permute.xlu0 %3463
  %3466 = vmatprep.subr.mxu0 %v3350
  %3467 = vmatpush1.msra.mxu0 %v3349
  %3468 = vmatprep.subr.mxu0 %v3347
  %3469 = vmatpush1.msra.mxu0 %v3346
  %3470 = vmatprep.subr.mxu0 %v3344
  %3471 = vmatpush1.msra.mxu0 %v3343
  %3472 = vmatprep.subr.mxu0 %v3341
  %3473 = vmatpush1.msra.mxu0 %v3340
  %3474 = vmatprep.subr.mxu0 %v3338
  %3475 = vmatpush1.msra.mxu0 %v3337
  %3476 = vmatprep.subr.mxu0 %v3335
  %3477 = vmatpush1.msra.mxu0 %v3334
  %3478 = vmatprep.subr.mxu0 %v3332
  %3479 = vmatpush1.msra.mxu0 %v3331
  %3480 = vmatprep.subr.mxu0 %v3329
  %3481 = vmatpush1.msra.mxu0 %v3328
  %3482 = vmatprep.subr.mxu0 %v3326
  %3483 = vmatpush1.msra.mxu0 %v3325
  %3484 = vmatprep.subr.mxu0 %v3323
  %3485 = vmatpush1.msra.mxu0 %v3322
  %3486 = vmatprep.subr.mxu0 %v3320
  %3487 = vmatpush1.msra.mxu0 %v3319
  %3488 = vmatprep.subr.mxu0 %v3317
  %3489 = vmatpush1.msra.mxu0 %v3316
  %3490 = vmatprep.subr.mxu0 %v3314
  %3491 = vmatpush1.msra.mxu0 %v3313
  %3492 = vmatprep.subr.mxu0 %v3311
  %3493 = vmatpush1.msra.mxu0 %v3310
  %3494 = vmatprep.subr.mxu0 %v3308
  %3495 = vmatpush1.msra.mxu0 %v3307
  %3496 = vmatprep.subr.mxu0 %v3305
  %3497 = vmatpush1.msra.mxu0 %v3304
  %3498 = vmatprep.subr.mxu0 0.0
  %3499 = vmatpush2.msra.mxu0 0.0
  %3500 = vmatprep.subr.mxu0 0.0
  %3501 = vmatpush2.msra.mxu0 0.0
  %3502 = vmatprep.subr.mxu0 0.0
  %3503 = vmatpush2.msra.mxu0 0.0
  %3504 = vmatprep.subr.mxu0 0.0
  %3505 = vmatpush2.msra.mxu0 0.0
  %3506 = vmatprep.subr.mxu0 0.0
  %3507 = vmatpush2.msra.mxu0 0.0
  %3508 = vmatprep.subr.mxu0 0.0
  %3509 = vmatpush2.msra.mxu0 0.0
  %3510 = vmatprep.subr.mxu0 0.0
  %3511 = vmatpush2.msra.mxu0 0.0
  %3512 = vmatprep.subr.mxu0 0.0
  %3513 = vmatpush2.msra.mxu0 0.0
  %3514 = vmatprep.subr.mxu0 0.0
  %3515 = vmatpush2.msra.mxu0 0.0
  %3516 = vmatprep.subr.mxu0 0.0
  %3517 = vmatpush2.msra.mxu0 0.0
  %3518 = vmatprep.subr.mxu0 0.0
  %3519 = vmatpush2.msra.mxu0 0.0
  %3520 = vmatprep.subr.mxu0 0.0
  %3521 = vmatpush2.msra.mxu0 0.0
  %3522 = vmatprep.subr.mxu0 0.0
  %3523 = vmatpush2.msra.mxu0 0.0
  %3524 = vmatprep.subr.mxu0 0.0
  %3525 = vmatpush2.msra.mxu0 0.0
  %3526 = vmatprep.subr.mxu0 0.0
  %3527 = vmatpush2.msra.mxu0 0.0
  %3528 = vmatprep.subr.mxu0 0.0
  %3529 = vmatpush2.msra.mxu0 0.0
  %3530 = vmatprep.mubr.f32.mxu0 0.0
  %3531 = vmatmul.mubr.f32.gmra.mxu0 %v3353
  %v3532 = vpop.f32.mrf.mxu0
  %v3533 = vadd.f32 %v3389, %v3532
  %v3534 = vpop.f32.mrf.mxu0
  %v3535 = vadd.f32 %v3389, %v3534
  %3536 = vmatprep.mubr.f32.mxu0 0.0
  %3537 = vmatmul.mubr.f32.gmra.mxu0 %v3354
  %v3538 = vpop.f32.mrf.mxu0
  %v3539 = vadd.f32 %v3394, %v3538
  %v3540 = vpop.f32.mrf.mxu0
  %v3541 = vadd.f32 %v3394, %v3540
  %3542 = vmatprep.mubr.f32.mxu0 0.0
  %3543 = vmatmul.mubr.f32.gmra.mxu0 %v3355
  %v3544 = vpop.f32.mrf.mxu0
  %v3545 = vadd.f32 %v3399, %v3544
  %v3546 = vpop.f32.mrf.mxu0
  %v3547 = vadd.f32 %v3399, %v3546
  %3548 = vmatprep.mubr.f32.mxu0 0.0
  %3549 = vmatmul.mubr.f32.gmra.mxu0 %v3356
  %v3550 = vpop.f32.mrf.mxu0
  %v3551 = vadd.f32 %v3404, %v3550
  %v3552 = vpop.f32.mrf.mxu0
  %v3553 = vadd.f32 %v3404, %v3552
  %3554 = vmatprep.mubr.f32.mxu0 0.0
  %3555 = vmatmul.mubr.f32.gmra.mxu0 %v3357
  %v3556 = vpop.f32.mrf.mxu0
  %v3557 = vadd.f32 %v3409, %v3556
  %v3558 = vpop.f32.mrf.mxu0
  %v3559 = vadd.f32 %v3409, %v3558
  %3560 = vmatprep.mubr.f32.mxu0 0.0
  %3561 = vmatmul.mubr.f32.gmra.mxu0 %v3358
  %v3562 = vpop.f32.mrf.mxu0
  %v3563 = vadd.f32 %v3414, %v3562
  %v3564 = vpop.f32.mrf.mxu0
  %v3565 = vadd.f32 %v3414, %v3564
  %3566 = vmatprep.mubr.f32.mxu0 0.0
  %3567 = vmatmul.mubr.f32.gmra.mxu0 %v3359
  %v3568 = vpop.f32.mrf.mxu0
  %v3569 = vadd.f32 %v3419, %v3568
  %v3570 = vpop.f32.mrf.mxu0
  %v3571 = vadd.f32 %v3419, %v3570
  %3572 = vmatprep.mubr.f32.mxu0 0.0
  %3573 = vmatmul.mubr.f32.gmra.mxu0 %v3360
  %v3574 = vpop.f32.mrf.mxu0
  %v3575 = vadd.f32 %v3424, %v3574
  %v3576 = vpop.f32.mrf.mxu0
  %v3577 = vadd.f32 %v3424, %v3576
  %3578 = vmatprep.mubr.f32.mxu0 0.0
  %3579 = vmatmul.mubr.f32.gmra.mxu0 %v3361
  %v3580 = vpop.f32.mrf.mxu0
  %v3581 = vadd.f32 %v3429, %v3580
  %v3582 = vpop.f32.mrf.mxu0
  %v3583 = vadd.f32 %v3429, %v3582
  %3584 = vmatprep.mubr.f32.mxu0 0.0
  %3585 = vmatmul.mubr.f32.gmra.mxu0 %v3362
  %v3586 = vpop.f32.mrf.mxu0
  %v3587 = vadd.f32 %v3434, %v3586
  %v3588 = vpop.f32.mrf.mxu0
  %v3589 = vadd.f32 %v3434, %v3588
  %3590 = vmatprep.mubr.f32.mxu0 0.0
  %3591 = vmatmul.mubr.f32.gmra.mxu0 %v3363
  %v3592 = vpop.f32.mrf.mxu0
  %v3593 = vadd.f32 %v3439, %v3592
  %v3594 = vpop.f32.mrf.mxu0
  %v3595 = vadd.f32 %v3439, %v3594
  %3596 = vmatprep.mubr.f32.mxu0 0.0
  %3597 = vmatmul.mubr.f32.gmra.mxu0 %v3364
  %v3598 = vpop.f32.mrf.mxu0
  %v3599 = vadd.f32 %v3444, %v3598
  %v3600 = vpop.f32.mrf.mxu0
  %v3601 = vadd.f32 %v3444, %v3600
  %3602 = vmatprep.mubr.f32.mxu0 0.0
  %3603 = vmatmul.mubr.f32.gmra.mxu0 %v3365
  %v3604 = vpop.f32.mrf.mxu0
  %v3605 = vadd.f32 %v3449, %v3604
  %v3606 = vpop.f32.mrf.mxu0
  %v3607 = vadd.f32 %v3449, %v3606
  %3608 = vmatprep.mubr.f32.mxu0 0.0
  %3609 = vmatmul.mubr.f32.gmra.mxu0 %v3366
  %v3610 = vpop.f32.mrf.mxu0
  %v3611 = vadd.f32 %v3454, %v3610
  %v3612 = vpop.f32.mrf.mxu0
  %v3613 = vadd.f32 %v3454, %v3612
  %3614 = vmatprep.mubr.f32.mxu0 0.0
  %3615 = vmatmul.mubr.f32.gmra.mxu0 %v3367
  %v3616 = vpop.f32.mrf.mxu0
  %v3617 = vadd.f32 %v3459, %v3616
  %v3618 = vpop.f32.mrf.mxu0
  %v3619 = vadd.f32 %v3459, %v3618
  %3620 = vmatprep.mubr.f32.mxu0 0.0
  %3621 = vmatmul.mubr.f32.gmra.mxu0 %v3368
  %v3622 = vpop.f32.mrf.mxu0
  %v3623 = vadd.f32 %v3464, %v3622
  %v3624 = vpop.f32.mrf.mxu0
  %v3625 = vadd.f32 %v3464, %v3624
  %3626 = vdwg.mxu0
  %3627 = vmatprep.subr.mxu0 0.0
  %3628 = vmatpush1.msra.mxu0 %v3351
  %3629 = vmatprep.subr.mxu0 0.0
  %3630 = vmatpush1.msra.mxu0 %v3348
  %3631 = vmatprep.subr.mxu0 0.0
  %3632 = vmatpush1.msra.mxu0 %v3345
  %3633 = vmatprep.subr.mxu0 0.0
  %3634 = vmatpush1.msra.mxu0 %v3342
  %3635 = vmatprep.subr.mxu0 0.0
  %3636 = vmatpush1.msra.mxu0 %v3339
  %3637 = vmatprep.subr.mxu0 0.0
  %3638 = vmatpush1.msra.mxu0 %v3336
  %3639 = vmatprep.subr.mxu0 0.0
  %3640 = vmatpush1.msra.mxu0 %v3333
  %3641 = vmatprep.subr.mxu0 0.0
  %3642 = vmatpush1.msra.mxu0 %v3330
  %3643 = vmatprep.subr.mxu0 0.0
  %3644 = vmatpush1.msra.mxu0 %v3327
  %3645 = vmatprep.subr.mxu0 0.0
  %3646 = vmatpush1.msra.mxu0 %v3324
  %3647 = vmatprep.subr.mxu0 0.0
  %3648 = vmatpush1.msra.mxu0 %v3321
  %3649 = vmatprep.subr.mxu0 0.0
  %3650 = vmatpush1.msra.mxu0 %v3318
  %3651 = vmatprep.subr.mxu0 0.0
  %3652 = vmatpush1.msra.mxu0 %v3315
  %3653 = vmatprep.subr.mxu0 0.0
  %3654 = vmatpush1.msra.mxu0 %v3312
  %3655 = vmatprep.subr.mxu0 0.0
  %3656 = vmatpush1.msra.mxu0 %v3309
  %3657 = vmatprep.subr.mxu0 0.0
  %3658 = vmatpush1.msra.mxu0 %v3306
  %3659 = vmatprep.subr.mxu0 0.0
  %3660 = vmatpush2.msra.mxu0 0.0
  %3661 = vmatprep.subr.mxu0 0.0
  %3662 = vmatpush2.msra.mxu0 0.0
  %3663 = vmatprep.subr.mxu0 0.0
  %3664 = vmatpush2.msra.mxu0 0.0
  %3665 = vmatprep.subr.mxu0 0.0
  %3666 = vmatpush2.msra.mxu0 0.0
  %3667 = vmatprep.subr.mxu0 0.0
  %3668 = vmatpush2.msra.mxu0 0.0
  %3669 = vmatprep.subr.mxu0 0.0
  %3670 = vmatpush2.msra.mxu0 0.0
  %3671 = vmatprep.subr.mxu0 0.0
  %3672 = vmatpush2.msra.mxu0 0.0
  %3673 = vmatprep.subr.mxu0 0.0
  %3674 = vmatpush2.msra.mxu0 0.0
  %3675 = vmatprep.subr.mxu0 0.0
  %3676 = vmatpush2.msra.mxu0 0.0
  %3677 = vmatprep.subr.mxu0 0.0
  %3678 = vmatpush2.msra.mxu0 0.0
  %3679 = vmatprep.subr.mxu0 0.0
  %3680 = vmatpush2.msra.mxu0 0.0
  %3681 = vmatprep.subr.mxu0 0.0
  %3682 = vmatpush2.msra.mxu0 0.0
  %3683 = vmatprep.subr.mxu0 0.0
  %3684 = vmatpush2.msra.mxu0 0.0
  %3685 = vmatprep.subr.mxu0 0.0
  %3686 = vmatpush2.msra.mxu0 0.0
  %3687 = vmatprep.subr.mxu0 0.0
  %3688 = vmatpush2.msra.mxu0 0.0
  %3689 = vmatprep.subr.mxu0 0.0
  %3690 = vmatpush2.msra.mxu0 0.0
  %3691 = vmatprep.mubr.f32.mxu0 0.0
  %3692 = vmatmul.mubr.f32.gmra.mxu0 %v3353
  %v3693 = vpop.f32.mrf.mxu0
  %v3694 = vadd.f32 %v3389, %v3693
  %v3695 = vpop.f32.mrf.mxu0
  %3696 = vmatprep.mubr.f32.mxu0 0.0
  %3697 = vmatmul.mubr.f32.gmra.mxu0 %v3354
  %v3698 = vpop.f32.mrf.mxu0
  %v3699 = vadd.f32 %v3394, %v3698
  %v3700 = vpop.f32.mrf.mxu0
  %3701 = vmatprep.mubr.f32.mxu0 0.0
  %3702 = vmatmul.mubr.f32.gmra.mxu0 %v3355
  %v3703 = vpop.f32.mrf.mxu0
  %v3704 = vadd.f32 %v3399, %v3703
  %v3705 = vpop.f32.mrf.mxu0
  %3706 = vmatprep.mubr.f32.mxu0 0.0
  %3707 = vmatmul.mubr.f32.gmra.mxu0 %v3356
  %v3708 = vpop.f32.mrf.mxu0
  %v3709 = vadd.f32 %v3404, %v3708
  %v3710 = vpop.f32.mrf.mxu0
  %3711 = vmatprep.mubr.f32.mxu0 0.0
  %3712 = vmatmul.mubr.f32.gmra.mxu0 %v3357
  %v3713 = vpop.f32.mrf.mxu0
  %v3714 = vadd.f32 %v3409, %v3713
  %v3715 = vpop.f32.mrf.mxu0
  %3716 = vmatprep.mubr.f32.mxu0 0.0
  %3717 = vmatmul.mubr.f32.gmra.mxu0 %v3358
  %v3718 = vpop.f32.mrf.mxu0
  %v3719 = vadd.f32 %v3414, %v3718
  %v3720 = vpop.f32.mrf.mxu0
  %3721 = vmatprep.mubr.f32.mxu0 0.0
  %3722 = vmatmul.mubr.f32.gmra.mxu0 %v3359
  %v3723 = vpop.f32.mrf.mxu0
  %v3724 = vadd.f32 %v3419, %v3723
  %v3725 = vpop.f32.mrf.mxu0
  %3726 = vmatprep.mubr.f32.mxu0 0.0
  %3727 = vmatmul.mubr.f32.gmra.mxu0 %v3360
  %v3728 = vpop.f32.mrf.mxu0
  %v3729 = vadd.f32 %v3424, %v3728
  %v3730 = vpop.f32.mrf.mxu0
  %3731 = vmatprep.mubr.f32.mxu0 0.0
  %3732 = vmatmul.mubr.f32.gmra.mxu0 %v3361
  %v3733 = vpop.f32.mrf.mxu0
  %v3734 = vadd.f32 %v3429, %v3733
  %v3735 = vpop.f32.mrf.mxu0
  %3736 = vmatprep.mubr.f32.mxu0 0.0
  %3737 = vmatmul.mubr.f32.gmra.mxu0 %v3362
  %v3738 = vpop.f32.mrf.mxu0
  %v3739 = vadd.f32 %v3434, %v3738
  %v3740 = vpop.f32.mrf.mxu0
  %3741 = vmatprep.mubr.f32.mxu0 0.0
  %3742 = vmatmul.mubr.f32.gmra.mxu0 %v3363
  %v3743 = vpop.f32.mrf.mxu0
  %v3744 = vadd.f32 %v3439, %v3743
  %v3745 = vpop.f32.mrf.mxu0
  %3746 = vmatprep.mubr.f32.mxu0 0.0
  %3747 = vmatmul.mubr.f32.gmra.mxu0 %v3364
  %v3748 = vpop.f32.mrf.mxu0
  %v3749 = vadd.f32 %v3444, %v3748
  %v3750 = vpop.f32.mrf.mxu0
  %3751 = vmatprep.mubr.f32.mxu0 0.0
  %3752 = vmatmul.mubr.f32.gmra.mxu0 %v3365
  %v3753 = vpop.f32.mrf.mxu0
  %v3754 = vadd.f32 %v3449, %v3753
  %v3755 = vpop.f32.mrf.mxu0
  %3756 = vmatprep.mubr.f32.mxu0 0.0
  %3757 = vmatmul.mubr.f32.gmra.mxu0 %v3366
  %v3758 = vpop.f32.mrf.mxu0
  %v3759 = vadd.f32 %v3454, %v3758
  %v3760 = vpop.f32.mrf.mxu0
  %3761 = vmatprep.mubr.f32.mxu0 0.0
  %3762 = vmatmul.mubr.f32.gmra.mxu0 %v3367
  %v3763 = vpop.f32.mrf.mxu0
  %v3764 = vadd.f32 %v3459, %v3763
  %v3765 = vpop.f32.mrf.mxu0
  %3766 = vmatprep.mubr.f32.mxu0 0.0
  %3767 = vmatmul.mubr.f32.gmra.mxu0 %v3368
  %v3768 = vpop.f32.mrf.mxu0
  %v3769 = vadd.f32 %v3464, %v3768
  %v3770 = vpop.f32.mrf.mxu0
  %3771 = vdwg.mxu0
  %v3772 = vmax.f32 %v3533, 0.0
  %v3773 = vmax.f32 %v3535, 0.0
  %v3774 = vmax.f32 %v3694, 0.0
  %v3775 = vmax.f32 %v3539, 0.0
  %v3776 = vmax.f32 %v3541, 0.0
  %v3777 = vmax.f32 %v3699, 0.0
  %v3778 = vmax.f32 %v3545, 0.0
  %v3779 = vmax.f32 %v3547, 0.0
  %v3780 = vmax.f32 %v3704, 0.0
  %v3781 = vmax.f32 %v3551, 0.0
  %v3782 = vmax.f32 %v3553, 0.0
  %v3783 = vmax.f32 %v3709, 0.0
  %v3784 = vmax.f32 %v3557, 0.0
  %v3785 = vmax.f32 %v3559, 0.0
  %v3786 = vmax.f32 %v3714, 0.0
  %v3787 = vmax.f32 %v3563, 0.0
  %v3788 = vmax.f32 %v3565, 0.0
  %v3789 = vmax.f32 %v3719, 0.0
  %v3790 = vmax.f32 %v3569, 0.0
  %v3791 = vmax.f32 %v3571, 0.0
  %v3792 = vmax.f32 %v3724, 0.0
  %v3793 = vmax.f32 %v3575, 0.0
  %v3794 = vmax.f32 %v3577, 0.0
  %v3795 = vmax.f32 %v3729, 0.0
  %v3796 = vmax.f32 %v3581, 0.0
  %v3797 = vmax.f32 %v3583, 0.0
  %v3798 = vmax.f32 %v3734, 0.0
  %v3799 = vmax.f32 %v3587, 0.0
  %v3800 = vmax.f32 %v3589, 0.0
  %v3801 = vmax.f32 %v3739, 0.0
  %v3802 = vmax.f32 %v3593, 0.0
  %v3803 = vmax.f32 %v3595, 0.0
  %v3804 = vmax.f32 %v3744, 0.0
  %v3805 = vmax.f32 %v3599, 0.0
  %v3806 = vmax.f32 %v3601, 0.0
  %v3807 = vmax.f32 %v3749, 0.0
  %v3808 = vmax.f32 %v3605, 0.0
  %v3809 = vmax.f32 %v3607, 0.0
  %v3810 = vmax.f32 %v3754, 0.0
  %v3811 = vmax.f32 %v3611, 0.0
  %v3812 = vmax.f32 %v3613, 0.0
  %v3813 = vmax.f32 %v3759, 0.0
  %v3814 = vmax.f32 %v3617, 0.0
  %v3815 = vmax.f32 %v3619, 0.0
  %v3816 = vmax.f32 %v3764, 0.0
  %v3817 = vmax.f32 %v3623, 0.0
  %v3818 = vmax.f32 %v3625, 0.0
  %v3819 = vmax.f32 %v3769, 0.0
  %s3820 = scalar_lea.vmem %s3, 896
  %v3821 = vld [vmem:[%s3820] sm:$0xff]
  %v3822 = vld [vmem:[%s3820 + $0x8] sm:$0xff]
  %v3823 = vld [vmem:[%s3820 + $0x10] sm:$0xff]
  %v3824 = vld [vmem:[%s3820 + $0x18] sm:$0xff]
  %v3825 = vld [vmem:[%s3820 + $0x20] sm:$0xff]
  %v3826 = vld [vmem:[%s3820 + $0x28] sm:$0xff]
  %v3827 = vld [vmem:[%s3820 + $0x30] sm:$0xff]
  %v3828 = vld [vmem:[%s3820 + $0x38] sm:$0xff]
  %v3829 = vld [vmem:[%s3820 + $0x40] sm:$0xff]
  %v3830 = vld [vmem:[%s3820 + $0x48] sm:$0xff]
  %v3831 = vld [vmem:[%s3820 + $0x50] sm:$0xff]
  %v3832 = vld [vmem:[%s3820 + $0x58] sm:$0xff]
  %v3833 = vld [vmem:[%s3820 + $0x60] sm:$0xff]
  %v3834 = vld [vmem:[%s3820 + $0x68] sm:$0xff]
  %v3835 = vld [vmem:[%s3820 + $0x70] sm:$0xff]
  %v3836 = vld [vmem:[%s3820 + $0x78] sm:$0xff]
  %s3837 = scalar_lea.vmem %s4, 896
  %v3838 = vld [vmem:[%s3837] sm:$0xff]
  %v3839 = vld [vmem:[%s3837 + $0x8] sm:$0xff]
  %v3840 = vld [vmem:[%s3837 + $0x10] sm:$0xff]
  %v3841 = vld [vmem:[%s3837 + $0x18] sm:$0xff]
  %v3842 = vld [vmem:[%s3837 + $0x20] sm:$0xff]
  %v3843 = vld [vmem:[%s3837 + $0x28] sm:$0xff]
  %v3844 = vld [vmem:[%s3837 + $0x30] sm:$0xff]
  %v3845 = vld [vmem:[%s3837 + $0x38] sm:$0xff]
  %v3846 = vld [vmem:[%s3837 + $0x40] sm:$0xff]
  %v3847 = vld [vmem:[%s3837 + $0x48] sm:$0xff]
  %v3848 = vld [vmem:[%s3837 + $0x50] sm:$0xff]
  %v3849 = vld [vmem:[%s3837 + $0x58] sm:$0xff]
  %v3850 = vld [vmem:[%s3837 + $0x60] sm:$0xff]
  %v3851 = vld [vmem:[%s3837 + $0x68] sm:$0xff]
  %v3852 = vld [vmem:[%s3837 + $0x70] sm:$0xff]
  %v3853 = vld [vmem:[%s3837 + $0x78] sm:$0xff]
  %3855 = vset.pattern.permute.xlu0 0
  %3856 = vperm.xlu0 %3855, %v3838
  %v3857 = vpop.permute.xlu0 %3856
  %3860 = vset.pattern.permute.xlu0 0
  %3861 = vperm.xlu0 %3860, %v3839
  %v3862 = vpop.permute.xlu0 %3861
  %3865 = vset.pattern.permute.xlu0 0
  %3866 = vperm.xlu0 %3865, %v3840
  %v3867 = vpop.permute.xlu0 %3866
  %3870 = vset.pattern.permute.xlu0 0
  %3871 = vperm.xlu0 %3870, %v3841
  %v3872 = vpop.permute.xlu0 %3871
  %3875 = vset.pattern.permute.xlu0 0
  %3876 = vperm.xlu0 %3875, %v3842
  %v3877 = vpop.permute.xlu0 %3876
  %3880 = vset.pattern.permute.xlu0 0
  %3881 = vperm.xlu0 %3880, %v3843
  %v3882 = vpop.permute.xlu0 %3881
  %3885 = vset.pattern.permute.xlu0 0
  %3886 = vperm.xlu0 %3885, %v3844
  %v3887 = vpop.permute.xlu0 %3886
  %3890 = vset.pattern.permute.xlu0 0
  %3891 = vperm.xlu0 %3890, %v3845
  %v3892 = vpop.permute.xlu0 %3891
  %3895 = vset.pattern.permute.xlu0 0
  %3896 = vperm.xlu0 %3895, %v3846
  %v3897 = vpop.permute.xlu0 %3896
  %3900 = vset.pattern.permute.xlu0 0
  %3901 = vperm.xlu0 %3900, %v3847
  %v3902 = vpop.permute.xlu0 %3901
  %3905 = vset.pattern.permute.xlu0 0
  %3906 = vperm.xlu0 %3905, %v3848
  %v3907 = vpop.permute.xlu0 %3906
  %3910 = vset.pattern.permute.xlu0 0
  %3911 = vperm.xlu0 %3910, %v3849
  %v3912 = vpop.permute.xlu0 %3911
  %3915 = vset.pattern.permute.xlu0 0
  %3916 = vperm.xlu0 %3915, %v3850
  %v3917 = vpop.permute.xlu0 %3916
  %3920 = vset.pattern.permute.xlu0 0
  %3921 = vperm.xlu0 %3920, %v3851
  %v3922 = vpop.permute.xlu0 %3921
  %3925 = vset.pattern.permute.xlu0 0
  %3926 = vperm.xlu0 %3925, %v3852
  %v3927 = vpop.permute.xlu0 %3926
  %3930 = vset.pattern.permute.xlu0 0
  %3931 = vperm.xlu0 %3930, %v3853
  %v3932 = vpop.permute.xlu0 %3931
  %3934 = vmatprep.subr.mxu0 %v3818
  %3935 = vmatpush1.msra.mxu0 %v3817
  %3936 = vmatprep.subr.mxu0 %v3815
  %3937 = vmatpush1.msra.mxu0 %v3814
  %3938 = vmatprep.subr.mxu0 %v3812
  %3939 = vmatpush1.msra.mxu0 %v3811
  %3940 = vmatprep.subr.mxu0 %v3809
  %3941 = vmatpush1.msra.mxu0 %v3808
  %3942 = vmatprep.subr.mxu0 %v3806
  %3943 = vmatpush1.msra.mxu0 %v3805
  %3944 = vmatprep.subr.mxu0 %v3803
  %3945 = vmatpush1.msra.mxu0 %v3802
  %3946 = vmatprep.subr.mxu0 %v3800
  %3947 = vmatpush1.msra.mxu0 %v3799
  %3948 = vmatprep.subr.mxu0 %v3797
  %3949 = vmatpush1.msra.mxu0 %v3796
  %3950 = vmatprep.subr.mxu0 %v3794
  %3951 = vmatpush1.msra.mxu0 %v3793
  %3952 = vmatprep.subr.mxu0 %v3791
  %3953 = vmatpush1.msra.mxu0 %v3790
  %3954 = vmatprep.subr.mxu0 %v3788
  %3955 = vmatpush1.msra.mxu0 %v3787
  %3956 = vmatprep.subr.mxu0 %v3785
  %3957 = vmatpush1.msra.mxu0 %v3784
  %3958 = vmatprep.subr.mxu0 %v3782
  %3959 = vmatpush1.msra.mxu0 %v3781
  %3960 = vmatprep.subr.mxu0 %v3779
  %3961 = vmatpush1.msra.mxu0 %v3778
  %3962 = vmatprep.subr.mxu0 %v3776
  %3963 = vmatpush1.msra.mxu0 %v3775
  %3964 = vmatprep.subr.mxu0 %v3773
  %3965 = vmatpush1.msra.mxu0 %v3772
  %3966 = vmatprep.subr.mxu0 0.0
  %3967 = vmatpush2.msra.mxu0 0.0
  %3968 = vmatprep.subr.mxu0 0.0
  %3969 = vmatpush2.msra.mxu0 0.0
  %3970 = vmatprep.subr.mxu0 0.0
  %3971 = vmatpush2.msra.mxu0 0.0
  %3972 = vmatprep.subr.mxu0 0.0
  %3973 = vmatpush2.msra.mxu0 0.0
  %3974 = vmatprep.subr.mxu0 0.0
  %3975 = vmatpush2.msra.mxu0 0.0
  %3976 = vmatprep.subr.mxu0 0.0
  %3977 = vmatpush2.msra.mxu0 0.0
  %3978 = vmatprep.subr.mxu0 0.0
  %3979 = vmatpush2.msra.mxu0 0.0
  %3980 = vmatprep.subr.mxu0 0.0
  %3981 = vmatpush2.msra.mxu0 0.0
  %3982 = vmatprep.subr.mxu0 0.0
  %3983 = vmatpush2.msra.mxu0 0.0
  %3984 = vmatprep.subr.mxu0 0.0
  %3985 = vmatpush2.msra.mxu0 0.0
  %3986 = vmatprep.subr.mxu0 0.0
  %3987 = vmatpush2.msra.mxu0 0.0
  %3988 = vmatprep.subr.mxu0 0.0
  %3989 = vmatpush2.msra.mxu0 0.0
  %3990 = vmatprep.subr.mxu0 0.0
  %3991 = vmatpush2.msra.mxu0 0.0
  %3992 = vmatprep.subr.mxu0 0.0
  %3993 = vmatpush2.msra.mxu0 0.0
  %3994 = vmatprep.subr.mxu0 0.0
  %3995 = vmatpush2.msra.mxu0 0.0
  %3996 = vmatprep.subr.mxu0 0.0
  %3997 = vmatpush2.msra.mxu0 0.0
  %3998 = vmatprep.mubr.f32.mxu0 0.0
  %3999 = vmatmul.mubr.f32.gmra.mxu0 %v3821
  %v4000 = vpop.f32.mrf.mxu0
  %v4001 = vadd.f32 %v3857, %v4000
  %v4002 = vpop.f32.mrf.mxu0
  %v4003 = vadd.f32 %v3857, %v4002
  %4004 = vmatprep.mubr.f32.mxu0 0.0
  %4005 = vmatmul.mubr.f32.gmra.mxu0 %v3822
  %v4006 = vpop.f32.mrf.mxu0
  %v4007 = vadd.f32 %v3862, %v4006
  %v4008 = vpop.f32.mrf.mxu0
  %v4009 = vadd.f32 %v3862, %v4008
  %4010 = vmatprep.mubr.f32.mxu0 0.0
  %4011 = vmatmul.mubr.f32.gmra.mxu0 %v3823
  %v4012 = vpop.f32.mrf.mxu0
  %v4013 = vadd.f32 %v3867, %v4012
  %v4014 = vpop.f32.mrf.mxu0
  %v4015 = vadd.f32 %v3867, %v4014
  %4016 = vmatprep.mubr.f32.mxu0 0.0
  %4017 = vmatmul.mubr.f32.gmra.mxu0 %v3824
  %v4018 = vpop.f32.mrf.mxu0
  %v4019 = vadd.f32 %v3872, %v4018
  %v4020 = vpop.f32.mrf.mxu0
  %v4021 = vadd.f32 %v3872, %v4020
  %4022 = vmatprep.mubr.f32.mxu0 0.0
  %4023 = vmatmul.mubr.f32.gmra.mxu0 %v3825
  %v4024 = vpop.f32.mrf.mxu0
  %v4025 = vadd.f32 %v3877, %v4024
  %v4026 = vpop.f32.mrf.mxu0
  %v4027 = vadd.f32 %v3877, %v4026
  %4028 = vmatprep.mubr.f32.mxu0 0.0
  %4029 = vmatmul.mubr.f32.gmra.mxu0 %v3826
  %v4030 = vpop.f32.mrf.mxu0
  %v4031 = vadd.f32 %v3882, %v4030
  %v4032 = vpop.f32.mrf.mxu0
  %v4033 = vadd.f32 %v3882, %v4032
  %4034 = vmatprep.mubr.f32.mxu0 0.0
  %4035 = vmatmul.mubr.f32.gmra.mxu0 %v3827
  %v4036 = vpop.f32.mrf.mxu0
  %v4037 = vadd.f32 %v3887, %v4036
  %v4038 = vpop.f32.mrf.mxu0
  %v4039 = vadd.f32 %v3887, %v4038
  %4040 = vmatprep.mubr.f32.mxu0 0.0
  %4041 = vmatmul.mubr.f32.gmra.mxu0 %v3828
  %v4042 = vpop.f32.mrf.mxu0
  %v4043 = vadd.f32 %v3892, %v4042
  %v4044 = vpop.f32.mrf.mxu0
  %v4045 = vadd.f32 %v3892, %v4044
  %4046 = vmatprep.mubr.f32.mxu0 0.0
  %4047 = vmatmul.mubr.f32.gmra.mxu0 %v3829
  %v4048 = vpop.f32.mrf.mxu0
  %v4049 = vadd.f32 %v3897, %v4048
  %v4050 = vpop.f32.mrf.mxu0
  %v4051 = vadd.f32 %v3897, %v4050
  %4052 = vmatprep.mubr.f32.mxu0 0.0
  %4053 = vmatmul.mubr.f32.gmra.mxu0 %v3830
  %v4054 = vpop.f32.mrf.mxu0
  %v4055 = vadd.f32 %v3902, %v4054
  %v4056 = vpop.f32.mrf.mxu0
  %v4057 = vadd.f32 %v3902, %v4056
  %4058 = vmatprep.mubr.f32.mxu0 0.0
  %4059 = vmatmul.mubr.f32.gmra.mxu0 %v3831
  %v4060 = vpop.f32.mrf.mxu0
  %v4061 = vadd.f32 %v3907, %v4060
  %v4062 = vpop.f32.mrf.mxu0
  %v4063 = vadd.f32 %v3907, %v4062
  %4064 = vmatprep.mubr.f32.mxu0 0.0
  %4065 = vmatmul.mubr.f32.gmra.mxu0 %v3832
  %v4066 = vpop.f32.mrf.mxu0
  %v4067 = vadd.f32 %v3912, %v4066
  %v4068 = vpop.f32.mrf.mxu0
  %v4069 = vadd.f32 %v3912, %v4068
  %4070 = vmatprep.mubr.f32.mxu0 0.0
  %4071 = vmatmul.mubr.f32.gmra.mxu0 %v3833
  %v4072 = vpop.f32.mrf.mxu0
  %v4073 = vadd.f32 %v3917, %v4072
  %v4074 = vpop.f32.mrf.mxu0
  %v4075 = vadd.f32 %v3917, %v4074
  %4076 = vmatprep.mubr.f32.mxu0 0.0
  %4077 = vmatmul.mubr.f32.gmra.mxu0 %v3834
  %v4078 = vpop.f32.mrf.mxu0
  %v4079 = vadd.f32 %v3922, %v4078
  %v4080 = vpop.f32.mrf.mxu0
  %v4081 = vadd.f32 %v3922, %v4080
  %4082 = vmatprep.mubr.f32.mxu0 0.0
  %4083 = vmatmul.mubr.f32.gmra.mxu0 %v3835
  %v4084 = vpop.f32.mrf.mxu0
  %v4085 = vadd.f32 %v3927, %v4084
  %v4086 = vpop.f32.mrf.mxu0
  %v4087 = vadd.f32 %v3927, %v4086
  %4088 = vmatprep.mubr.f32.mxu0 0.0
  %4089 = vmatmul.mubr.f32.gmra.mxu0 %v3836
  %v4090 = vpop.f32.mrf.mxu0
  %v4091 = vadd.f32 %v3932, %v4090
  %v4092 = vpop.f32.mrf.mxu0
  %v4093 = vadd.f32 %v3932, %v4092
  %4094 = vdwg.mxu0
  %4095 = vmatprep.subr.mxu0 0.0
  %4096 = vmatpush1.msra.mxu0 %v3819
  %4097 = vmatprep.subr.mxu0 0.0
  %4098 = vmatpush1.msra.mxu0 %v3816
  %4099 = vmatprep.subr.mxu0 0.0
  %4100 = vmatpush1.msra.mxu0 %v3813
  %4101 = vmatprep.subr.mxu0 0.0
  %4102 = vmatpush1.msra.mxu0 %v3810
  %4103 = vmatprep.subr.mxu0 0.0
  %4104 = vmatpush1.msra.mxu0 %v3807
  %4105 = vmatprep.subr.mxu0 0.0
  %4106 = vmatpush1.msra.mxu0 %v3804
  %4107 = vmatprep.subr.mxu0 0.0
  %4108 = vmatpush1.msra.mxu0 %v3801
  %4109 = vmatprep.subr.mxu0 0.0
  %4110 = vmatpush1.msra.mxu0 %v3798
  %4111 = vmatprep.subr.mxu0 0.0
  %4112 = vmatpush1.msra.mxu0 %v3795
  %4113 = vmatprep.subr.mxu0 0.0
  %4114 = vmatpush1.msra.mxu0 %v3792
  %4115 = vmatprep.subr.mxu0 0.0
  %4116 = vmatpush1.msra.mxu0 %v3789
  %4117 = vmatprep.subr.mxu0 0.0
  %4118 = vmatpush1.msra.mxu0 %v3786
  %4119 = vmatprep.subr.mxu0 0.0
  %4120 = vmatpush1.msra.mxu0 %v3783
  %4121 = vmatprep.subr.mxu0 0.0
  %4122 = vmatpush1.msra.mxu0 %v3780
  %4123 = vmatprep.subr.mxu0 0.0
  %4124 = vmatpush1.msra.mxu0 %v3777
  %4125 = vmatprep.subr.mxu0 0.0
  %4126 = vmatpush1.msra.mxu0 %v3774
  %4127 = vmatprep.subr.mxu0 0.0
  %4128 = vmatpush2.msra.mxu0 0.0
  %4129 = vmatprep.subr.mxu0 0.0
  %4130 = vmatpush2.msra.mxu0 0.0
  %4131 = vmatprep.subr.mxu0 0.0
  %4132 = vmatpush2.msra.mxu0 0.0
  %4133 = vmatprep.subr.mxu0 0.0
  %4134 = vmatpush2.msra.mxu0 0.0
  %4135 = vmatprep.subr.mxu0 0.0
  %4136 = vmatpush2.msra.mxu0 0.0
  %4137 = vmatprep.subr.mxu0 0.0
  %4138 = vmatpush2.msra.mxu0 0.0
  %4139 = vmatprep.subr.mxu0 0.0
  %4140 = vmatpush2.msra.mxu0 0.0
  %4141 = vmatprep.subr.mxu0 0.0
  %4142 = vmatpush2.msra.mxu0 0.0
  %4143 = vmatprep.subr.mxu0 0.0
  %4144 = vmatpush2.msra.mxu0 0.0
  %4145 = vmatprep.subr.mxu0 0.0
  %4146 = vmatpush2.msra.mxu0 0.0
  %4147 = vmatprep.subr.mxu0 0.0
  %4148 = vmatpush2.msra.mxu0 0.0
  %4149 = vmatprep.subr.mxu0 0.0
  %4150 = vmatpush2.msra.mxu0 0.0
  %4151 = vmatprep.subr.mxu0 0.0
  %4152 = vmatpush2.msra.mxu0 0.0
  %4153 = vmatprep.subr.mxu0 0.0
  %4154 = vmatpush2.msra.mxu0 0.0
  %4155 = vmatprep.subr.mxu0 0.0
  %4156 = vmatpush2.msra.mxu0 0.0
  %4157 = vmatprep.subr.mxu0 0.0
  %4158 = vmatpush2.msra.mxu0 0.0
  %4159 = vmatprep.mubr.f32.mxu0 0.0
  %4160 = vmatmul.mubr.f32.gmra.mxu0 %v3821
  %v4161 = vpop.f32.mrf.mxu0
  %v4162 = vadd.f32 %v3857, %v4161
  %v4163 = vpop.f32.mrf.mxu0
  %4164 = vmatprep.mubr.f32.mxu0 0.0
  %4165 = vmatmul.mubr.f32.gmra.mxu0 %v3822
  %v4166 = vpop.f32.mrf.mxu0
  %v4167 = vadd.f32 %v3862, %v4166
  %v4168 = vpop.f32.mrf.mxu0
  %4169 = vmatprep.mubr.f32.mxu0 0.0
  %4170 = vmatmul.mubr.f32.gmra.mxu0 %v3823
  %v4171 = vpop.f32.mrf.mxu0
  %v4172 = vadd.f32 %v3867, %v4171
  %v4173 = vpop.f32.mrf.mxu0
  %4174 = vmatprep.mubr.f32.mxu0 0.0
  %4175 = vmatmul.mubr.f32.gmra.mxu0 %v3824
  %v4176 = vpop.f32.mrf.mxu0
  %v4177 = vadd.f32 %v3872, %v4176
  %v4178 = vpop.f32.mrf.mxu0
  %4179 = vmatprep.mubr.f32.mxu0 0.0
  %4180 = vmatmul.mubr.f32.gmra.mxu0 %v3825
  %v4181 = vpop.f32.mrf.mxu0
  %v4182 = vadd.f32 %v3877, %v4181
  %v4183 = vpop.f32.mrf.mxu0
  %4184 = vmatprep.mubr.f32.mxu0 0.0
  %4185 = vmatmul.mubr.f32.gmra.mxu0 %v3826
  %v4186 = vpop.f32.mrf.mxu0
  %v4187 = vadd.f32 %v3882, %v4186
  %v4188 = vpop.f32.mrf.mxu0
  %4189 = vmatprep.mubr.f32.mxu0 0.0
  %4190 = vmatmul.mubr.f32.gmra.mxu0 %v3827
  %v4191 = vpop.f32.mrf.mxu0
  %v4192 = vadd.f32 %v3887, %v4191
  %v4193 = vpop.f32.mrf.mxu0
  %4194 = vmatprep.mubr.f32.mxu0 0.0
  %4195 = vmatmul.mubr.f32.gmra.mxu0 %v3828
  %v4196 = vpop.f32.mrf.mxu0
  %v4197 = vadd.f32 %v3892, %v4196
  %v4198 = vpop.f32.mrf.mxu0
  %4199 = vmatprep.mubr.f32.mxu0 0.0
  %4200 = vmatmul.mubr.f32.gmra.mxu0 %v3829
  %v4201 = vpop.f32.mrf.mxu0
  %v4202 = vadd.f32 %v3897, %v4201
  %v4203 = vpop.f32.mrf.mxu0
  %4204 = vmatprep.mubr.f32.mxu0 0.0
  %4205 = vmatmul.mubr.f32.gmra.mxu0 %v3830
  %v4206 = vpop.f32.mrf.mxu0
  %v4207 = vadd.f32 %v3902, %v4206
  %v4208 = vpop.f32.mrf.mxu0
  %4209 = vmatprep.mubr.f32.mxu0 0.0
  %4210 = vmatmul.mubr.f32.gmra.mxu0 %v3831
  %v4211 = vpop.f32.mrf.mxu0
  %v4212 = vadd.f32 %v3907, %v4211
  %v4213 = vpop.f32.mrf.mxu0
  %4214 = vmatprep.mubr.f32.mxu0 0.0
  %4215 = vmatmul.mubr.f32.gmra.mxu0 %v3832
  %v4216 = vpop.f32.mrf.mxu0
  %v4217 = vadd.f32 %v3912, %v4216
  %v4218 = vpop.f32.mrf.mxu0
  %4219 = vmatprep.mubr.f32.mxu0 0.0
  %4220 = vmatmul.mubr.f32.gmra.mxu0 %v3833
  %v4221 = vpop.f32.mrf.mxu0
  %v4222 = vadd.f32 %v3917, %v4221
  %v4223 = vpop.f32.mrf.mxu0
  %4224 = vmatprep.mubr.f32.mxu0 0.0
  %4225 = vmatmul.mubr.f32.gmra.mxu0 %v3834
  %v4226 = vpop.f32.mrf.mxu0
  %v4227 = vadd.f32 %v3922, %v4226
  %v4228 = vpop.f32.mrf.mxu0
  %4229 = vmatprep.mubr.f32.mxu0 0.0
  %4230 = vmatmul.mubr.f32.gmra.mxu0 %v3835
  %v4231 = vpop.f32.mrf.mxu0
  %v4232 = vadd.f32 %v3927, %v4231
  %v4233 = vpop.f32.mrf.mxu0
  %4234 = vmatprep.mubr.f32.mxu0 0.0
  %4235 = vmatmul.mubr.f32.gmra.mxu0 %v3836
  %v4236 = vpop.f32.mrf.mxu0
  %v4237 = vadd.f32 %v3932, %v4236
  %v4238 = vpop.f32.mrf.mxu0
  %4239 = vdwg.mxu0
  %v4240 = vmax.f32 %v4001, 0.0
  %v4241 = vmax.f32 %v4003, 0.0
  %v4242 = vmax.f32 %v4162, 0.0
  %v4243 = vmax.f32 %v4007, 0.0
  %v4244 = vmax.f32 %v4009, 0.0
  %v4245 = vmax.f32 %v4167, 0.0
  %v4246 = vmax.f32 %v4013, 0.0
  %v4247 = vmax.f32 %v4015, 0.0
  %v4248 = vmax.f32 %v4172, 0.0
  %v4249 = vmax.f32 %v4019, 0.0
  %v4250 = vmax.f32 %v4021, 0.0
  %v4251 = vmax.f32 %v4177, 0.0
  %v4252 = vmax.f32 %v4025, 0.0
  %v4253 = vmax.f32 %v4027, 0.0
  %v4254 = vmax.f32 %v4182, 0.0
  %v4255 = vmax.f32 %v4031, 0.0
  %v4256 = vmax.f32 %v4033, 0.0
  %v4257 = vmax.f32 %v4187, 0.0
  %v4258 = vmax.f32 %v4037, 0.0
  %v4259 = vmax.f32 %v4039, 0.0
  %v4260 = vmax.f32 %v4192, 0.0
  %v4261 = vmax.f32 %v4043, 0.0
  %v4262 = vmax.f32 %v4045, 0.0
  %v4263 = vmax.f32 %v4197, 0.0
  %v4264 = vmax.f32 %v4049, 0.0
  %v4265 = vmax.f32 %v4051, 0.0
  %v4266 = vmax.f32 %v4202, 0.0
  %v4267 = vmax.f32 %v4055, 0.0
  %v4268 = vmax.f32 %v4057, 0.0
  %v4269 = vmax.f32 %v4207, 0.0
  %v4270 = vmax.f32 %v4061, 0.0
  %v4271 = vmax.f32 %v4063, 0.0
  %v4272 = vmax.f32 %v4212, 0.0
  %v4273 = vmax.f32 %v4067, 0.0
  %v4274 = vmax.f32 %v4069, 0.0
  %v4275 = vmax.f32 %v4217, 0.0
  %v4276 = vmax.f32 %v4073, 0.0
  %v4277 = vmax.f32 %v4075, 0.0
  %v4278 = vmax.f32 %v4222, 0.0
  %v4279 = vmax.f32 %v4079, 0.0
  %v4280 = vmax.f32 %v4081, 0.0
  %v4281 = vmax.f32 %v4227, 0.0
  %v4282 = vmax.f32 %v4085, 0.0
  %v4283 = vmax.f32 %v4087, 0.0
  %v4284 = vmax.f32 %v4232, 0.0
  %v4285 = vmax.f32 %v4091, 0.0
  %v4286 = vmax.f32 %v4093, 0.0
  %v4287 = vmax.f32 %v4237, 0.0
  %s4288 = scalar_lea.vmem %s3, 1024
  %v4289 = vld [vmem:[%s4288] sm:$0xff]
  %v4290 = vld [vmem:[%s4288 + $0x8] sm:$0xff]
  %v4291 = vld [vmem:[%s4288 + $0x10] sm:$0xff]
  %v4292 = vld [vmem:[%s4288 + $0x18] sm:$0xff]
  %v4293 = vld [vmem:[%s4288 + $0x20] sm:$0xff]
  %v4294 = vld [vmem:[%s4288 + $0x28] sm:$0xff]
  %v4295 = vld [vmem:[%s4288 + $0x30] sm:$0xff]
  %v4296 = vld [vmem:[%s4288 + $0x38] sm:$0xff]
  %v4297 = vld [vmem:[%s4288 + $0x40] sm:$0xff]
  %v4298 = vld [vmem:[%s4288 + $0x48] sm:$0xff]
  %v4299 = vld [vmem:[%s4288 + $0x50] sm:$0xff]
  %v4300 = vld [vmem:[%s4288 + $0x58] sm:$0xff]
  %v4301 = vld [vmem:[%s4288 + $0x60] sm:$0xff]
  %v4302 = vld [vmem:[%s4288 + $0x68] sm:$0xff]
  %v4303 = vld [vmem:[%s4288 + $0x70] sm:$0xff]
  %v4304 = vld [vmem:[%s4288 + $0x78] sm:$0xff]
  %s4305 = scalar_lea.vmem %s4, 1024
  %v4306 = vld [vmem:[%s4305] sm:$0xff]
  %v4307 = vld [vmem:[%s4305 + $0x8] sm:$0xff]
  %v4308 = vld [vmem:[%s4305 + $0x10] sm:$0xff]
  %v4309 = vld [vmem:[%s4305 + $0x18] sm:$0xff]
  %v4310 = vld [vmem:[%s4305 + $0x20] sm:$0xff]
  %v4311 = vld [vmem:[%s4305 + $0x28] sm:$0xff]
  %v4312 = vld [vmem:[%s4305 + $0x30] sm:$0xff]
  %v4313 = vld [vmem:[%s4305 + $0x38] sm:$0xff]
  %v4314 = vld [vmem:[%s4305 + $0x40] sm:$0xff]
  %v4315 = vld [vmem:[%s4305 + $0x48] sm:$0xff]
  %v4316 = vld [vmem:[%s4305 + $0x50] sm:$0xff]
  %v4317 = vld [vmem:[%s4305 + $0x58] sm:$0xff]
  %v4318 = vld [vmem:[%s4305 + $0x60] sm:$0xff]
  %v4319 = vld [vmem:[%s4305 + $0x68] sm:$0xff]
  %v4320 = vld [vmem:[%s4305 + $0x70] sm:$0xff]
  %v4321 = vld [vmem:[%s4305 + $0x78] sm:$0xff]
  %4323 = vset.pattern.permute.xlu0 0
  %4324 = vperm.xlu0 %4323, %v4306
  %v4325 = vpop.permute.xlu0 %4324
  %4328 = vset.pattern.permute.xlu0 0
  %4329 = vperm.xlu0 %4328, %v4307
  %v4330 = vpop.permute.xlu0 %4329
  %4333 = vset.pattern.permute.xlu0 0
  %4334 = vperm.xlu0 %4333, %v4308
  %v4335 = vpop.permute.xlu0 %4334
  %4338 = vset.pattern.permute.xlu0 0
  %4339 = vperm.xlu0 %4338, %v4309
  %v4340 = vpop.permute.xlu0 %4339
  %4343 = vset.pattern.permute.xlu0 0
  %4344 = vperm.xlu0 %4343, %v4310
  %v4345 = vpop.permute.xlu0 %4344
  %4348 = vset.pattern.permute.xlu0 0
  %4349 = vperm.xlu0 %4348, %v4311
  %v4350 = vpop.permute.xlu0 %4349
  %4353 = vset.pattern.permute.xlu0 0
  %4354 = vperm.xlu0 %4353, %v4312
  %v4355 = vpop.permute.xlu0 %4354
  %4358 = vset.pattern.permute.xlu0 0
  %4359 = vperm.xlu0 %4358, %v4313
  %v4360 = vpop.permute.xlu0 %4359
  %4363 = vset.pattern.permute.xlu0 0
  %4364 = vperm.xlu0 %4363, %v4314
  %v4365 = vpop.permute.xlu0 %4364
  %4368 = vset.pattern.permute.xlu0 0
  %4369 = vperm.xlu0 %4368, %v4315
  %v4370 = vpop.permute.xlu0 %4369
  %4373 = vset.pattern.permute.xlu0 0
  %4374 = vperm.xlu0 %4373, %v4316
  %v4375 = vpop.permute.xlu0 %4374
  %4378 = vset.pattern.permute.xlu0 0
  %4379 = vperm.xlu0 %4378, %v4317
  %v4380 = vpop.permute.xlu0 %4379
  %4383 = vset.pattern.permute.xlu0 0
  %4384 = vperm.xlu0 %4383, %v4318
  %v4385 = vpop.permute.xlu0 %4384
  %4388 = vset.pattern.permute.xlu0 0
  %4389 = vperm.xlu0 %4388, %v4319
  %v4390 = vpop.permute.xlu0 %4389
  %4393 = vset.pattern.permute.xlu0 0
  %4394 = vperm.xlu0 %4393, %v4320
  %v4395 = vpop.permute.xlu0 %4394
  %4398 = vset.pattern.permute.xlu0 0
  %4399 = vperm.xlu0 %4398, %v4321
  %v4400 = vpop.permute.xlu0 %4399
  %4402 = vmatprep.subr.mxu0 %v4286
  %4403 = vmatpush1.msra.mxu0 %v4285
  %4404 = vmatprep.subr.mxu0 %v4283
  %4405 = vmatpush1.msra.mxu0 %v4282
  %4406 = vmatprep.subr.mxu0 %v4280
  %4407 = vmatpush1.msra.mxu0 %v4279
  %4408 = vmatprep.subr.mxu0 %v4277
  %4409 = vmatpush1.msra.mxu0 %v4276
  %4410 = vmatprep.subr.mxu0 %v4274
  %4411 = vmatpush1.msra.mxu0 %v4273
  %4412 = vmatprep.subr.mxu0 %v4271
  %4413 = vmatpush1.msra.mxu0 %v4270
  %4414 = vmatprep.subr.mxu0 %v4268
  %4415 = vmatpush1.msra.mxu0 %v4267
  %4416 = vmatprep.subr.mxu0 %v4265
  %4417 = vmatpush1.msra.mxu0 %v4264
  %4418 = vmatprep.subr.mxu0 %v4262
  %4419 = vmatpush1.msra.mxu0 %v4261
  %4420 = vmatprep.subr.mxu0 %v4259
  %4421 = vmatpush1.msra.mxu0 %v4258
  %4422 = vmatprep.subr.mxu0 %v4256
  %4423 = vmatpush1.msra.mxu0 %v4255
  %4424 = vmatprep.subr.mxu0 %v4253
  %4425 = vmatpush1.msra.mxu0 %v4252
  %4426 = vmatprep.subr.mxu0 %v4250
  %4427 = vmatpush1.msra.mxu0 %v4249
  %4428 = vmatprep.subr.mxu0 %v4247
  %4429 = vmatpush1.msra.mxu0 %v4246
  %4430 = vmatprep.subr.mxu0 %v4244
  %4431 = vmatpush1.msra.mxu0 %v4243
  %4432 = vmatprep.subr.mxu0 %v4241
  %4433 = vmatpush1.msra.mxu0 %v4240
  %4434 = vmatprep.subr.mxu0 0.0
  %4435 = vmatpush2.msra.mxu0 0.0
  %4436 = vmatprep.subr.mxu0 0.0
  %4437 = vmatpush2.msra.mxu0 0.0
  %4438 = vmatprep.subr.mxu0 0.0
  %4439 = vmatpush2.msra.mxu0 0.0
  %4440 = vmatprep.subr.mxu0 0.0
  %4441 = vmatpush2.msra.mxu0 0.0
  %4442 = vmatprep.subr.mxu0 0.0
  %4443 = vmatpush2.msra.mxu0 0.0
  %4444 = vmatprep.subr.mxu0 0.0
  %4445 = vmatpush2.msra.mxu0 0.0
  %4446 = vmatprep.subr.mxu0 0.0
  %4447 = vmatpush2.msra.mxu0 0.0
  %4448 = vmatprep.subr.mxu0 0.0
  %4449 = vmatpush2.msra.mxu0 0.0
  %4450 = vmatprep.subr.mxu0 0.0
  %4451 = vmatpush2.msra.mxu0 0.0
  %4452 = vmatprep.subr.mxu0 0.0
  %4453 = vmatpush2.msra.mxu0 0.0
  %4454 = vmatprep.subr.mxu0 0.0
  %4455 = vmatpush2.msra.mxu0 0.0
  %4456 = vmatprep.subr.mxu0 0.0
  %4457 = vmatpush2.msra.mxu0 0.0
  %4458 = vmatprep.subr.mxu0 0.0
  %4459 = vmatpush2.msra.mxu0 0.0
  %4460 = vmatprep.subr.mxu0 0.0
  %4461 = vmatpush2.msra.mxu0 0.0
  %4462 = vmatprep.subr.mxu0 0.0
  %4463 = vmatpush2.msra.mxu0 0.0
  %4464 = vmatprep.subr.mxu0 0.0
  %4465 = vmatpush2.msra.mxu0 0.0
  %4466 = vmatprep.mubr.f32.mxu0 0.0
  %4467 = vmatmul.mubr.f32.gmra.mxu0 %v4289
  %v4468 = vpop.f32.mrf.mxu0
  %v4469 = vadd.f32 %v4325, %v4468
  %v4470 = vpop.f32.mrf.mxu0
  %v4471 = vadd.f32 %v4325, %v4470
  %4472 = vmatprep.mubr.f32.mxu0 0.0
  %4473 = vmatmul.mubr.f32.gmra.mxu0 %v4290
  %v4474 = vpop.f32.mrf.mxu0
  %v4475 = vadd.f32 %v4330, %v4474
  %v4476 = vpop.f32.mrf.mxu0
  %v4477 = vadd.f32 %v4330, %v4476
  %4478 = vmatprep.mubr.f32.mxu0 0.0
  %4479 = vmatmul.mubr.f32.gmra.mxu0 %v4291
  %v4480 = vpop.f32.mrf.mxu0
  %v4481 = vadd.f32 %v4335, %v4480
  %v4482 = vpop.f32.mrf.mxu0
  %v4483 = vadd.f32 %v4335, %v4482
  %4484 = vmatprep.mubr.f32.mxu0 0.0
  %4485 = vmatmul.mubr.f32.gmra.mxu0 %v4292
  %v4486 = vpop.f32.mrf.mxu0
  %v4487 = vadd.f32 %v4340, %v4486
  %v4488 = vpop.f32.mrf.mxu0
  %v4489 = vadd.f32 %v4340, %v4488
  %4490 = vmatprep.mubr.f32.mxu0 0.0
  %4491 = vmatmul.mubr.f32.gmra.mxu0 %v4293
  %v4492 = vpop.f32.mrf.mxu0
  %v4493 = vadd.f32 %v4345, %v4492
  %v4494 = vpop.f32.mrf.mxu0
  %v4495 = vadd.f32 %v4345, %v4494
  %4496 = vmatprep.mubr.f32.mxu0 0.0
  %4497 = vmatmul.mubr.f32.gmra.mxu0 %v4294
  %v4498 = vpop.f32.mrf.mxu0
  %v4499 = vadd.f32 %v4350, %v4498
  %v4500 = vpop.f32.mrf.mxu0
  %v4501 = vadd.f32 %v4350, %v4500
  %4502 = vmatprep.mubr.f32.mxu0 0.0
  %4503 = vmatmul.mubr.f32.gmra.mxu0 %v4295
  %v4504 = vpop.f32.mrf.mxu0
  %v4505 = vadd.f32 %v4355, %v4504
  %v4506 = vpop.f32.mrf.mxu0
  %v4507 = vadd.f32 %v4355, %v4506
  %4508 = vmatprep.mubr.f32.mxu0 0.0
  %4509 = vmatmul.mubr.f32.gmra.mxu0 %v4296
  %v4510 = vpop.f32.mrf.mxu0
  %v4511 = vadd.f32 %v4360, %v4510
  %v4512 = vpop.f32.mrf.mxu0
  %v4513 = vadd.f32 %v4360, %v4512
  %4514 = vmatprep.mubr.f32.mxu0 0.0
  %4515 = vmatmul.mubr.f32.gmra.mxu0 %v4297
  %v4516 = vpop.f32.mrf.mxu0
  %v4517 = vadd.f32 %v4365, %v4516
  %v4518 = vpop.f32.mrf.mxu0
  %v4519 = vadd.f32 %v4365, %v4518
  %4520 = vmatprep.mubr.f32.mxu0 0.0
  %4521 = vmatmul.mubr.f32.gmra.mxu0 %v4298
  %v4522 = vpop.f32.mrf.mxu0
  %v4523 = vadd.f32 %v4370, %v4522
  %v4524 = vpop.f32.mrf.mxu0
  %v4525 = vadd.f32 %v4370, %v4524
  %4526 = vmatprep.mubr.f32.mxu0 0.0
  %4527 = vmatmul.mubr.f32.gmra.mxu0 %v4299
  %v4528 = vpop.f32.mrf.mxu0
  %v4529 = vadd.f32 %v4375, %v4528
  %v4530 = vpop.f32.mrf.mxu0
  %v4531 = vadd.f32 %v4375, %v4530
  %4532 = vmatprep.mubr.f32.mxu0 0.0
  %4533 = vmatmul.mubr.f32.gmra.mxu0 %v4300
  %v4534 = vpop.f32.mrf.mxu0
  %v4535 = vadd.f32 %v4380, %v4534
  %v4536 = vpop.f32.mrf.mxu0
  %v4537 = vadd.f32 %v4380, %v4536
  %4538 = vmatprep.mubr.f32.mxu0 0.0
  %4539 = vmatmul.mubr.f32.gmra.mxu0 %v4301
  %v4540 = vpop.f32.mrf.mxu0
  %v4541 = vadd.f32 %v4385, %v4540
  %v4542 = vpop.f32.mrf.mxu0
  %v4543 = vadd.f32 %v4385, %v4542
  %4544 = vmatprep.mubr.f32.mxu0 0.0
  %4545 = vmatmul.mubr.f32.gmra.mxu0 %v4302
  %v4546 = vpop.f32.mrf.mxu0
  %v4547 = vadd.f32 %v4390, %v4546
  %v4548 = vpop.f32.mrf.mxu0
  %v4549 = vadd.f32 %v4390, %v4548
  %4550 = vmatprep.mubr.f32.mxu0 0.0
  %4551 = vmatmul.mubr.f32.gmra.mxu0 %v4303
  %v4552 = vpop.f32.mrf.mxu0
  %v4553 = vadd.f32 %v4395, %v4552
  %v4554 = vpop.f32.mrf.mxu0
  %v4555 = vadd.f32 %v4395, %v4554
  %4556 = vmatprep.mubr.f32.mxu0 0.0
  %4557 = vmatmul.mubr.f32.gmra.mxu0 %v4304
  %v4558 = vpop.f32.mrf.mxu0
  %v4559 = vadd.f32 %v4400, %v4558
  %v4560 = vpop.f32.mrf.mxu0
  %v4561 = vadd.f32 %v4400, %v4560
  %4562 = vdwg.mxu0
  %4563 = vmatprep.subr.mxu0 0.0
  %4564 = vmatpush1.msra.mxu0 %v4287
  %4565 = vmatprep.subr.mxu0 0.0
  %4566 = vmatpush1.msra.mxu0 %v4284
  %4567 = vmatprep.subr.mxu0 0.0
  %4568 = vmatpush1.msra.mxu0 %v4281
  %4569 = vmatprep.subr.mxu0 0.0
  %4570 = vmatpush1.msra.mxu0 %v4278
  %4571 = vmatprep.subr.mxu0 0.0
  %4572 = vmatpush1.msra.mxu0 %v4275
  %4573 = vmatprep.subr.mxu0 0.0
  %4574 = vmatpush1.msra.mxu0 %v4272
  %4575 = vmatprep.subr.mxu0 0.0
  %4576 = vmatpush1.msra.mxu0 %v4269
  %4577 = vmatprep.subr.mxu0 0.0
  %4578 = vmatpush1.msra.mxu0 %v4266
  %4579 = vmatprep.subr.mxu0 0.0
  %4580 = vmatpush1.msra.mxu0 %v4263
  %4581 = vmatprep.subr.mxu0 0.0
  %4582 = vmatpush1.msra.mxu0 %v4260
  %4583 = vmatprep.subr.mxu0 0.0
  %4584 = vmatpush1.msra.mxu0 %v4257
  %4585 = vmatprep.subr.mxu0 0.0
  %4586 = vmatpush1.msra.mxu0 %v4254
  %4587 = vmatprep.subr.mxu0 0.0
  %4588 = vmatpush1.msra.mxu0 %v4251
  %4589 = vmatprep.subr.mxu0 0.0
  %4590 = vmatpush1.msra.mxu0 %v4248
  %4591 = vmatprep.subr.mxu0 0.0
  %4592 = vmatpush1.msra.mxu0 %v4245
  %4593 = vmatprep.subr.mxu0 0.0
  %4594 = vmatpush1.msra.mxu0 %v4242
  %4595 = vmatprep.subr.mxu0 0.0
  %4596 = vmatpush2.msra.mxu0 0.0
  %4597 = vmatprep.subr.mxu0 0.0
  %4598 = vmatpush2.msra.mxu0 0.0
  %4599 = vmatprep.subr.mxu0 0.0
  %4600 = vmatpush2.msra.mxu0 0.0
  %4601 = vmatprep.subr.mxu0 0.0
  %4602 = vmatpush2.msra.mxu0 0.0
  %4603 = vmatprep.subr.mxu0 0.0
  %4604 = vmatpush2.msra.mxu0 0.0
  %4605 = vmatprep.subr.mxu0 0.0
  %4606 = vmatpush2.msra.mxu0 0.0
  %4607 = vmatprep.subr.mxu0 0.0
  %4608 = vmatpush2.msra.mxu0 0.0
  %4609 = vmatprep.subr.mxu0 0.0
  %4610 = vmatpush2.msra.mxu0 0.0
  %4611 = vmatprep.subr.mxu0 0.0
  %4612 = vmatpush2.msra.mxu0 0.0
  %4613 = vmatprep.subr.mxu0 0.0
  %4614 = vmatpush2.msra.mxu0 0.0
  %4615 = vmatprep.subr.mxu0 0.0
  %4616 = vmatpush2.msra.mxu0 0.0
  %4617 = vmatprep.subr.mxu0 0.0
  %4618 = vmatpush2.msra.mxu0 0.0
  %4619 = vmatprep.subr.mxu0 0.0
  %4620 = vmatpush2.msra.mxu0 0.0
  %4621 = vmatprep.subr.mxu0 0.0
  %4622 = vmatpush2.msra.mxu0 0.0
  %4623 = vmatprep.subr.mxu0 0.0
  %4624 = vmatpush2.msra.mxu0 0.0
  %4625 = vmatprep.subr.mxu0 0.0
  %4626 = vmatpush2.msra.mxu0 0.0
  %4627 = vmatprep.mubr.f32.mxu0 0.0
  %4628 = vmatmul.mubr.f32.gmra.mxu0 %v4289
  %v4629 = vpop.f32.mrf.mxu0
  %v4630 = vadd.f32 %v4325, %v4629
  %v4631 = vpop.f32.mrf.mxu0
  %4632 = vmatprep.mubr.f32.mxu0 0.0
  %4633 = vmatmul.mubr.f32.gmra.mxu0 %v4290
  %v4634 = vpop.f32.mrf.mxu0
  %v4635 = vadd.f32 %v4330, %v4634
  %v4636 = vpop.f32.mrf.mxu0
  %4637 = vmatprep.mubr.f32.mxu0 0.0
  %4638 = vmatmul.mubr.f32.gmra.mxu0 %v4291
  %v4639 = vpop.f32.mrf.mxu0
  %v4640 = vadd.f32 %v4335, %v4639
  %v4641 = vpop.f32.mrf.mxu0
  %4642 = vmatprep.mubr.f32.mxu0 0.0
  %4643 = vmatmul.mubr.f32.gmra.mxu0 %v4292
  %v4644 = vpop.f32.mrf.mxu0
  %v4645 = vadd.f32 %v4340, %v4644
  %v4646 = vpop.f32.mrf.mxu0
  %4647 = vmatprep.mubr.f32.mxu0 0.0
  %4648 = vmatmul.mubr.f32.gmra.mxu0 %v4293
  %v4649 = vpop.f32.mrf.mxu0
  %v4650 = vadd.f32 %v4345, %v4649
  %v4651 = vpop.f32.mrf.mxu0
  %4652 = vmatprep.mubr.f32.mxu0 0.0
  %4653 = vmatmul.mubr.f32.gmra.mxu0 %v4294
  %v4654 = vpop.f32.mrf.mxu0
  %v4655 = vadd.f32 %v4350, %v4654
  %v4656 = vpop.f32.mrf.mxu0
  %4657 = vmatprep.mubr.f32.mxu0 0.0
  %4658 = vmatmul.mubr.f32.gmra.mxu0 %v4295
  %v4659 = vpop.f32.mrf.mxu0
  %v4660 = vadd.f32 %v4355, %v4659
  %v4661 = vpop.f32.mrf.mxu0
  %4662 = vmatprep.mubr.f32.mxu0 0.0
  %4663 = vmatmul.mubr.f32.gmra.mxu0 %v4296
  %v4664 = vpop.f32.mrf.mxu0
  %v4665 = vadd.f32 %v4360, %v4664
  %v4666 = vpop.f32.mrf.mxu0
  %4667 = vmatprep.mubr.f32.mxu0 0.0
  %4668 = vmatmul.mubr.f32.gmra.mxu0 %v4297
  %v4669 = vpop.f32.mrf.mxu0
  %v4670 = vadd.f32 %v4365, %v4669
  %v4671 = vpop.f32.mrf.mxu0
  %4672 = vmatprep.mubr.f32.mxu0 0.0
  %4673 = vmatmul.mubr.f32.gmra.mxu0 %v4298
  %v4674 = vpop.f32.mrf.mxu0
  %v4675 = vadd.f32 %v4370, %v4674
  %v4676 = vpop.f32.mrf.mxu0
  %4677 = vmatprep.mubr.f32.mxu0 0.0
  %4678 = vmatmul.mubr.f32.gmra.mxu0 %v4299
  %v4679 = vpop.f32.mrf.mxu0
  %v4680 = vadd.f32 %v4375, %v4679
  %v4681 = vpop.f32.mrf.mxu0
  %4682 = vmatprep.mubr.f32.mxu0 0.0
  %4683 = vmatmul.mubr.f32.gmra.mxu0 %v4300
  %v4684 = vpop.f32.mrf.mxu0
  %v4685 = vadd.f32 %v4380, %v4684
  %v4686 = vpop.f32.mrf.mxu0
  %4687 = vmatprep.mubr.f32.mxu0 0.0
  %4688 = vmatmul.mubr.f32.gmra.mxu0 %v4301
  %v4689 = vpop.f32.mrf.mxu0
  %v4690 = vadd.f32 %v4385, %v4689
  %v4691 = vpop.f32.mrf.mxu0
  %4692 = vmatprep.mubr.f32.mxu0 0.0
  %4693 = vmatmul.mubr.f32.gmra.mxu0 %v4302
  %v4694 = vpop.f32.mrf.mxu0
  %v4695 = vadd.f32 %v4390, %v4694
  %v4696 = vpop.f32.mrf.mxu0
  %4697 = vmatprep.mubr.f32.mxu0 0.0
  %4698 = vmatmul.mubr.f32.gmra.mxu0 %v4303
  %v4699 = vpop.f32.mrf.mxu0
  %v4700 = vadd.f32 %v4395, %v4699
  %v4701 = vpop.f32.mrf.mxu0
  %4702 = vmatprep.mubr.f32.mxu0 0.0
  %4703 = vmatmul.mubr.f32.gmra.mxu0 %v4304
  %v4704 = vpop.f32.mrf.mxu0
  %v4705 = vadd.f32 %v4400, %v4704
  %v4706 = vpop.f32.mrf.mxu0
  %4707 = vdwg.mxu0
  %v4708 = vmax.f32 %v4469, 0.0
  %v4709 = vmax.f32 %v4471, 0.0
  %v4710 = vmax.f32 %v4630, 0.0
  %v4711 = vmax.f32 %v4475, 0.0
  %v4712 = vmax.f32 %v4477, 0.0
  %v4713 = vmax.f32 %v4635, 0.0
  %v4714 = vmax.f32 %v4481, 0.0
  %v4715 = vmax.f32 %v4483, 0.0
  %v4716 = vmax.f32 %v4640, 0.0
  %v4717 = vmax.f32 %v4487, 0.0
  %v4718 = vmax.f32 %v4489, 0.0
  %v4719 = vmax.f32 %v4645, 0.0
  %v4720 = vmax.f32 %v4493, 0.0
  %v4721 = vmax.f32 %v4495, 0.0
  %v4722 = vmax.f32 %v4650, 0.0
  %v4723 = vmax.f32 %v4499, 0.0
  %v4724 = vmax.f32 %v4501, 0.0
  %v4725 = vmax.f32 %v4655, 0.0
  %v4726 = vmax.f32 %v4505, 0.0
  %v4727 = vmax.f32 %v4507, 0.0
  %v4728 = vmax.f32 %v4660, 0.0
  %v4729 = vmax.f32 %v4511, 0.0
  %v4730 = vmax.f32 %v4513, 0.0
  %v4731 = vmax.f32 %v4665, 0.0
  %v4732 = vmax.f32 %v4517, 0.0
  %v4733 = vmax.f32 %v4519, 0.0
  %v4734 = vmax.f32 %v4670, 0.0
  %v4735 = vmax.f32 %v4523, 0.0
  %v4736 = vmax.f32 %v4525, 0.0
  %v4737 = vmax.f32 %v4675, 0.0
  %v4738 = vmax.f32 %v4529, 0.0
  %v4739 = vmax.f32 %v4531, 0.0
  %v4740 = vmax.f32 %v4680, 0.0
  %v4741 = vmax.f32 %v4535, 0.0
  %v4742 = vmax.f32 %v4537, 0.0
  %v4743 = vmax.f32 %v4685, 0.0
  %v4744 = vmax.f32 %v4541, 0.0
  %v4745 = vmax.f32 %v4543, 0.0
  %v4746 = vmax.f32 %v4690, 0.0
  %v4747 = vmax.f32 %v4547, 0.0
  %v4748 = vmax.f32 %v4549, 0.0
  %v4749 = vmax.f32 %v4695, 0.0
  %v4750 = vmax.f32 %v4553, 0.0
  %v4751 = vmax.f32 %v4555, 0.0
  %v4752 = vmax.f32 %v4700, 0.0
  %v4753 = vmax.f32 %v4559, 0.0
  %v4754 = vmax.f32 %v4561, 0.0
  %v4755 = vmax.f32 %v4705, 0.0
  %s4756 = scalar_lea.vmem %s3, 1152
  %v4757 = vld [vmem:[%s4756] sm:$0xff]
  %v4758 = vld [vmem:[%s4756 + $0x8] sm:$0xff]
  %v4759 = vld [vmem:[%s4756 + $0x10] sm:$0xff]
  %v4760 = vld [vmem:[%s4756 + $0x18] sm:$0xff]
  %v4761 = vld [vmem:[%s4756 + $0x20] sm:$0xff]
  %v4762 = vld [vmem:[%s4756 + $0x28] sm:$0xff]
  %v4763 = vld [vmem:[%s4756 + $0x30] sm:$0xff]
  %v4764 = vld [vmem:[%s4756 + $0x38] sm:$0xff]
  %v4765 = vld [vmem:[%s4756 + $0x40] sm:$0xff]
  %v4766 = vld [vmem:[%s4756 + $0x48] sm:$0xff]
  %v4767 = vld [vmem:[%s4756 + $0x50] sm:$0xff]
  %v4768 = vld [vmem:[%s4756 + $0x58] sm:$0xff]
  %v4769 = vld [vmem:[%s4756 + $0x60] sm:$0xff]
  %v4770 = vld [vmem:[%s4756 + $0x68] sm:$0xff]
  %v4771 = vld [vmem:[%s4756 + $0x70] sm:$0xff]
  %v4772 = vld [vmem:[%s4756 + $0x78] sm:$0xff]
  %s4773 = scalar_lea.vmem %s4, 1152
  %v4774 = vld [vmem:[%s4773] sm:$0xff]
  %v4775 = vld [vmem:[%s4773 + $0x8] sm:$0xff]
  %v4776 = vld [vmem:[%s4773 + $0x10] sm:$0xff]
  %v4777 = vld [vmem:[%s4773 + $0x18] sm:$0xff]
  %v4778 = vld [vmem:[%s4773 + $0x20] sm:$0xff]
  %v4779 = vld [vmem:[%s4773 + $0x28] sm:$0xff]
  %v4780 = vld [vmem:[%s4773 + $0x30] sm:$0xff]
  %v4781 = vld [vmem:[%s4773 + $0x38] sm:$0xff]
  %v4782 = vld [vmem:[%s4773 + $0x40] sm:$0xff]
  %v4783 = vld [vmem:[%s4773 + $0x48] sm:$0xff]
  %v4784 = vld [vmem:[%s4773 + $0x50] sm:$0xff]
  %v4785 = vld [vmem:[%s4773 + $0x58] sm:$0xff]
  %v4786 = vld [vmem:[%s4773 + $0x60] sm:$0xff]
  %v4787 = vld [vmem:[%s4773 + $0x68] sm:$0xff]
  %v4788 = vld [vmem:[%s4773 + $0x70] sm:$0xff]
  %v4789 = vld [vmem:[%s4773 + $0x78] sm:$0xff]
  %4791 = vset.pattern.permute.xlu0 0
  %4792 = vperm.xlu0 %4791, %v4774
  %v4793 = vpop.permute.xlu0 %4792
  %4796 = vset.pattern.permute.xlu0 0
  %4797 = vperm.xlu0 %4796, %v4775
  %v4798 = vpop.permute.xlu0 %4797
  %4801 = vset.pattern.permute.xlu0 0
  %4802 = vperm.xlu0 %4801, %v4776
  %v4803 = vpop.permute.xlu0 %4802
  %4806 = vset.pattern.permute.xlu0 0
  %4807 = vperm.xlu0 %4806, %v4777
  %v4808 = vpop.permute.xlu0 %4807
  %4811 = vset.pattern.permute.xlu0 0
  %4812 = vperm.xlu0 %4811, %v4778
  %v4813 = vpop.permute.xlu0 %4812
  %4816 = vset.pattern.permute.xlu0 0
  %4817 = vperm.xlu0 %4816, %v4779
  %v4818 = vpop.permute.xlu0 %4817
  %4821 = vset.pattern.permute.xlu0 0
  %4822 = vperm.xlu0 %4821, %v4780
  %v4823 = vpop.permute.xlu0 %4822
  %4826 = vset.pattern.permute.xlu0 0
  %4827 = vperm.xlu0 %4826, %v4781
  %v4828 = vpop.permute.xlu0 %4827
  %4831 = vset.pattern.permute.xlu0 0
  %4832 = vperm.xlu0 %4831, %v4782
  %v4833 = vpop.permute.xlu0 %4832
  %4836 = vset.pattern.permute.xlu0 0
  %4837 = vperm.xlu0 %4836, %v4783
  %v4838 = vpop.permute.xlu0 %4837
  %4841 = vset.pattern.permute.xlu0 0
  %4842 = vperm.xlu0 %4841, %v4784
  %v4843 = vpop.permute.xlu0 %4842
  %4846 = vset.pattern.permute.xlu0 0
  %4847 = vperm.xlu0 %4846, %v4785
  %v4848 = vpop.permute.xlu0 %4847
  %4851 = vset.pattern.permute.xlu0 0
  %4852 = vperm.xlu0 %4851, %v4786
  %v4853 = vpop.permute.xlu0 %4852
  %4856 = vset.pattern.permute.xlu0 0
  %4857 = vperm.xlu0 %4856, %v4787
  %v4858 = vpop.permute.xlu0 %4857
  %4861 = vset.pattern.permute.xlu0 0
  %4862 = vperm.xlu0 %4861, %v4788
  %v4863 = vpop.permute.xlu0 %4862
  %4866 = vset.pattern.permute.xlu0 0
  %4867 = vperm.xlu0 %4866, %v4789
  %v4868 = vpop.permute.xlu0 %4867
  %4870 = vmatprep.subr.mxu0 %v4754
  %4871 = vmatpush1.msra.mxu0 %v4753
  %4872 = vmatprep.subr.mxu0 %v4751
  %4873 = vmatpush1.msra.mxu0 %v4750
  %4874 = vmatprep.subr.mxu0 %v4748
  %4875 = vmatpush1.msra.mxu0 %v4747
  %4876 = vmatprep.subr.mxu0 %v4745
  %4877 = vmatpush1.msra.mxu0 %v4744
  %4878 = vmatprep.subr.mxu0 %v4742
  %4879 = vmatpush1.msra.mxu0 %v4741
  %4880 = vmatprep.subr.mxu0 %v4739
  %4881 = vmatpush1.msra.mxu0 %v4738
  %4882 = vmatprep.subr.mxu0 %v4736
  %4883 = vmatpush1.msra.mxu0 %v4735
  %4884 = vmatprep.subr.mxu0 %v4733
  %4885 = vmatpush1.msra.mxu0 %v4732
  %4886 = vmatprep.subr.mxu0 %v4730
  %4887 = vmatpush1.msra.mxu0 %v4729
  %4888 = vmatprep.subr.mxu0 %v4727
  %4889 = vmatpush1.msra.mxu0 %v4726
  %4890 = vmatprep.subr.mxu0 %v4724
  %4891 = vmatpush1.msra.mxu0 %v4723
  %4892 = vmatprep.subr.mxu0 %v4721
  %4893 = vmatpush1.msra.mxu0 %v4720
  %4894 = vmatprep.subr.mxu0 %v4718
  %4895 = vmatpush1.msra.mxu0 %v4717
  %4896 = vmatprep.subr.mxu0 %v4715
  %4897 = vmatpush1.msra.mxu0 %v4714
  %4898 = vmatprep.subr.mxu0 %v4712
  %4899 = vmatpush1.msra.mxu0 %v4711
  %4900 = vmatprep.subr.mxu0 %v4709
  %4901 = vmatpush1.msra.mxu0 %v4708
  %4902 = vmatprep.subr.mxu0 0.0
  %4903 = vmatpush2.msra.mxu0 0.0
  %4904 = vmatprep.subr.mxu0 0.0
  %4905 = vmatpush2.msra.mxu0 0.0
  %4906 = vmatprep.subr.mxu0 0.0
  %4907 = vmatpush2.msra.mxu0 0.0
  %4908 = vmatprep.subr.mxu0 0.0
  %4909 = vmatpush2.msra.mxu0 0.0
  %4910 = vmatprep.subr.mxu0 0.0
  %4911 = vmatpush2.msra.mxu0 0.0
  %4912 = vmatprep.subr.mxu0 0.0
  %4913 = vmatpush2.msra.mxu0 0.0
  %4914 = vmatprep.subr.mxu0 0.0
  %4915 = vmatpush2.msra.mxu0 0.0
  %4916 = vmatprep.subr.mxu0 0.0
  %4917 = vmatpush2.msra.mxu0 0.0
  %4918 = vmatprep.subr.mxu0 0.0
  %4919 = vmatpush2.msra.mxu0 0.0
  %4920 = vmatprep.subr.mxu0 0.0
  %4921 = vmatpush2.msra.mxu0 0.0
  %4922 = vmatprep.subr.mxu0 0.0
  %4923 = vmatpush2.msra.mxu0 0.0
  %4924 = vmatprep.subr.mxu0 0.0
  %4925 = vmatpush2.msra.mxu0 0.0
  %4926 = vmatprep.subr.mxu0 0.0
  %4927 = vmatpush2.msra.mxu0 0.0
  %4928 = vmatprep.subr.mxu0 0.0
  %4929 = vmatpush2.msra.mxu0 0.0
  %4930 = vmatprep.subr.mxu0 0.0
  %4931 = vmatpush2.msra.mxu0 0.0
  %4932 = vmatprep.subr.mxu0 0.0
  %4933 = vmatpush2.msra.mxu0 0.0
  %4934 = vmatprep.mubr.f32.mxu0 0.0
  %4935 = vmatmul.mubr.f32.gmra.mxu0 %v4757
  %v4936 = vpop.f32.mrf.mxu0
  %v4937 = vadd.f32 %v4793, %v4936
  %v4938 = vpop.f32.mrf.mxu0
  %v4939 = vadd.f32 %v4793, %v4938
  %4940 = vmatprep.mubr.f32.mxu0 0.0
  %4941 = vmatmul.mubr.f32.gmra.mxu0 %v4758
  %v4942 = vpop.f32.mrf.mxu0
  %v4943 = vadd.f32 %v4798, %v4942
  %v4944 = vpop.f32.mrf.mxu0
  %v4945 = vadd.f32 %v4798, %v4944
  %4946 = vmatprep.mubr.f32.mxu0 0.0
  %4947 = vmatmul.mubr.f32.gmra.mxu0 %v4759
  %v4948 = vpop.f32.mrf.mxu0
  %v4949 = vadd.f32 %v4803, %v4948
  %v4950 = vpop.f32.mrf.mxu0
  %v4951 = vadd.f32 %v4803, %v4950
  %4952 = vmatprep.mubr.f32.mxu0 0.0
  %4953 = vmatmul.mubr.f32.gmra.mxu0 %v4760
  %v4954 = vpop.f32.mrf.mxu0
  %v4955 = vadd.f32 %v4808, %v4954
  %v4956 = vpop.f32.mrf.mxu0
  %v4957 = vadd.f32 %v4808, %v4956
  %4958 = vmatprep.mubr.f32.mxu0 0.0
  %4959 = vmatmul.mubr.f32.gmra.mxu0 %v4761
  %v4960 = vpop.f32.mrf.mxu0
  %v4961 = vadd.f32 %v4813, %v4960
  %v4962 = vpop.f32.mrf.mxu0
  %v4963 = vadd.f32 %v4813, %v4962
  %4964 = vmatprep.mubr.f32.mxu0 0.0
  %4965 = vmatmul.mubr.f32.gmra.mxu0 %v4762
  %v4966 = vpop.f32.mrf.mxu0
  %v4967 = vadd.f32 %v4818, %v4966
  %v4968 = vpop.f32.mrf.mxu0
  %v4969 = vadd.f32 %v4818, %v4968
  %4970 = vmatprep.mubr.f32.mxu0 0.0
  %4971 = vmatmul.mubr.f32.gmra.mxu0 %v4763
  %v4972 = vpop.f32.mrf.mxu0
  %v4973 = vadd.f32 %v4823, %v4972
  %v4974 = vpop.f32.mrf.mxu0
  %v4975 = vadd.f32 %v4823, %v4974
  %4976 = vmatprep.mubr.f32.mxu0 0.0
  %4977 = vmatmul.mubr.f32.gmra.mxu0 %v4764
  %v4978 = vpop.f32.mrf.mxu0
  %v4979 = vadd.f32 %v4828, %v4978
  %v4980 = vpop.f32.mrf.mxu0
  %v4981 = vadd.f32 %v4828, %v4980
  %4982 = vmatprep.mubr.f32.mxu0 0.0
  %4983 = vmatmul.mubr.f32.gmra.mxu0 %v4765
  %v4984 = vpop.f32.mrf.mxu0
  %v4985 = vadd.f32 %v4833, %v4984
  %v4986 = vpop.f32.mrf.mxu0
  %v4987 = vadd.f32 %v4833, %v4986
  %4988 = vmatprep.mubr.f32.mxu0 0.0
  %4989 = vmatmul.mubr.f32.gmra.mxu0 %v4766
  %v4990 = vpop.f32.mrf.mxu0
  %v4991 = vadd.f32 %v4838, %v4990
  %v4992 = vpop.f32.mrf.mxu0
  %v4993 = vadd.f32 %v4838, %v4992
  %4994 = vmatprep.mubr.f32.mxu0 0.0
  %4995 = vmatmul.mubr.f32.gmra.mxu0 %v4767
  %v4996 = vpop.f32.mrf.mxu0
  %v4997 = vadd.f32 %v4843, %v4996
  %v4998 = vpop.f32.mrf.mxu0
  %v4999 = vadd.f32 %v4843, %v4998
  %5000 = vmatprep.mubr.f32.mxu0 0.0
  %5001 = vmatmul.mubr.f32.gmra.mxu0 %v4768
  %v5002 = vpop.f32.mrf.mxu0
  %v5003 = vadd.f32 %v4848, %v5002
  %v5004 = vpop.f32.mrf.mxu0
  %v5005 = vadd.f32 %v4848, %v5004
  %5006 = vmatprep.mubr.f32.mxu0 0.0
  %5007 = vmatmul.mubr.f32.gmra.mxu0 %v4769
  %v5008 = vpop.f32.mrf.mxu0
  %v5009 = vadd.f32 %v4853, %v5008
  %v5010 = vpop.f32.mrf.mxu0
  %v5011 = vadd.f32 %v4853, %v5010
  %5012 = vmatprep.mubr.f32.mxu0 0.0
  %5013 = vmatmul.mubr.f32.gmra.mxu0 %v4770
  %v5014 = vpop.f32.mrf.mxu0
  %v5015 = vadd.f32 %v4858, %v5014
  %v5016 = vpop.f32.mrf.mxu0
  %v5017 = vadd.f32 %v4858, %v5016
  %5018 = vmatprep.mubr.f32.mxu0 0.0
  %5019 = vmatmul.mubr.f32.gmra.mxu0 %v4771
  %v5020 = vpop.f32.mrf.mxu0
  %v5021 = vadd.f32 %v4863, %v5020
  %v5022 = vpop.f32.mrf.mxu0
  %v5023 = vadd.f32 %v4863, %v5022
  %5024 = vmatprep.mubr.f32.mxu0 0.0
  %5025 = vmatmul.mubr.f32.gmra.mxu0 %v4772
  %v5026 = vpop.f32.mrf.mxu0
  %v5027 = vadd.f32 %v4868, %v5026
  %v5028 = vpop.f32.mrf.mxu0
  %v5029 = vadd.f32 %v4868, %v5028
  %5030 = vdwg.mxu0
  %5031 = vmatprep.subr.mxu0 0.0
  %5032 = vmatpush1.msra.mxu0 %v4755
  %5033 = vmatprep.subr.mxu0 0.0
  %5034 = vmatpush1.msra.mxu0 %v4752
  %5035 = vmatprep.subr.mxu0 0.0
  %5036 = vmatpush1.msra.mxu0 %v4749
  %5037 = vmatprep.subr.mxu0 0.0
  %5038 = vmatpush1.msra.mxu0 %v4746
  %5039 = vmatprep.subr.mxu0 0.0
  %5040 = vmatpush1.msra.mxu0 %v4743
  %5041 = vmatprep.subr.mxu0 0.0
  %5042 = vmatpush1.msra.mxu0 %v4740
  %5043 = vmatprep.subr.mxu0 0.0
  %5044 = vmatpush1.msra.mxu0 %v4737
  %5045 = vmatprep.subr.mxu0 0.0
  %5046 = vmatpush1.msra.mxu0 %v4734
  %5047 = vmatprep.subr.mxu0 0.0
  %5048 = vmatpush1.msra.mxu0 %v4731
  %5049 = vmatprep.subr.mxu0 0.0
  %5050 = vmatpush1.msra.mxu0 %v4728
  %5051 = vmatprep.subr.mxu0 0.0
  %5052 = vmatpush1.msra.mxu0 %v4725
  %5053 = vmatprep.subr.mxu0 0.0
  %5054 = vmatpush1.msra.mxu0 %v4722
  %5055 = vmatprep.subr.mxu0 0.0
  %5056 = vmatpush1.msra.mxu0 %v4719
  %5057 = vmatprep.subr.mxu0 0.0
  %5058 = vmatpush1.msra.mxu0 %v4716
  %5059 = vmatprep.subr.mxu0 0.0
  %5060 = vmatpush1.msra.mxu0 %v4713
  %5061 = vmatprep.subr.mxu0 0.0
  %5062 = vmatpush1.msra.mxu0 %v4710
  %5063 = vmatprep.subr.mxu0 0.0
  %5064 = vmatpush2.msra.mxu0 0.0
  %5065 = vmatprep.subr.mxu0 0.0
  %5066 = vmatpush2.msra.mxu0 0.0
  %5067 = vmatprep.subr.mxu0 0.0
  %5068 = vmatpush2.msra.mxu0 0.0
  %5069 = vmatprep.subr.mxu0 0.0
  %5070 = vmatpush2.msra.mxu0 0.0
  %5071 = vmatprep.subr.mxu0 0.0
  %5072 = vmatpush2.msra.mxu0 0.0
  %5073 = vmatprep.subr.mxu0 0.0
  %5074 = vmatpush2.msra.mxu0 0.0
  %5075 = vmatprep.subr.mxu0 0.0
  %5076 = vmatpush2.msra.mxu0 0.0
  %5077 = vmatprep.subr.mxu0 0.0
  %5078 = vmatpush2.msra.mxu0 0.0
  %5079 = vmatprep.subr.mxu0 0.0
  %5080 = vmatpush2.msra.mxu0 0.0
  %5081 = vmatprep.subr.mxu0 0.0
  %5082 = vmatpush2.msra.mxu0 0.0
  %5083 = vmatprep.subr.mxu0 0.0
  %5084 = vmatpush2.msra.mxu0 0.0
  %5085 = vmatprep.subr.mxu0 0.0
  %5086 = vmatpush2.msra.mxu0 0.0
  %5087 = vmatprep.subr.mxu0 0.0
  %5088 = vmatpush2.msra.mxu0 0.0
  %5089 = vmatprep.subr.mxu0 0.0
  %5090 = vmatpush2.msra.mxu0 0.0
  %5091 = vmatprep.subr.mxu0 0.0
  %5092 = vmatpush2.msra.mxu0 0.0
  %5093 = vmatprep.subr.mxu0 0.0
  %5094 = vmatpush2.msra.mxu0 0.0
  %5095 = vmatprep.mubr.f32.mxu0 0.0
  %5096 = vmatmul.mubr.f32.gmra.mxu0 %v4757
  %v5097 = vpop.f32.mrf.mxu0
  %v5098 = vadd.f32 %v4793, %v5097
  %v5099 = vpop.f32.mrf.mxu0
  %5100 = vmatprep.mubr.f32.mxu0 0.0
  %5101 = vmatmul.mubr.f32.gmra.mxu0 %v4758
  %v5102 = vpop.f32.mrf.mxu0
  %v5103 = vadd.f32 %v4798, %v5102
  %v5104 = vpop.f32.mrf.mxu0
  %5105 = vmatprep.mubr.f32.mxu0 0.0
  %5106 = vmatmul.mubr.f32.gmra.mxu0 %v4759
  %v5107 = vpop.f32.mrf.mxu0
  %v5108 = vadd.f32 %v4803, %v5107
  %v5109 = vpop.f32.mrf.mxu0
  %5110 = vmatprep.mubr.f32.mxu0 0.0
  %5111 = vmatmul.mubr.f32.gmra.mxu0 %v4760
  %v5112 = vpop.f32.mrf.mxu0
  %v5113 = vadd.f32 %v4808, %v5112
  %v5114 = vpop.f32.mrf.mxu0
  %5115 = vmatprep.mubr.f32.mxu0 0.0
  %5116 = vmatmul.mubr.f32.gmra.mxu0 %v4761
  %v5117 = vpop.f32.mrf.mxu0
  %v5118 = vadd.f32 %v4813, %v5117
  %v5119 = vpop.f32.mrf.mxu0
  %5120 = vmatprep.mubr.f32.mxu0 0.0
  %5121 = vmatmul.mubr.f32.gmra.mxu0 %v4762
  %v5122 = vpop.f32.mrf.mxu0
  %v5123 = vadd.f32 %v4818, %v5122
  %v5124 = vpop.f32.mrf.mxu0
  %5125 = vmatprep.mubr.f32.mxu0 0.0
  %5126 = vmatmul.mubr.f32.gmra.mxu0 %v4763
  %v5127 = vpop.f32.mrf.mxu0
  %v5128 = vadd.f32 %v4823, %v5127
  %v5129 = vpop.f32.mrf.mxu0
  %5130 = vmatprep.mubr.f32.mxu0 0.0
  %5131 = vmatmul.mubr.f32.gmra.mxu0 %v4764
  %v5132 = vpop.f32.mrf.mxu0
  %v5133 = vadd.f32 %v4828, %v5132
  %v5134 = vpop.f32.mrf.mxu0
  %5135 = vmatprep.mubr.f32.mxu0 0.0
  %5136 = vmatmul.mubr.f32.gmra.mxu0 %v4765
  %v5137 = vpop.f32.mrf.mxu0
  %v5138 = vadd.f32 %v4833, %v5137
  %v5139 = vpop.f32.mrf.mxu0
  %5140 = vmatprep.mubr.f32.mxu0 0.0
  %5141 = vmatmul.mubr.f32.gmra.mxu0 %v4766
  %v5142 = vpop.f32.mrf.mxu0
  %v5143 = vadd.f32 %v4838, %v5142
  %v5144 = vpop.f32.mrf.mxu0
  %5145 = vmatprep.mubr.f32.mxu0 0.0
  %5146 = vmatmul.mubr.f32.gmra.mxu0 %v4767
  %v5147 = vpop.f32.mrf.mxu0
  %v5148 = vadd.f32 %v4843, %v5147
  %v5149 = vpop.f32.mrf.mxu0
  %5150 = vmatprep.mubr.f32.mxu0 0.0
  %5151 = vmatmul.mubr.f32.gmra.mxu0 %v4768
  %v5152 = vpop.f32.mrf.mxu0
  %v5153 = vadd.f32 %v4848, %v5152
  %v5154 = vpop.f32.mrf.mxu0
  %5155 = vmatprep.mubr.f32.mxu0 0.0
  %5156 = vmatmul.mubr.f32.gmra.mxu0 %v4769
  %v5157 = vpop.f32.mrf.mxu0
  %v5158 = vadd.f32 %v4853, %v5157
  %v5159 = vpop.f32.mrf.mxu0
  %5160 = vmatprep.mubr.f32.mxu0 0.0
  %5161 = vmatmul.mubr.f32.gmra.mxu0 %v4770
  %v5162 = vpop.f32.mrf.mxu0
  %v5163 = vadd.f32 %v4858, %v5162
  %v5164 = vpop.f32.mrf.mxu0
  %5165 = vmatprep.mubr.f32.mxu0 0.0
  %5166 = vmatmul.mubr.f32.gmra.mxu0 %v4771
  %v5167 = vpop.f32.mrf.mxu0
  %v5168 = vadd.f32 %v4863, %v5167
  %v5169 = vpop.f32.mrf.mxu0
  %5170 = vmatprep.mubr.f32.mxu0 0.0
  %5171 = vmatmul.mubr.f32.gmra.mxu0 %v4772
  %v5172 = vpop.f32.mrf.mxu0
  %v5173 = vadd.f32 %v4868, %v5172
  %v5174 = vpop.f32.mrf.mxu0
  %5175 = vdwg.mxu0
  %v5176 = vmax.f32 %v4937, 0.0
  %v5177 = vmax.f32 %v4939, 0.0
  %v5178 = vmax.f32 %v5098, 0.0
  %v5179 = vmax.f32 %v4943, 0.0
  %v5180 = vmax.f32 %v4945, 0.0
  %v5181 = vmax.f32 %v5103, 0.0
  %v5182 = vmax.f32 %v4949, 0.0
  %v5183 = vmax.f32 %v4951, 0.0
  %v5184 = vmax.f32 %v5108, 0.0
  %v5185 = vmax.f32 %v4955, 0.0
  %v5186 = vmax.f32 %v4957, 0.0
  %v5187 = vmax.f32 %v5113, 0.0
  %v5188 = vmax.f32 %v4961, 0.0
  %v5189 = vmax.f32 %v4963, 0.0
  %v5190 = vmax.f32 %v5118, 0.0
  %v5191 = vmax.f32 %v4967, 0.0
  %v5192 = vmax.f32 %v4969, 0.0
  %v5193 = vmax.f32 %v5123, 0.0
  %v5194 = vmax.f32 %v4973, 0.0
  %v5195 = vmax.f32 %v4975, 0.0
  %v5196 = vmax.f32 %v5128, 0.0
  %v5197 = vmax.f32 %v4979, 0.0
  %v5198 = vmax.f32 %v4981, 0.0
  %v5199 = vmax.f32 %v5133, 0.0
  %v5200 = vmax.f32 %v4985, 0.0
  %v5201 = vmax.f32 %v4987, 0.0
  %v5202 = vmax.f32 %v5138, 0.0
  %v5203 = vmax.f32 %v4991, 0.0
  %v5204 = vmax.f32 %v4993, 0.0
  %v5205 = vmax.f32 %v5143, 0.0
  %v5206 = vmax.f32 %v4997, 0.0
  %v5207 = vmax.f32 %v4999, 0.0
  %v5208 = vmax.f32 %v5148, 0.0
  %v5209 = vmax.f32 %v5003, 0.0
  %v5210 = vmax.f32 %v5005, 0.0
  %v5211 = vmax.f32 %v5153, 0.0
  %v5212 = vmax.f32 %v5009, 0.0
  %v5213 = vmax.f32 %v5011, 0.0
  %v5214 = vmax.f32 %v5158, 0.0
  %v5215 = vmax.f32 %v5015, 0.0
  %v5216 = vmax.f32 %v5017, 0.0
  %v5217 = vmax.f32 %v5163, 0.0
  %v5218 = vmax.f32 %v5021, 0.0
  %v5219 = vmax.f32 %v5023, 0.0
  %v5220 = vmax.f32 %v5168, 0.0
  %v5221 = vmax.f32 %v5027, 0.0
  %v5222 = vmax.f32 %v5029, 0.0
  %v5223 = vmax.f32 %v5173, 0.0
  %s5224 = scalar_lea.vmem %s3, 1280
  %v5225 = vld [vmem:[%s5224] sm:$0xff]
  %v5226 = vld [vmem:[%s5224 + $0x8] sm:$0xff]
  %v5227 = vld [vmem:[%s5224 + $0x10] sm:$0xff]
  %v5228 = vld [vmem:[%s5224 + $0x18] sm:$0xff]
  %v5229 = vld [vmem:[%s5224 + $0x20] sm:$0xff]
  %v5230 = vld [vmem:[%s5224 + $0x28] sm:$0xff]
  %v5231 = vld [vmem:[%s5224 + $0x30] sm:$0xff]
  %v5232 = vld [vmem:[%s5224 + $0x38] sm:$0xff]
  %v5233 = vld [vmem:[%s5224 + $0x40] sm:$0xff]
  %v5234 = vld [vmem:[%s5224 + $0x48] sm:$0xff]
  %v5235 = vld [vmem:[%s5224 + $0x50] sm:$0xff]
  %v5236 = vld [vmem:[%s5224 + $0x58] sm:$0xff]
  %v5237 = vld [vmem:[%s5224 + $0x60] sm:$0xff]
  %v5238 = vld [vmem:[%s5224 + $0x68] sm:$0xff]
  %v5239 = vld [vmem:[%s5224 + $0x70] sm:$0xff]
  %v5240 = vld [vmem:[%s5224 + $0x78] sm:$0xff]
  %s5241 = scalar_lea.vmem %s4, 1280
  %v5242 = vld [vmem:[%s5241] sm:$0xff]
  %v5243 = vld [vmem:[%s5241 + $0x8] sm:$0xff]
  %v5244 = vld [vmem:[%s5241 + $0x10] sm:$0xff]
  %v5245 = vld [vmem:[%s5241 + $0x18] sm:$0xff]
  %v5246 = vld [vmem:[%s5241 + $0x20] sm:$0xff]
  %v5247 = vld [vmem:[%s5241 + $0x28] sm:$0xff]
  %v5248 = vld [vmem:[%s5241 + $0x30] sm:$0xff]
  %v5249 = vld [vmem:[%s5241 + $0x38] sm:$0xff]
  %v5250 = vld [vmem:[%s5241 + $0x40] sm:$0xff]
  %v5251 = vld [vmem:[%s5241 + $0x48] sm:$0xff]
  %v5252 = vld [vmem:[%s5241 + $0x50] sm:$0xff]
  %v5253 = vld [vmem:[%s5241 + $0x58] sm:$0xff]
  %v5254 = vld [vmem:[%s5241 + $0x60] sm:$0xff]
  %v5255 = vld [vmem:[%s5241 + $0x68] sm:$0xff]
  %v5256 = vld [vmem:[%s5241 + $0x70] sm:$0xff]
  %v5257 = vld [vmem:[%s5241 + $0x78] sm:$0xff]
  %5259 = vset.pattern.permute.xlu0 0
  %5260 = vperm.xlu0 %5259, %v5242
  %v5261 = vpop.permute.xlu0 %5260
  %5264 = vset.pattern.permute.xlu0 0
  %5265 = vperm.xlu0 %5264, %v5243
  %v5266 = vpop.permute.xlu0 %5265
  %5269 = vset.pattern.permute.xlu0 0
  %5270 = vperm.xlu0 %5269, %v5244
  %v5271 = vpop.permute.xlu0 %5270
  %5274 = vset.pattern.permute.xlu0 0
  %5275 = vperm.xlu0 %5274, %v5245
  %v5276 = vpop.permute.xlu0 %5275
  %5279 = vset.pattern.permute.xlu0 0
  %5280 = vperm.xlu0 %5279, %v5246
  %v5281 = vpop.permute.xlu0 %5280
  %5284 = vset.pattern.permute.xlu0 0
  %5285 = vperm.xlu0 %5284, %v5247
  %v5286 = vpop.permute.xlu0 %5285
  %5289 = vset.pattern.permute.xlu0 0
  %5290 = vperm.xlu0 %5289, %v5248
  %v5291 = vpop.permute.xlu0 %5290
  %5294 = vset.pattern.permute.xlu0 0
  %5295 = vperm.xlu0 %5294, %v5249
  %v5296 = vpop.permute.xlu0 %5295
  %5299 = vset.pattern.permute.xlu0 0
  %5300 = vperm.xlu0 %5299, %v5250
  %v5301 = vpop.permute.xlu0 %5300
  %5304 = vset.pattern.permute.xlu0 0
  %5305 = vperm.xlu0 %5304, %v5251
  %v5306 = vpop.permute.xlu0 %5305
  %5309 = vset.pattern.permute.xlu0 0
  %5310 = vperm.xlu0 %5309, %v5252
  %v5311 = vpop.permute.xlu0 %5310
  %5314 = vset.pattern.permute.xlu0 0
  %5315 = vperm.xlu0 %5314, %v5253
  %v5316 = vpop.permute.xlu0 %5315
  %5319 = vset.pattern.permute.xlu0 0
  %5320 = vperm.xlu0 %5319, %v5254
  %v5321 = vpop.permute.xlu0 %5320
  %5324 = vset.pattern.permute.xlu0 0
  %5325 = vperm.xlu0 %5324, %v5255
  %v5326 = vpop.permute.xlu0 %5325
  %5329 = vset.pattern.permute.xlu0 0
  %5330 = vperm.xlu0 %5329, %v5256
  %v5331 = vpop.permute.xlu0 %5330
  %5334 = vset.pattern.permute.xlu0 0
  %5335 = vperm.xlu0 %5334, %v5257
  %v5336 = vpop.permute.xlu0 %5335
  %5338 = vmatprep.subr.mxu0 %v5222
  %5339 = vmatpush1.msra.mxu0 %v5221
  %5340 = vmatprep.subr.mxu0 %v5219
  %5341 = vmatpush1.msra.mxu0 %v5218
  %5342 = vmatprep.subr.mxu0 %v5216
  %5343 = vmatpush1.msra.mxu0 %v5215
  %5344 = vmatprep.subr.mxu0 %v5213
  %5345 = vmatpush1.msra.mxu0 %v5212
  %5346 = vmatprep.subr.mxu0 %v5210
  %5347 = vmatpush1.msra.mxu0 %v5209
  %5348 = vmatprep.subr.mxu0 %v5207
  %5349 = vmatpush1.msra.mxu0 %v5206
  %5350 = vmatprep.subr.mxu0 %v5204
  %5351 = vmatpush1.msra.mxu0 %v5203
  %5352 = vmatprep.subr.mxu0 %v5201
  %5353 = vmatpush1.msra.mxu0 %v5200
  %5354 = vmatprep.subr.mxu0 %v5198
  %5355 = vmatpush1.msra.mxu0 %v5197
  %5356 = vmatprep.subr.mxu0 %v5195
  %5357 = vmatpush1.msra.mxu0 %v5194
  %5358 = vmatprep.subr.mxu0 %v5192
  %5359 = vmatpush1.msra.mxu0 %v5191
  %5360 = vmatprep.subr.mxu0 %v5189
  %5361 = vmatpush1.msra.mxu0 %v5188
  %5362 = vmatprep.subr.mxu0 %v5186
  %5363 = vmatpush1.msra.mxu0 %v5185
  %5364 = vmatprep.subr.mxu0 %v5183
  %5365 = vmatpush1.msra.mxu0 %v5182
  %5366 = vmatprep.subr.mxu0 %v5180
  %5367 = vmatpush1.msra.mxu0 %v5179
  %5368 = vmatprep.subr.mxu0 %v5177
  %5369 = vmatpush1.msra.mxu0 %v5176
  %5370 = vmatprep.subr.mxu0 0.0
  %5371 = vmatpush2.msra.mxu0 0.0
  %5372 = vmatprep.subr.mxu0 0.0
  %5373 = vmatpush2.msra.mxu0 0.0
  %5374 = vmatprep.subr.mxu0 0.0
  %5375 = vmatpush2.msra.mxu0 0.0
  %5376 = vmatprep.subr.mxu0 0.0
  %5377 = vmatpush2.msra.mxu0 0.0
  %5378 = vmatprep.subr.mxu0 0.0
  %5379 = vmatpush2.msra.mxu0 0.0
  %5380 = vmatprep.subr.mxu0 0.0
  %5381 = vmatpush2.msra.mxu0 0.0
  %5382 = vmatprep.subr.mxu0 0.0
  %5383 = vmatpush2.msra.mxu0 0.0
  %5384 = vmatprep.subr.mxu0 0.0
  %5385 = vmatpush2.msra.mxu0 0.0
  %5386 = vmatprep.subr.mxu0 0.0
  %5387 = vmatpush2.msra.mxu0 0.0
  %5388 = vmatprep.subr.mxu0 0.0
  %5389 = vmatpush2.msra.mxu0 0.0
  %5390 = vmatprep.subr.mxu0 0.0
  %5391 = vmatpush2.msra.mxu0 0.0
  %5392 = vmatprep.subr.mxu0 0.0
  %5393 = vmatpush2.msra.mxu0 0.0
  %5394 = vmatprep.subr.mxu0 0.0
  %5395 = vmatpush2.msra.mxu0 0.0
  %5396 = vmatprep.subr.mxu0 0.0
  %5397 = vmatpush2.msra.mxu0 0.0
  %5398 = vmatprep.subr.mxu0 0.0
  %5399 = vmatpush2.msra.mxu0 0.0
  %5400 = vmatprep.subr.mxu0 0.0
  %5401 = vmatpush2.msra.mxu0 0.0
  %5402 = vmatprep.mubr.f32.mxu0 0.0
  %5403 = vmatmul.mubr.f32.gmra.mxu0 %v5225
  %v5404 = vpop.f32.mrf.mxu0
  %v5405 = vadd.f32 %v5261, %v5404
  %v5406 = vpop.f32.mrf.mxu0
  %v5407 = vadd.f32 %v5261, %v5406
  %5408 = vmatprep.mubr.f32.mxu0 0.0
  %5409 = vmatmul.mubr.f32.gmra.mxu0 %v5226
  %v5410 = vpop.f32.mrf.mxu0
  %v5411 = vadd.f32 %v5266, %v5410
  %v5412 = vpop.f32.mrf.mxu0
  %v5413 = vadd.f32 %v5266, %v5412
  %5414 = vmatprep.mubr.f32.mxu0 0.0
  %5415 = vmatmul.mubr.f32.gmra.mxu0 %v5227
  %v5416 = vpop.f32.mrf.mxu0
  %v5417 = vadd.f32 %v5271, %v5416
  %v5418 = vpop.f32.mrf.mxu0
  %v5419 = vadd.f32 %v5271, %v5418
  %5420 = vmatprep.mubr.f32.mxu0 0.0
  %5421 = vmatmul.mubr.f32.gmra.mxu0 %v5228
  %v5422 = vpop.f32.mrf.mxu0
  %v5423 = vadd.f32 %v5276, %v5422
  %v5424 = vpop.f32.mrf.mxu0
  %v5425 = vadd.f32 %v5276, %v5424
  %5426 = vmatprep.mubr.f32.mxu0 0.0
  %5427 = vmatmul.mubr.f32.gmra.mxu0 %v5229
  %v5428 = vpop.f32.mrf.mxu0
  %v5429 = vadd.f32 %v5281, %v5428
  %v5430 = vpop.f32.mrf.mxu0
  %v5431 = vadd.f32 %v5281, %v5430
  %5432 = vmatprep.mubr.f32.mxu0 0.0
  %5433 = vmatmul.mubr.f32.gmra.mxu0 %v5230
  %v5434 = vpop.f32.mrf.mxu0
  %v5435 = vadd.f32 %v5286, %v5434
  %v5436 = vpop.f32.mrf.mxu0
  %v5437 = vadd.f32 %v5286, %v5436
  %5438 = vmatprep.mubr.f32.mxu0 0.0
  %5439 = vmatmul.mubr.f32.gmra.mxu0 %v5231
  %v5440 = vpop.f32.mrf.mxu0
  %v5441 = vadd.f32 %v5291, %v5440
  %v5442 = vpop.f32.mrf.mxu0
  %v5443 = vadd.f32 %v5291, %v5442
  %5444 = vmatprep.mubr.f32.mxu0 0.0
  %5445 = vmatmul.mubr.f32.gmra.mxu0 %v5232
  %v5446 = vpop.f32.mrf.mxu0
  %v5447 = vadd.f32 %v5296, %v5446
  %v5448 = vpop.f32.mrf.mxu0
  %v5449 = vadd.f32 %v5296, %v5448
  %5450 = vmatprep.mubr.f32.mxu0 0.0
  %5451 = vmatmul.mubr.f32.gmra.mxu0 %v5233
  %v5452 = vpop.f32.mrf.mxu0
  %v5453 = vadd.f32 %v5301, %v5452
  %v5454 = vpop.f32.mrf.mxu0
  %v5455 = vadd.f32 %v5301, %v5454
  %5456 = vmatprep.mubr.f32.mxu0 0.0
  %5457 = vmatmul.mubr.f32.gmra.mxu0 %v5234
  %v5458 = vpop.f32.mrf.mxu0
  %v5459 = vadd.f32 %v5306, %v5458
  %v5460 = vpop.f32.mrf.mxu0
  %v5461 = vadd.f32 %v5306, %v5460
  %5462 = vmatprep.mubr.f32.mxu0 0.0
  %5463 = vmatmul.mubr.f32.gmra.mxu0 %v5235
  %v5464 = vpop.f32.mrf.mxu0
  %v5465 = vadd.f32 %v5311, %v5464
  %v5466 = vpop.f32.mrf.mxu0
  %v5467 = vadd.f32 %v5311, %v5466
  %5468 = vmatprep.mubr.f32.mxu0 0.0
  %5469 = vmatmul.mubr.f32.gmra.mxu0 %v5236
  %v5470 = vpop.f32.mrf.mxu0
  %v5471 = vadd.f32 %v5316, %v5470
  %v5472 = vpop.f32.mrf.mxu0
  %v5473 = vadd.f32 %v5316, %v5472
  %5474 = vmatprep.mubr.f32.mxu0 0.0
  %5475 = vmatmul.mubr.f32.gmra.mxu0 %v5237
  %v5476 = vpop.f32.mrf.mxu0
  %v5477 = vadd.f32 %v5321, %v5476
  %v5478 = vpop.f32.mrf.mxu0
  %v5479 = vadd.f32 %v5321, %v5478
  %5480 = vmatprep.mubr.f32.mxu0 0.0
  %5481 = vmatmul.mubr.f32.gmra.mxu0 %v5238
  %v5482 = vpop.f32.mrf.mxu0
  %v5483 = vadd.f32 %v5326, %v5482
  %v5484 = vpop.f32.mrf.mxu0
  %v5485 = vadd.f32 %v5326, %v5484
  %5486 = vmatprep.mubr.f32.mxu0 0.0
  %5487 = vmatmul.mubr.f32.gmra.mxu0 %v5239
  %v5488 = vpop.f32.mrf.mxu0
  %v5489 = vadd.f32 %v5331, %v5488
  %v5490 = vpop.f32.mrf.mxu0
  %v5491 = vadd.f32 %v5331, %v5490
  %5492 = vmatprep.mubr.f32.mxu0 0.0
  %5493 = vmatmul.mubr.f32.gmra.mxu0 %v5240
  %v5494 = vpop.f32.mrf.mxu0
  %v5495 = vadd.f32 %v5336, %v5494
  %v5496 = vpop.f32.mrf.mxu0
  %v5497 = vadd.f32 %v5336, %v5496
  %5498 = vdwg.mxu0
  %5499 = vmatprep.subr.mxu0 0.0
  %5500 = vmatpush1.msra.mxu0 %v5223
  %5501 = vmatprep.subr.mxu0 0.0
  %5502 = vmatpush1.msra.mxu0 %v5220
  %5503 = vmatprep.subr.mxu0 0.0
  %5504 = vmatpush1.msra.mxu0 %v5217
  %5505 = vmatprep.subr.mxu0 0.0
  %5506 = vmatpush1.msra.mxu0 %v5214
  %5507 = vmatprep.subr.mxu0 0.0
  %5508 = vmatpush1.msra.mxu0 %v5211
  %5509 = vmatprep.subr.mxu0 0.0
  %5510 = vmatpush1.msra.mxu0 %v5208
  %5511 = vmatprep.subr.mxu0 0.0
  %5512 = vmatpush1.msra.mxu0 %v5205
  %5513 = vmatprep.subr.mxu0 0.0
  %5514 = vmatpush1.msra.mxu0 %v5202
  %5515 = vmatprep.subr.mxu0 0.0
  %5516 = vmatpush1.msra.mxu0 %v5199
  %5517 = vmatprep.subr.mxu0 0.0
  %5518 = vmatpush1.msra.mxu0 %v5196
  %5519 = vmatprep.subr.mxu0 0.0
  %5520 = vmatpush1.msra.mxu0 %v5193
  %5521 = vmatprep.subr.mxu0 0.0
  %5522 = vmatpush1.msra.mxu0 %v5190
  %5523 = vmatprep.subr.mxu0 0.0
  %5524 = vmatpush1.msra.mxu0 %v5187
  %5525 = vmatprep.subr.mxu0 0.0
  %5526 = vmatpush1.msra.mxu0 %v5184
  %5527 = vmatprep.subr.mxu0 0.0
  %5528 = vmatpush1.msra.mxu0 %v5181
  %5529 = vmatprep.subr.mxu0 0.0
  %5530 = vmatpush1.msra.mxu0 %v5178
  %5531 = vmatprep.subr.mxu0 0.0
  %5532 = vmatpush2.msra.mxu0 0.0
  %5533 = vmatprep.subr.mxu0 0.0
  %5534 = vmatpush2.msra.mxu0 0.0
  %5535 = vmatprep.subr.mxu0 0.0
  %5536 = vmatpush2.msra.mxu0 0.0
  %5537 = vmatprep.subr.mxu0 0.0
  %5538 = vmatpush2.msra.mxu0 0.0
  %5539 = vmatprep.subr.mxu0 0.0
  %5540 = vmatpush2.msra.mxu0 0.0
  %5541 = vmatprep.subr.mxu0 0.0
  %5542 = vmatpush2.msra.mxu0 0.0
  %5543 = vmatprep.subr.mxu0 0.0
  %5544 = vmatpush2.msra.mxu0 0.0
  %5545 = vmatprep.subr.mxu0 0.0
  %5546 = vmatpush2.msra.mxu0 0.0
  %5547 = vmatprep.subr.mxu0 0.0
  %5548 = vmatpush2.msra.mxu0 0.0
  %5549 = vmatprep.subr.mxu0 0.0
  %5550 = vmatpush2.msra.mxu0 0.0
  %5551 = vmatprep.subr.mxu0 0.0
  %5552 = vmatpush2.msra.mxu0 0.0
  %5553 = vmatprep.subr.mxu0 0.0
  %5554 = vmatpush2.msra.mxu0 0.0
  %5555 = vmatprep.subr.mxu0 0.0
  %5556 = vmatpush2.msra.mxu0 0.0
  %5557 = vmatprep.subr.mxu0 0.0
  %5558 = vmatpush2.msra.mxu0 0.0
  %5559 = vmatprep.subr.mxu0 0.0
  %5560 = vmatpush2.msra.mxu0 0.0
  %5561 = vmatprep.subr.mxu0 0.0
  %5562 = vmatpush2.msra.mxu0 0.0
  %5563 = vmatprep.mubr.f32.mxu0 0.0
  %5564 = vmatmul.mubr.f32.gmra.mxu0 %v5225
  %v5565 = vpop.f32.mrf.mxu0
  %v5566 = vadd.f32 %v5261, %v5565
  %v5567 = vpop.f32.mrf.mxu0
  %5568 = vmatprep.mubr.f32.mxu0 0.0
  %5569 = vmatmul.mubr.f32.gmra.mxu0 %v5226
  %v5570 = vpop.f32.mrf.mxu0
  %v5571 = vadd.f32 %v5266, %v5570
  %v5572 = vpop.f32.mrf.mxu0
  %5573 = vmatprep.mubr.f32.mxu0 0.0
  %5574 = vmatmul.mubr.f32.gmra.mxu0 %v5227
  %v5575 = vpop.f32.mrf.mxu0
  %v5576 = vadd.f32 %v5271, %v5575
  %v5577 = vpop.f32.mrf.mxu0
  %5578 = vmatprep.mubr.f32.mxu0 0.0
  %5579 = vmatmul.mubr.f32.gmra.mxu0 %v5228
  %v5580 = vpop.f32.mrf.mxu0
  %v5581 = vadd.f32 %v5276, %v5580
  %v5582 = vpop.f32.mrf.mxu0
  %5583 = vmatprep.mubr.f32.mxu0 0.0
  %5584 = vmatmul.mubr.f32.gmra.mxu0 %v5229
  %v5585 = vpop.f32.mrf.mxu0
  %v5586 = vadd.f32 %v5281, %v5585
  %v5587 = vpop.f32.mrf.mxu0
  %5588 = vmatprep.mubr.f32.mxu0 0.0
  %5589 = vmatmul.mubr.f32.gmra.mxu0 %v5230
  %v5590 = vpop.f32.mrf.mxu0
  %v5591 = vadd.f32 %v5286, %v5590
  %v5592 = vpop.f32.mrf.mxu0
  %5593 = vmatprep.mubr.f32.mxu0 0.0
  %5594 = vmatmul.mubr.f32.gmra.mxu0 %v5231
  %v5595 = vpop.f32.mrf.mxu0
  %v5596 = vadd.f32 %v5291, %v5595
  %v5597 = vpop.f32.mrf.mxu0
  %5598 = vmatprep.mubr.f32.mxu0 0.0
  %5599 = vmatmul.mubr.f32.gmra.mxu0 %v5232
  %v5600 = vpop.f32.mrf.mxu0
  %v5601 = vadd.f32 %v5296, %v5600
  %v5602 = vpop.f32.mrf.mxu0
  %5603 = vmatprep.mubr.f32.mxu0 0.0
  %5604 = vmatmul.mubr.f32.gmra.mxu0 %v5233
  %v5605 = vpop.f32.mrf.mxu0
  %v5606 = vadd.f32 %v5301, %v5605
  %v5607 = vpop.f32.mrf.mxu0
  %5608 = vmatprep.mubr.f32.mxu0 0.0
  %5609 = vmatmul.mubr.f32.gmra.mxu0 %v5234
  %v5610 = vpop.f32.mrf.mxu0
  %v5611 = vadd.f32 %v5306, %v5610
  %v5612 = vpop.f32.mrf.mxu0
  %5613 = vmatprep.mubr.f32.mxu0 0.0
  %5614 = vmatmul.mubr.f32.gmra.mxu0 %v5235
  %v5615 = vpop.f32.mrf.mxu0
  %v5616 = vadd.f32 %v5311, %v5615
  %v5617 = vpop.f32.mrf.mxu0
  %5618 = vmatprep.mubr.f32.mxu0 0.0
  %5619 = vmatmul.mubr.f32.gmra.mxu0 %v5236
  %v5620 = vpop.f32.mrf.mxu0
  %v5621 = vadd.f32 %v5316, %v5620
  %v5622 = vpop.f32.mrf.mxu0
  %5623 = vmatprep.mubr.f32.mxu0 0.0
  %5624 = vmatmul.mubr.f32.gmra.mxu0 %v5237
  %v5625 = vpop.f32.mrf.mxu0
  %v5626 = vadd.f32 %v5321, %v5625
  %v5627 = vpop.f32.mrf.mxu0
  %5628 = vmatprep.mubr.f32.mxu0 0.0
  %5629 = vmatmul.mubr.f32.gmra.mxu0 %v5238
  %v5630 = vpop.f32.mrf.mxu0
  %v5631 = vadd.f32 %v5326, %v5630
  %v5632 = vpop.f32.mrf.mxu0
  %5633 = vmatprep.mubr.f32.mxu0 0.0
  %5634 = vmatmul.mubr.f32.gmra.mxu0 %v5239
  %v5635 = vpop.f32.mrf.mxu0
  %v5636 = vadd.f32 %v5331, %v5635
  %v5637 = vpop.f32.mrf.mxu0
  %5638 = vmatprep.mubr.f32.mxu0 0.0
  %5639 = vmatmul.mubr.f32.gmra.mxu0 %v5240
  %v5640 = vpop.f32.mrf.mxu0
  %v5641 = vadd.f32 %v5336, %v5640
  %v5642 = vpop.f32.mrf.mxu0
  %5643 = vdwg.mxu0
  %v5644 = vmax.f32 %v5405, 0.0
  %v5645 = vmax.f32 %v5407, 0.0
  %v5646 = vmax.f32 %v5566, 0.0
  %v5647 = vmax.f32 %v5411, 0.0
  %v5648 = vmax.f32 %v5413, 0.0
  %v5649 = vmax.f32 %v5571, 0.0
  %v5650 = vmax.f32 %v5417, 0.0
  %v5651 = vmax.f32 %v5419, 0.0
  %v5652 = vmax.f32 %v5576, 0.0
  %v5653 = vmax.f32 %v5423, 0.0
  %v5654 = vmax.f32 %v5425, 0.0
  %v5655 = vmax.f32 %v5581, 0.0
  %v5656 = vmax.f32 %v5429, 0.0
  %v5657 = vmax.f32 %v5431, 0.0
  %v5658 = vmax.f32 %v5586, 0.0
  %v5659 = vmax.f32 %v5435, 0.0
  %v5660 = vmax.f32 %v5437, 0.0
  %v5661 = vmax.f32 %v5591, 0.0
  %v5662 = vmax.f32 %v5441, 0.0
  %v5663 = vmax.f32 %v5443, 0.0
  %v5664 = vmax.f32 %v5596, 0.0
  %v5665 = vmax.f32 %v5447, 0.0
  %v5666 = vmax.f32 %v5449, 0.0
  %v5667 = vmax.f32 %v5601, 0.0
  %v5668 = vmax.f32 %v5453, 0.0
  %v5669 = vmax.f32 %v5455, 0.0
  %v5670 = vmax.f32 %v5606, 0.0
  %v5671 = vmax.f32 %v5459, 0.0
  %v5672 = vmax.f32 %v5461, 0.0
  %v5673 = vmax.f32 %v5611, 0.0
  %v5674 = vmax.f32 %v5465, 0.0
  %v5675 = vmax.f32 %v5467, 0.0
  %v5676 = vmax.f32 %v5616, 0.0
  %v5677 = vmax.f32 %v5471, 0.0
  %v5678 = vmax.f32 %v5473, 0.0
  %v5679 = vmax.f32 %v5621, 0.0
  %v5680 = vmax.f32 %v5477, 0.0
  %v5681 = vmax.f32 %v5479, 0.0
  %v5682 = vmax.f32 %v5626, 0.0
  %v5683 = vmax.f32 %v5483, 0.0
  %v5684 = vmax.f32 %v5485, 0.0
  %v5685 = vmax.f32 %v5631, 0.0
  %v5686 = vmax.f32 %v5489, 0.0
  %v5687 = vmax.f32 %v5491, 0.0
  %v5688 = vmax.f32 %v5636, 0.0
  %v5689 = vmax.f32 %v5495, 0.0
  %v5690 = vmax.f32 %v5497, 0.0
  %v5691 = vmax.f32 %v5641, 0.0
  %s5692 = scalar_lea.vmem %s3, 1408
  %v5693 = vld [vmem:[%s5692] sm:$0xff]
  %v5694 = vld [vmem:[%s5692 + $0x8] sm:$0xff]
  %v5695 = vld [vmem:[%s5692 + $0x10] sm:$0xff]
  %v5696 = vld [vmem:[%s5692 + $0x18] sm:$0xff]
  %v5697 = vld [vmem:[%s5692 + $0x20] sm:$0xff]
  %v5698 = vld [vmem:[%s5692 + $0x28] sm:$0xff]
  %v5699 = vld [vmem:[%s5692 + $0x30] sm:$0xff]
  %v5700 = vld [vmem:[%s5692 + $0x38] sm:$0xff]
  %v5701 = vld [vmem:[%s5692 + $0x40] sm:$0xff]
  %v5702 = vld [vmem:[%s5692 + $0x48] sm:$0xff]
  %v5703 = vld [vmem:[%s5692 + $0x50] sm:$0xff]
  %v5704 = vld [vmem:[%s5692 + $0x58] sm:$0xff]
  %v5705 = vld [vmem:[%s5692 + $0x60] sm:$0xff]
  %v5706 = vld [vmem:[%s5692 + $0x68] sm:$0xff]
  %v5707 = vld [vmem:[%s5692 + $0x70] sm:$0xff]
  %v5708 = vld [vmem:[%s5692 + $0x78] sm:$0xff]
  %s5709 = scalar_lea.vmem %s4, 1408
  %v5710 = vld [vmem:[%s5709] sm:$0xff]
  %v5711 = vld [vmem:[%s5709 + $0x8] sm:$0xff]
  %v5712 = vld [vmem:[%s5709 + $0x10] sm:$0xff]
  %v5713 = vld [vmem:[%s5709 + $0x18] sm:$0xff]
  %v5714 = vld [vmem:[%s5709 + $0x20] sm:$0xff]
  %v5715 = vld [vmem:[%s5709 + $0x28] sm:$0xff]
  %v5716 = vld [vmem:[%s5709 + $0x30] sm:$0xff]
  %v5717 = vld [vmem:[%s5709 + $0x38] sm:$0xff]
  %v5718 = vld [vmem:[%s5709 + $0x40] sm:$0xff]
  %v5719 = vld [vmem:[%s5709 + $0x48] sm:$0xff]
  %v5720 = vld [vmem:[%s5709 + $0x50] sm:$0xff]
  %v5721 = vld [vmem:[%s5709 + $0x58] sm:$0xff]
  %v5722 = vld [vmem:[%s5709 + $0x60] sm:$0xff]
  %v5723 = vld [vmem:[%s5709 + $0x68] sm:$0xff]
  %v5724 = vld [vmem:[%s5709 + $0x70] sm:$0xff]
  %v5725 = vld [vmem:[%s5709 + $0x78] sm:$0xff]
  %5727 = vset.pattern.permute.xlu0 0
  %5728 = vperm.xlu0 %5727, %v5710
  %v5729 = vpop.permute.xlu0 %5728
  %5732 = vset.pattern.permute.xlu0 0
  %5733 = vperm.xlu0 %5732, %v5711
  %v5734 = vpop.permute.xlu0 %5733
  %5737 = vset.pattern.permute.xlu0 0
  %5738 = vperm.xlu0 %5737, %v5712
  %v5739 = vpop.permute.xlu0 %5738
  %5742 = vset.pattern.permute.xlu0 0
  %5743 = vperm.xlu0 %5742, %v5713
  %v5744 = vpop.permute.xlu0 %5743
  %5747 = vset.pattern.permute.xlu0 0
  %5748 = vperm.xlu0 %5747, %v5714
  %v5749 = vpop.permute.xlu0 %5748
  %5752 = vset.pattern.permute.xlu0 0
  %5753 = vperm.xlu0 %5752, %v5715
  %v5754 = vpop.permute.xlu0 %5753
  %5757 = vset.pattern.permute.xlu0 0
  %5758 = vperm.xlu0 %5757, %v5716
  %v5759 = vpop.permute.xlu0 %5758
  %5762 = vset.pattern.permute.xlu0 0
  %5763 = vperm.xlu0 %5762, %v5717
  %v5764 = vpop.permute.xlu0 %5763
  %5767 = vset.pattern.permute.xlu0 0
  %5768 = vperm.xlu0 %5767, %v5718
  %v5769 = vpop.permute.xlu0 %5768
  %5772 = vset.pattern.permute.xlu0 0
  %5773 = vperm.xlu0 %5772, %v5719
  %v5774 = vpop.permute.xlu0 %5773
  %5777 = vset.pattern.permute.xlu0 0
  %5778 = vperm.xlu0 %5777, %v5720
  %v5779 = vpop.permute.xlu0 %5778
  %5782 = vset.pattern.permute.xlu0 0
  %5783 = vperm.xlu0 %5782, %v5721
  %v5784 = vpop.permute.xlu0 %5783
  %5787 = vset.pattern.permute.xlu0 0
  %5788 = vperm.xlu0 %5787, %v5722
  %v5789 = vpop.permute.xlu0 %5788
  %5792 = vset.pattern.permute.xlu0 0
  %5793 = vperm.xlu0 %5792, %v5723
  %v5794 = vpop.permute.xlu0 %5793
  %5797 = vset.pattern.permute.xlu0 0
  %5798 = vperm.xlu0 %5797, %v5724
  %v5799 = vpop.permute.xlu0 %5798
  %5802 = vset.pattern.permute.xlu0 0
  %5803 = vperm.xlu0 %5802, %v5725
  %v5804 = vpop.permute.xlu0 %5803
  %5806 = vmatprep.subr.mxu0 %v5690
  %5807 = vmatpush1.msra.mxu0 %v5689
  %5808 = vmatprep.subr.mxu0 %v5687
  %5809 = vmatpush1.msra.mxu0 %v5686
  %5810 = vmatprep.subr.mxu0 %v5684
  %5811 = vmatpush1.msra.mxu0 %v5683
  %5812 = vmatprep.subr.mxu0 %v5681
  %5813 = vmatpush1.msra.mxu0 %v5680
  %5814 = vmatprep.subr.mxu0 %v5678
  %5815 = vmatpush1.msra.mxu0 %v5677
  %5816 = vmatprep.subr.mxu0 %v5675
  %5817 = vmatpush1.msra.mxu0 %v5674
  %5818 = vmatprep.subr.mxu0 %v5672
  %5819 = vmatpush1.msra.mxu0 %v5671
  %5820 = vmatprep.subr.mxu0 %v5669
  %5821 = vmatpush1.msra.mxu0 %v5668
  %5822 = vmatprep.subr.mxu0 %v5666
  %5823 = vmatpush1.msra.mxu0 %v5665
  %5824 = vmatprep.subr.mxu0 %v5663
  %5825 = vmatpush1.msra.mxu0 %v5662
  %5826 = vmatprep.subr.mxu0 %v5660
  %5827 = vmatpush1.msra.mxu0 %v5659
  %5828 = vmatprep.subr.mxu0 %v5657
  %5829 = vmatpush1.msra.mxu0 %v5656
  %5830 = vmatprep.subr.mxu0 %v5654
  %5831 = vmatpush1.msra.mxu0 %v5653
  %5832 = vmatprep.subr.mxu0 %v5651
  %5833 = vmatpush1.msra.mxu0 %v5650
  %5834 = vmatprep.subr.mxu0 %v5648
  %5835 = vmatpush1.msra.mxu0 %v5647
  %5836 = vmatprep.subr.mxu0 %v5645
  %5837 = vmatpush1.msra.mxu0 %v5644
  %5838 = vmatprep.subr.mxu0 0.0
  %5839 = vmatpush2.msra.mxu0 0.0
  %5840 = vmatprep.subr.mxu0 0.0
  %5841 = vmatpush2.msra.mxu0 0.0
  %5842 = vmatprep.subr.mxu0 0.0
  %5843 = vmatpush2.msra.mxu0 0.0
  %5844 = vmatprep.subr.mxu0 0.0
  %5845 = vmatpush2.msra.mxu0 0.0
  %5846 = vmatprep.subr.mxu0 0.0
  %5847 = vmatpush2.msra.mxu0 0.0
  %5848 = vmatprep.subr.mxu0 0.0
  %5849 = vmatpush2.msra.mxu0 0.0
  %5850 = vmatprep.subr.mxu0 0.0
  %5851 = vmatpush2.msra.mxu0 0.0
  %5852 = vmatprep.subr.mxu0 0.0
  %5853 = vmatpush2.msra.mxu0 0.0
  %5854 = vmatprep.subr.mxu0 0.0
  %5855 = vmatpush2.msra.mxu0 0.0
  %5856 = vmatprep.subr.mxu0 0.0
  %5857 = vmatpush2.msra.mxu0 0.0
  %5858 = vmatprep.subr.mxu0 0.0
  %5859 = vmatpush2.msra.mxu0 0.0
  %5860 = vmatprep.subr.mxu0 0.0
  %5861 = vmatpush2.msra.mxu0 0.0
  %5862 = vmatprep.subr.mxu0 0.0
  %5863 = vmatpush2.msra.mxu0 0.0
  %5864 = vmatprep.subr.mxu0 0.0
  %5865 = vmatpush2.msra.mxu0 0.0
  %5866 = vmatprep.subr.mxu0 0.0
  %5867 = vmatpush2.msra.mxu0 0.0
  %5868 = vmatprep.subr.mxu0 0.0
  %5869 = vmatpush2.msra.mxu0 0.0
  %5870 = vmatprep.mubr.f32.mxu0 0.0
  %5871 = vmatmul.mubr.f32.gmra.mxu0 %v5693
  %v5872 = vpop.f32.mrf.mxu0
  %v5873 = vadd.f32 %v5729, %v5872
  %v5874 = vpop.f32.mrf.mxu0
  %v5875 = vadd.f32 %v5729, %v5874
  %5876 = vmatprep.mubr.f32.mxu0 0.0
  %5877 = vmatmul.mubr.f32.gmra.mxu0 %v5694
  %v5878 = vpop.f32.mrf.mxu0
  %v5879 = vadd.f32 %v5734, %v5878
  %v5880 = vpop.f32.mrf.mxu0
  %v5881 = vadd.f32 %v5734, %v5880
  %5882 = vmatprep.mubr.f32.mxu0 0.0
  %5883 = vmatmul.mubr.f32.gmra.mxu0 %v5695
  %v5884 = vpop.f32.mrf.mxu0
  %v5885 = vadd.f32 %v5739, %v5884
  %v5886 = vpop.f32.mrf.mxu0
  %v5887 = vadd.f32 %v5739, %v5886
  %5888 = vmatprep.mubr.f32.mxu0 0.0
  %5889 = vmatmul.mubr.f32.gmra.mxu0 %v5696
  %v5890 = vpop.f32.mrf.mxu0
  %v5891 = vadd.f32 %v5744, %v5890
  %v5892 = vpop.f32.mrf.mxu0
  %v5893 = vadd.f32 %v5744, %v5892
  %5894 = vmatprep.mubr.f32.mxu0 0.0
  %5895 = vmatmul.mubr.f32.gmra.mxu0 %v5697
  %v5896 = vpop.f32.mrf.mxu0
  %v5897 = vadd.f32 %v5749, %v5896
  %v5898 = vpop.f32.mrf.mxu0
  %v5899 = vadd.f32 %v5749, %v5898
  %5900 = vmatprep.mubr.f32.mxu0 0.0
  %5901 = vmatmul.mubr.f32.gmra.mxu0 %v5698
  %v5902 = vpop.f32.mrf.mxu0
  %v5903 = vadd.f32 %v5754, %v5902
  %v5904 = vpop.f32.mrf.mxu0
  %v5905 = vadd.f32 %v5754, %v5904
  %5906 = vmatprep.mubr.f32.mxu0 0.0
  %5907 = vmatmul.mubr.f32.gmra.mxu0 %v5699
  %v5908 = vpop.f32.mrf.mxu0
  %v5909 = vadd.f32 %v5759, %v5908
  %v5910 = vpop.f32.mrf.mxu0
  %v5911 = vadd.f32 %v5759, %v5910
  %5912 = vmatprep.mubr.f32.mxu0 0.0
  %5913 = vmatmul.mubr.f32.gmra.mxu0 %v5700
  %v5914 = vpop.f32.mrf.mxu0
  %v5915 = vadd.f32 %v5764, %v5914
  %v5916 = vpop.f32.mrf.mxu0
  %v5917 = vadd.f32 %v5764, %v5916
  %5918 = vmatprep.mubr.f32.mxu0 0.0
  %5919 = vmatmul.mubr.f32.gmra.mxu0 %v5701
  %v5920 = vpop.f32.mrf.mxu0
  %v5921 = vadd.f32 %v5769, %v5920
  %v5922 = vpop.f32.mrf.mxu0
  %v5923 = vadd.f32 %v5769, %v5922
  %5924 = vmatprep.mubr.f32.mxu0 0.0
  %5925 = vmatmul.mubr.f32.gmra.mxu0 %v5702
  %v5926 = vpop.f32.mrf.mxu0
  %v5927 = vadd.f32 %v5774, %v5926
  %v5928 = vpop.f32.mrf.mxu0
  %v5929 = vadd.f32 %v5774, %v5928
  %5930 = vmatprep.mubr.f32.mxu0 0.0
  %5931 = vmatmul.mubr.f32.gmra.mxu0 %v5703
  %v5932 = vpop.f32.mrf.mxu0
  %v5933 = vadd.f32 %v5779, %v5932
  %v5934 = vpop.f32.mrf.mxu0
  %v5935 = vadd.f32 %v5779, %v5934
  %5936 = vmatprep.mubr.f32.mxu0 0.0
  %5937 = vmatmul.mubr.f32.gmra.mxu0 %v5704
  %v5938 = vpop.f32.mrf.mxu0
  %v5939 = vadd.f32 %v5784, %v5938
  %v5940 = vpop.f32.mrf.mxu0
  %v5941 = vadd.f32 %v5784, %v5940
  %5942 = vmatprep.mubr.f32.mxu0 0.0
  %5943 = vmatmul.mubr.f32.gmra.mxu0 %v5705
  %v5944 = vpop.f32.mrf.mxu0
  %v5945 = vadd.f32 %v5789, %v5944
  %v5946 = vpop.f32.mrf.mxu0
  %v5947 = vadd.f32 %v5789, %v5946
  %5948 = vmatprep.mubr.f32.mxu0 0.0
  %5949 = vmatmul.mubr.f32.gmra.mxu0 %v5706
  %v5950 = vpop.f32.mrf.mxu0
  %v5951 = vadd.f32 %v5794, %v5950
  %v5952 = vpop.f32.mrf.mxu0
  %v5953 = vadd.f32 %v5794, %v5952
  %5954 = vmatprep.mubr.f32.mxu0 0.0
  %5955 = vmatmul.mubr.f32.gmra.mxu0 %v5707
  %v5956 = vpop.f32.mrf.mxu0
  %v5957 = vadd.f32 %v5799, %v5956
  %v5958 = vpop.f32.mrf.mxu0
  %v5959 = vadd.f32 %v5799, %v5958
  %5960 = vmatprep.mubr.f32.mxu0 0.0
  %5961 = vmatmul.mubr.f32.gmra.mxu0 %v5708
  %v5962 = vpop.f32.mrf.mxu0
  %v5963 = vadd.f32 %v5804, %v5962
  %v5964 = vpop.f32.mrf.mxu0
  %v5965 = vadd.f32 %v5804, %v5964
  %5966 = vdwg.mxu0
  %5967 = vmatprep.subr.mxu0 0.0
  %5968 = vmatpush1.msra.mxu0 %v5691
  %5969 = vmatprep.subr.mxu0 0.0
  %5970 = vmatpush1.msra.mxu0 %v5688
  %5971 = vmatprep.subr.mxu0 0.0
  %5972 = vmatpush1.msra.mxu0 %v5685
  %5973 = vmatprep.subr.mxu0 0.0
  %5974 = vmatpush1.msra.mxu0 %v5682
  %5975 = vmatprep.subr.mxu0 0.0
  %5976 = vmatpush1.msra.mxu0 %v5679
  %5977 = vmatprep.subr.mxu0 0.0
  %5978 = vmatpush1.msra.mxu0 %v5676
  %5979 = vmatprep.subr.mxu0 0.0
  %5980 = vmatpush1.msra.mxu0 %v5673
  %5981 = vmatprep.subr.mxu0 0.0
  %5982 = vmatpush1.msra.mxu0 %v5670
  %5983 = vmatprep.subr.mxu0 0.0
  %5984 = vmatpush1.msra.mxu0 %v5667
  %5985 = vmatprep.subr.mxu0 0.0
  %5986 = vmatpush1.msra.mxu0 %v5664
  %5987 = vmatprep.subr.mxu0 0.0
  %5988 = vmatpush1.msra.mxu0 %v5661
  %5989 = vmatprep.subr.mxu0 0.0
  %5990 = vmatpush1.msra.mxu0 %v5658
  %5991 = vmatprep.subr.mxu0 0.0
  %5992 = vmatpush1.msra.mxu0 %v5655
  %5993 = vmatprep.subr.mxu0 0.0
  %5994 = vmatpush1.msra.mxu0 %v5652
  %5995 = vmatprep.subr.mxu0 0.0
  %5996 = vmatpush1.msra.mxu0 %v5649
  %5997 = vmatprep.subr.mxu0 0.0
  %5998 = vmatpush1.msra.mxu0 %v5646
  %5999 = vmatprep.subr.mxu0 0.0
  %6000 = vmatpush2.msra.mxu0 0.0
  %6001 = vmatprep.subr.mxu0 0.0
  %6002 = vmatpush2.msra.mxu0 0.0
  %6003 = vmatprep.subr.mxu0 0.0
  %6004 = vmatpush2.msra.mxu0 0.0
  %6005 = vmatprep.subr.mxu0 0.0
  %6006 = vmatpush2.msra.mxu0 0.0
  %6007 = vmatprep.subr.mxu0 0.0
  %6008 = vmatpush2.msra.mxu0 0.0
  %6009 = vmatprep.subr.mxu0 0.0
  %6010 = vmatpush2.msra.mxu0 0.0
  %6011 = vmatprep.subr.mxu0 0.0
  %6012 = vmatpush2.msra.mxu0 0.0
  %6013 = vmatprep.subr.mxu0 0.0
  %6014 = vmatpush2.msra.mxu0 0.0
  %6015 = vmatprep.subr.mxu0 0.0
  %6016 = vmatpush2.msra.mxu0 0.0
  %6017 = vmatprep.subr.mxu0 0.0
  %6018 = vmatpush2.msra.mxu0 0.0
  %6019 = vmatprep.subr.mxu0 0.0
  %6020 = vmatpush2.msra.mxu0 0.0
  %6021 = vmatprep.subr.mxu0 0.0
  %6022 = vmatpush2.msra.mxu0 0.0
  %6023 = vmatprep.subr.mxu0 0.0
  %6024 = vmatpush2.msra.mxu0 0.0
  %6025 = vmatprep.subr.mxu0 0.0
  %6026 = vmatpush2.msra.mxu0 0.0
  %6027 = vmatprep.subr.mxu0 0.0
  %6028 = vmatpush2.msra.mxu0 0.0
  %6029 = vmatprep.subr.mxu0 0.0
  %6030 = vmatpush2.msra.mxu0 0.0
  %6031 = vmatprep.mubr.f32.mxu0 0.0
  %6032 = vmatmul.mubr.f32.gmra.mxu0 %v5693
  %v6033 = vpop.f32.mrf.mxu0
  %v6034 = vadd.f32 %v5729, %v6033
  %v6035 = vpop.f32.mrf.mxu0
  %6036 = vmatprep.mubr.f32.mxu0 0.0
  %6037 = vmatmul.mubr.f32.gmra.mxu0 %v5694
  %v6038 = vpop.f32.mrf.mxu0
  %v6039 = vadd.f32 %v5734, %v6038
  %v6040 = vpop.f32.mrf.mxu0
  %6041 = vmatprep.mubr.f32.mxu0 0.0
  %6042 = vmatmul.mubr.f32.gmra.mxu0 %v5695
  %v6043 = vpop.f32.mrf.mxu0
  %v6044 = vadd.f32 %v5739, %v6043
  %v6045 = vpop.f32.mrf.mxu0
  %6046 = vmatprep.mubr.f32.mxu0 0.0
  %6047 = vmatmul.mubr.f32.gmra.mxu0 %v5696
  %v6048 = vpop.f32.mrf.mxu0
  %v6049 = vadd.f32 %v5744, %v6048
  %v6050 = vpop.f32.mrf.mxu0
  %6051 = vmatprep.mubr.f32.mxu0 0.0
  %6052 = vmatmul.mubr.f32.gmra.mxu0 %v5697
  %v6053 = vpop.f32.mrf.mxu0
  %v6054 = vadd.f32 %v5749, %v6053
  %v6055 = vpop.f32.mrf.mxu0
  %6056 = vmatprep.mubr.f32.mxu0 0.0
  %6057 = vmatmul.mubr.f32.gmra.mxu0 %v5698
  %v6058 = vpop.f32.mrf.mxu0
  %v6059 = vadd.f32 %v5754, %v6058
  %v6060 = vpop.f32.mrf.mxu0
  %6061 = vmatprep.mubr.f32.mxu0 0.0
  %6062 = vmatmul.mubr.f32.gmra.mxu0 %v5699
  %v6063 = vpop.f32.mrf.mxu0
  %v6064 = vadd.f32 %v5759, %v6063
  %v6065 = vpop.f32.mrf.mxu0
  %6066 = vmatprep.mubr.f32.mxu0 0.0
  %6067 = vmatmul.mubr.f32.gmra.mxu0 %v5700
  %v6068 = vpop.f32.mrf.mxu0
  %v6069 = vadd.f32 %v5764, %v6068
  %v6070 = vpop.f32.mrf.mxu0
  %6071 = vmatprep.mubr.f32.mxu0 0.0
  %6072 = vmatmul.mubr.f32.gmra.mxu0 %v5701
  %v6073 = vpop.f32.mrf.mxu0
  %v6074 = vadd.f32 %v5769, %v6073
  %v6075 = vpop.f32.mrf.mxu0
  %6076 = vmatprep.mubr.f32.mxu0 0.0
  %6077 = vmatmul.mubr.f32.gmra.mxu0 %v5702
  %v6078 = vpop.f32.mrf.mxu0
  %v6079 = vadd.f32 %v5774, %v6078
  %v6080 = vpop.f32.mrf.mxu0
  %6081 = vmatprep.mubr.f32.mxu0 0.0
  %6082 = vmatmul.mubr.f32.gmra.mxu0 %v5703
  %v6083 = vpop.f32.mrf.mxu0
  %v6084 = vadd.f32 %v5779, %v6083
  %v6085 = vpop.f32.mrf.mxu0
  %6086 = vmatprep.mubr.f32.mxu0 0.0
  %6087 = vmatmul.mubr.f32.gmra.mxu0 %v5704
  %v6088 = vpop.f32.mrf.mxu0
  %v6089 = vadd.f32 %v5784, %v6088
  %v6090 = vpop.f32.mrf.mxu0
  %6091 = vmatprep.mubr.f32.mxu0 0.0
  %6092 = vmatmul.mubr.f32.gmra.mxu0 %v5705
  %v6093 = vpop.f32.mrf.mxu0
  %v6094 = vadd.f32 %v5789, %v6093
  %v6095 = vpop.f32.mrf.mxu0
  %6096 = vmatprep.mubr.f32.mxu0 0.0
  %6097 = vmatmul.mubr.f32.gmra.mxu0 %v5706
  %v6098 = vpop.f32.mrf.mxu0
  %v6099 = vadd.f32 %v5794, %v6098
  %v6100 = vpop.f32.mrf.mxu0
  %6101 = vmatprep.mubr.f32.mxu0 0.0
  %6102 = vmatmul.mubr.f32.gmra.mxu0 %v5707
  %v6103 = vpop.f32.mrf.mxu0
  %v6104 = vadd.f32 %v5799, %v6103
  %v6105 = vpop.f32.mrf.mxu0
  %6106 = vmatprep.mubr.f32.mxu0 0.0
  %6107 = vmatmul.mubr.f32.gmra.mxu0 %v5708
  %v6108 = vpop.f32.mrf.mxu0
  %v6109 = vadd.f32 %v5804, %v6108
  %v6110 = vpop.f32.mrf.mxu0
  %6111 = vdwg.mxu0
  %v6112 = vmax.f32 %v5873, 0.0
  %v6113 = vmax.f32 %v5875, 0.0
  %v6114 = vmax.f32 %v6034, 0.0
  %v6115 = vmax.f32 %v5879, 0.0
  %v6116 = vmax.f32 %v5881, 0.0
  %v6117 = vmax.f32 %v6039, 0.0
  %v6118 = vmax.f32 %v5885, 0.0
  %v6119 = vmax.f32 %v5887, 0.0
  %v6120 = vmax.f32 %v6044, 0.0
  %v6121 = vmax.f32 %v5891, 0.0
  %v6122 = vmax.f32 %v5893, 0.0
  %v6123 = vmax.f32 %v6049, 0.0
  %v6124 = vmax.f32 %v5897, 0.0
  %v6125 = vmax.f32 %v5899, 0.0
  %v6126 = vmax.f32 %v6054, 0.0
  %v6127 = vmax.f32 %v5903, 0.0
  %v6128 = vmax.f32 %v5905, 0.0
  %v6129 = vmax.f32 %v6059, 0.0
  %v6130 = vmax.f32 %v5909, 0.0
  %v6131 = vmax.f32 %v5911, 0.0
  %v6132 = vmax.f32 %v6064, 0.0
  %v6133 = vmax.f32 %v5915, 0.0
  %v6134 = vmax.f32 %v5917, 0.0
  %v6135 = vmax.f32 %v6069, 0.0
  %v6136 = vmax.f32 %v5921, 0.0
  %v6137 = vmax.f32 %v5923, 0.0
  %v6138 = vmax.f32 %v6074, 0.0
  %v6139 = vmax.f32 %v5927, 0.0
  %v6140 = vmax.f32 %v5929, 0.0
  %v6141 = vmax.f32 %v6079, 0.0
  %v6142 = vmax.f32 %v5933, 0.0
  %v6143 = vmax.f32 %v5935, 0.0
  %v6144 = vmax.f32 %v6084, 0.0
  %v6145 = vmax.f32 %v5939, 0.0
  %v6146 = vmax.f32 %v5941, 0.0
  %v6147 = vmax.f32 %v6089, 0.0
  %v6148 = vmax.f32 %v5945, 0.0
  %v6149 = vmax.f32 %v5947, 0.0
  %v6150 = vmax.f32 %v6094, 0.0
  %v6151 = vmax.f32 %v5951, 0.0
  %v6152 = vmax.f32 %v5953, 0.0
  %v6153 = vmax.f32 %v6099, 0.0
  %v6154 = vmax.f32 %v5957, 0.0
  %v6155 = vmax.f32 %v5959, 0.0
  %v6156 = vmax.f32 %v6104, 0.0
  %v6157 = vmax.f32 %v5963, 0.0
  %v6158 = vmax.f32 %v5965, 0.0
  %v6159 = vmax.f32 %v6109, 0.0
  %v6160 = vld [vmem:[%s5] sm:$0xff]
  %v6161 = vld [vmem:[%s5 + $0x8] sm:$0xff]
  %v6162 = vld [vmem:[%s5 + $0x10] sm:$0xff]
  %v6163 = vld [vmem:[%s5 + $0x18] sm:$0xff]
  %v6164 = vld [vmem:[%s5 + $0x20] sm:$0xff]
  %v6165 = vld [vmem:[%s5 + $0x28] sm:$0xff]
  %v6166 = vld [vmem:[%s5 + $0x30] sm:$0xff]
  %v6167 = vld [vmem:[%s5 + $0x38] sm:$0xff]
  %v6168 = vld [vmem:[%s5 + $0x40] sm:$0xff]
  %v6169 = vld [vmem:[%s5 + $0x48] sm:$0xff]
  %v6170 = vld [vmem:[%s5 + $0x50] sm:$0xff]
  %v6171 = vld [vmem:[%s5 + $0x58] sm:$0xff]
  %v6172 = vld [vmem:[%s5 + $0x60] sm:$0xff]
  %v6173 = vld [vmem:[%s5 + $0x68] sm:$0xff]
  %v6174 = vld [vmem:[%s5 + $0x70] sm:$0xff]
  %v6175 = vld [vmem:[%s5 + $0x78] sm:$0xff]
  %6177 = vset.pattern.permute.xlu0 0
  %6178 = vperm.xlu0 %6177, %v6160
  %v6179 = vpop.permute.xlu0 %6178
  %6182 = vset.pattern.permute.xlu0 0
  %6183 = vperm.xlu0 %6182, %v6161
  %v6184 = vpop.permute.xlu0 %6183
  %6187 = vset.pattern.permute.xlu0 0
  %6188 = vperm.xlu0 %6187, %v6162
  %v6189 = vpop.permute.xlu0 %6188
  %6192 = vset.pattern.permute.xlu0 0
  %6193 = vperm.xlu0 %6192, %v6163
  %v6194 = vpop.permute.xlu0 %6193
  %6197 = vset.pattern.permute.xlu0 0
  %6198 = vperm.xlu0 %6197, %v6164
  %v6199 = vpop.permute.xlu0 %6198
  %6202 = vset.pattern.permute.xlu0 0
  %6203 = vperm.xlu0 %6202, %v6165
  %v6204 = vpop.permute.xlu0 %6203
  %6207 = vset.pattern.permute.xlu0 0
  %6208 = vperm.xlu0 %6207, %v6166
  %v6209 = vpop.permute.xlu0 %6208
  %6212 = vset.pattern.permute.xlu0 0
  %6213 = vperm.xlu0 %6212, %v6167
  %v6214 = vpop.permute.xlu0 %6213
  %6217 = vset.pattern.permute.xlu0 0
  %6218 = vperm.xlu0 %6217, %v6168
  %v6219 = vpop.permute.xlu0 %6218
  %6222 = vset.pattern.permute.xlu0 0
  %6223 = vperm.xlu0 %6222, %v6169
  %v6224 = vpop.permute.xlu0 %6223
  %6227 = vset.pattern.permute.xlu0 0
  %6228 = vperm.xlu0 %6227, %v6170
  %v6229 = vpop.permute.xlu0 %6228
  %6232 = vset.pattern.permute.xlu0 0
  %6233 = vperm.xlu0 %6232, %v6171
  %v6234 = vpop.permute.xlu0 %6233
  %6237 = vset.pattern.permute.xlu0 0
  %6238 = vperm.xlu0 %6237, %v6172
  %v6239 = vpop.permute.xlu0 %6238
  %6242 = vset.pattern.permute.xlu0 0
  %6243 = vperm.xlu0 %6242, %v6173
  %v6244 = vpop.permute.xlu0 %6243
  %6247 = vset.pattern.permute.xlu0 0
  %6248 = vperm.xlu0 %6247, %v6174
  %v6249 = vpop.permute.xlu0 %6248
  %6252 = vset.pattern.permute.xlu0 0
  %6253 = vperm.xlu0 %6252, %v6175
  %v6254 = vpop.permute.xlu0 %6253
  %v6256 = vmul.f32 %v6112, %v6179
  %v6257 = vmul.f32 %v6113, %v6179
  %v6258 = vmul.f32 %v6114, %v6179
  %v6259 = vmul.f32 %v6115, %v6184
  %v6260 = vmul.f32 %v6116, %v6184
  %v6261 = vmul.f32 %v6117, %v6184
  %v6262 = vmul.f32 %v6118, %v6189
  %v6263 = vmul.f32 %v6119, %v6189
  %v6264 = vmul.f32 %v6120, %v6189
  %v6265 = vmul.f32 %v6121, %v6194
  %v6266 = vmul.f32 %v6122, %v6194
  %v6267 = vmul.f32 %v6123, %v6194
  %v6268 = vmul.f32 %v6124, %v6199
  %v6269 = vmul.f32 %v6125, %v6199
  %v6270 = vmul.f32 %v6126, %v6199
  %v6271 = vmul.f32 %v6127, %v6204
  %v6272 = vmul.f32 %v6128, %v6204
  %v6273 = vmul.f32 %v6129, %v6204
  %v6274 = vmul.f32 %v6130, %v6209
  %v6275 = vmul.f32 %v6131, %v6209
  %v6276 = vmul.f32 %v6132, %v6209
  %v6277 = vmul.f32 %v6133, %v6214
  %v6278 = vmul.f32 %v6134, %v6214
  %v6279 = vmul.f32 %v6135, %v6214
  %v6280 = vmul.f32 %v6136, %v6219
  %v6281 = vmul.f32 %v6137, %v6219
  %v6282 = vmul.f32 %v6138, %v6219
  %v6283 = vmul.f32 %v6139, %v6224
  %v6284 = vmul.f32 %v6140, %v6224
  %v6285 = vmul.f32 %v6141, %v6224
  %v6286 = vmul.f32 %v6142, %v6229
  %v6287 = vmul.f32 %v6143, %v6229
  %v6288 = vmul.f32 %v6144, %v6229
  %v6289 = vmul.f32 %v6145, %v6234
  %v6290 = vmul.f32 %v6146, %v6234
  %v6291 = vmul.f32 %v6147, %v6234
  %v6292 = vmul.f32 %v6148, %v6239
  %v6293 = vmul.f32 %v6149, %v6239
  %v6294 = vmul.f32 %v6150, %v6239
  %v6295 = vmul.f32 %v6151, %v6244
  %v6296 = vmul.f32 %v6152, %v6244
  %v6297 = vmul.f32 %v6153, %v6244
  %v6298 = vmul.f32 %v6154, %v6249
  %v6299 = vmul.f32 %v6155, %v6249
  %v6300 = vmul.f32 %v6156, %v6249
  %v6301 = vmul.f32 %v6157, %v6254
  %v6302 = vmul.f32 %v6158, %v6254
  %v6303 = vmul.f32 %v6159, %v6254
  %v6304 = vadd.f32 %v6256, %v6259
  %v6305 = vadd.f32 %v6304, %v6262
  %v6306 = vadd.f32 %v6305, %v6265
  %v6307 = vadd.f32 %v6306, %v6268
  %v6308 = vadd.f32 %v6307, %v6271
  %v6309 = vadd.f32 %v6308, %v6274
  %v6310 = vadd.f32 %v6309, %v6277
  %v6311 = vadd.f32 %v6310, %v6280
  %v6312 = vadd.f32 %v6311, %v6283
  %v6313 = vadd.f32 %v6312, %v6286
  %v6314 = vadd.f32 %v6313, %v6289
  %v6315 = vadd.f32 %v6314, %v6292
  %v6316 = vadd.f32 %v6315, %v6295
  %v6317 = vadd.f32 %v6316, %v6298
  %v6318 = vadd.f32 %v6317, %v6301
  %v6319 = vrot.slane %v6318, 4
  %v6320 = vadd.f32 %v6318, %v6319
  %v6321 = vrot.slane %v6320, 2
  %v6322 = vadd.f32 %v6320, %v6321
  %v6323 = vrot.slane %v6322, 1
  %v6324 = vadd.f32 %v6322, %v6323
  %v6325 = vadd.f32 %v6257, %v6260
  %v6326 = vadd.f32 %v6325, %v6263
  %v6327 = vadd.f32 %v6326, %v6266
  %v6328 = vadd.f32 %v6327, %v6269
  %v6329 = vadd.f32 %v6328, %v6272
  %v6330 = vadd.f32 %v6329, %v6275
  %v6331 = vadd.f32 %v6330, %v6278
  %v6332 = vadd.f32 %v6331, %v6281
  %v6333 = vadd.f32 %v6332, %v6284
  %v6334 = vadd.f32 %v6333, %v6287
  %v6335 = vadd.f32 %v6334, %v6290
  %v6336 = vadd.f32 %v6335, %v6293
  %v6337 = vadd.f32 %v6336, %v6296
  %v6338 = vadd.f32 %v6337, %v6299
  %v6339 = vadd.f32 %v6338, %v6302
  %v6340 = vrot.slane %v6339, 4
  %v6341 = vadd.f32 %v6339, %v6340
  %v6342 = vrot.slane %v6341, 2
  %v6343 = vadd.f32 %v6341, %v6342
  %v6344 = vrot.slane %v6343, 1
  %v6345 = vadd.f32 %v6343, %v6344
  %v6346 = vadd.f32 %v6258, %v6261
  %v6347 = vadd.f32 %v6346, %v6264
  %v6348 = vadd.f32 %v6347, %v6267
  %v6349 = vadd.f32 %v6348, %v6270
  %v6350 = vadd.f32 %v6349, %v6273
  %v6351 = vadd.f32 %v6350, %v6276
  %v6352 = vadd.f32 %v6351, %v6279
  %v6353 = vadd.f32 %v6352, %v6282
  %v6354 = vadd.f32 %v6353, %v6285
  %v6355 = vadd.f32 %v6354, %v6288
  %v6356 = vadd.f32 %v6355, %v6291
  %v6357 = vadd.f32 %v6356, %v6294
  %v6358 = vadd.f32 %v6357, %v6297
  %v6359 = vadd.f32 %v6358, %v6300
  %v6360 = vadd.f32 %v6359, %v6303
  %v6361 = vrot.slane %v6360, 4
  %v6362 = vadd.f32 %v6360, %v6361
  %v6363 = vrot.slane %v6362, 2
  %v6364 = vadd.f32 %v6362, %v6363
  %v6365 = vrot.slane %v6364, 1
  %v6366 = vadd.f32 %v6364, %v6365
  %v6367 = vld [vmem:[#allocation2] sm:$0x1]
  %6369 = vset.pattern.permute.xlu0 0
  %6370 = vperm.xlu0 %6369, %v6367
  %v6371 = vpop.permute.xlu0 %6370
  %v6373 = vlaneseq
  %v6374 = vshrl.u32 %v6373, 7
  %v6375 = vsub.s32 0, %v6374
  %v6376 = vrot.slane %v6371, %v6375
  %v6377 = vadd.f32 %v6324, %v6376
  %v6378 = vadd.f32 %v6345, %v6376
  %v6379 = vadd.f32 %v6366, %v6376
  %v6383 = vcombine.low %v6377, %v6378
  %v6385 = vunpack.c.l.s4 1966171168
  %v6386 = vunpack.c.0.s8 %v6385
  %v6387 = vlaneseq
  %v6388 = vshrl.u32 %v6387, 7
  %v6389 = vsub.s32 %v6386, %v6388
  %v6390 = vrot.slane %v6383, %v6389
  %v6392 = vunpack.c.l.s4 1966171168
  %v6393 = vunpack.c.0.s8 %v6392
  %v6394 = vlaneseq
  %v6395 = vshrl.u32 %v6394, 7
  %v6396 = vsub.s32 %v6393, %v6395
  %v6397 = vrot.slane %v6379, %v6396
  %v6398 = vcombine.low %v6390, %v6397
  %v6400 = vunpack.c.l.s4 1966171168
  %v6401 = vunpack.c.0.s8 %v6400
  %v6402 = vlaneseq
  %v6403 = vshrl.u32 %v6402, 7
  %v6404 = vsub.s32 %v6401, %v6403
  %v6405 = vrot.slane %v6398, %v6404
  %v6407 = vlaneseq
  %vm6408 = vcmp.ge.s32.totalorder %v6407, 0
  %vm6409 = vcmp.lt.s32.totalorder %v6407, 384
  %vm6410 = vmand %vm6408, %vm6409
  %6411 = vst.msk [vmem:[%s7] sm:$0x7] %vm6410, %v6405
  // Predicated region
  $region30: #{mlp_forward_pallas.1} parent=0 // pred_check
    _
  $region31: #{mlp_forward_pallas.1} parent=0 // pred_check_branch
    %6413 = sbr.rel (0) target = $region33
  $region32: #{mlp_forward_pallas.1} parent=0 // pred_region
    _
  $region33: #{mlp_forward_pallas.1} parent=0 // pred_fallthru
    _
  // Predicated region
  $region34: #{mlp_forward_pallas.1} parent=0 // pred_check
    _
  $region35: #{mlp_forward_pallas.1} parent=0 // pred_check_branch
    %6415 = sbr.rel (0) target = $region37
  $region36: #{mlp_forward_pallas.1} parent=0 // pred_region
    _
  $region37: #{mlp_forward_pallas.1} parent=0 // pred_fallthru
    _

</llo_original>
